<compile_context>
chip_gen: v7x
topology: tpu7x:2x2x1
jax: 0.10.0
libtpu: 0.0.40
codegen_flags: <defaults>
</compile_context>

<pallas_src>
import functools

import jax
import jax.numpy as jnp
from jax.experimental import pallas as pl
from jax.experimental.pallas import tpu as pltpu

_MIB = 1024 * 1024


def _round_up(x, m):
    return ((x + m - 1) // m) * m


def _sublane_pack(dtype):
    return {4: 8, 2: 16, 1: 32}.get(jnp.dtype(dtype).itemsize, 8)


def _padded_tile_bytes(rows, width, ch, dtype):
    """Bytes of a (rows, width, ch) VMEM tile after (sublane, lane) layout padding."""
    itemsize = jnp.dtype(dtype).itemsize
    return rows * _round_up(width, _sublane_pack(dtype)) * _round_up(ch, 128) * itemsize


def _step_vmem_bytes(TH, HB, Wt, W_al, Cin, Cout, in_dtype, out_dtype):
    """Per-grid-step VMEM footprint (double-buffered I/O + in-kernel temporaries),
    computed on layout-padded shapes."""
    in_main = _padded_tile_bytes(TH, Wt, Cin, in_dtype)
    in_halo = _padded_tile_bytes(HB, Wt, Cin, in_dtype)
    out_blk = _padded_tile_bytes(TH, W_al, Cout, out_dtype)
    acc = _padded_tile_bytes(TH, W_al, Cout, jnp.float32)   # SSA accumulators
    work = 2 * in_main + acc                                 # shifted copy + accs
    return 2 * (in_main + in_halo + out_blk) + work


def _vmem_budget():
    """(per-step budget, vmem_limit cap, two-TensorCore hint) per TPU generation."""
    cap = 64 * _MIB
    try:
        cap = int(getattr(pltpu.get_tpu_info(), "vmem_capacity_bytes", cap))
    except Exception:
        pass
    if cap >= 120 * _MIB:
        # v5e / v6e class: 128 MiB VMEM, single TensorCore -> big tiles.
        return 80 * _MIB, 100 * _MIB, False
    # v7x class: 64 MiB VMEM per TC, 2 TCs -> leave headroom, balance the grid.
    return 28 * _MIB, 48 * _MIB, True


def _pick_tile_rows(H, W_al, Wt, Cin, Cout, d, in_dtype, out_dtype, budget):
    """Largest row tile (multiple of 2d, at least 4d) fitting the VMEM budget."""
    HB = 2 * d
    lo = 2 * HB                           # need TH - 2d > 0 for the body/tail split
    hi = max(lo, min(_round_up(H, HB), 512))
    best = lo
    th = lo
    while th <= hi:
        if _step_vmem_bytes(th, HB, Wt, W_al, Cin, Cout, in_dtype, out_dtype) <= budget:
            best = th
        th += HB
    return best


def _rebnconv_kernel(xm_ref, xh_ref, w_ref, sb_ref, o_ref, *, TH, W, d, Cin, use_roll):
    # xm_ref : (1, TH, Wt, Cin)  main rows of this tile's haloed, zero-padded window
    # xh_ref : (1, 2d, Wt, Cin)  bottom 2d halo rows (second view of the same array)
    # w_ref  : (9, Cin, Cout)    conv weights, tap-major (ky*3 + kx), compute dtype
    # sb_ref : (2, Cout) f32     row 0 = folded scale, row 1 = folded bias
    # o_ref  : (1, TH, W, Cout)  output rows
    HB = 2 * d
    TB = TH - HB                      # output rows computable from xm alone
    Wt = xm_ref.shape[2]
    cout = o_ref.shape[-1]

    sb = sb_ref[...]
    scale = sb[0:1, :]
    bias = sb[1:2, :]

    xm = xm_ref[0]                    # (TH, Wt, Cin)
    xh = xh_ref[0]                    # (HB, Wt, Cin)

    acc_b = None                      # (TB*W, Cout) f32 SSA accumulator (no scratch)
    acc_t = None                      # (HB*W, Cout) f32 SSA accumulator

    # TODO(synk): for small Cin (<~64) fuse the 9 taps into one K=9*Cin matmul
    # (im2col slab) so the 256-deep v6e/v7x MXU is not K-underfilled.
    for kx in range(3):
        if kx == 0:
            xm_s = xm[:, :W, :]
            xh_s = xh[:, :W, :]
        elif use_roll:
            # XLU rotate (idle slot) + aligned prefix slice; wrapped-around
            # columns land at index >= W and are discarded by the slice.
            xm_s = pltpu.roll(xm, shift=Wt - kx * d, axis=1)[:, :W, :]
            xh_s = pltpu.roll(xh, shift=Wt - kx * d, axis=1)[:, :W, :]
        else:
            # TODO(synk): 16-bit (packed sublane) width shifts: deliver shifted
            # views by DMA or use pltpu.roll once packed sublane rotates are
            # validated; the plain slice keeps correctness meanwhile.
            xm_s = xm[:, kx * d: kx * d + W, :]
            xh_s = xh[:, kx * d: kx * d + W, :]
        for ky in range(3):
            w_tap = w_ref[ky * 3 + kx]                         # (Cin, Cout) free slice
            # --- body rows [0, TB): window rows [ky*d, ky*d + TB), all in xm ---
            pb = xm_s[ky * d: ky * d + TB].reshape(TB * W, Cin)
            cb = jnp.dot(pb, w_tap, preferred_element_type=jnp.float32)
            acc_b = cb if acc_b is None else acc_b + cb
            # --- tail rows [TB, TH): window rows [TB + ky*d, TH + ky*d) ---
            if ky == 0:
                pt = xm_s[TB:TH]
            elif ky == 1:
                pt = jnp.concatenate([xm_s[TH - d: TH], xh_s[:d]], axis=0)
            else:
                pt = xh_s[:HB]
            ct = jnp.dot(pt.reshape(HB * W, Cin), w_tap,
                         preferred_element_type=jnp.float32)
            acc_t = ct if acc_t is None else acc_t + ct

    # Folded conv-bias + BatchNorm(eval) + ReLU epilogue in f32, straight to o_ref.
    # TODO(synk): for Cout < 128 a lane-dense output layout (or Cout padding)
    # would turn the masked partial stores into dense stores.
    yb = jnp.maximum(acc_b * scale + bias, 0.0)
    yt = jnp.maximum(acc_t * scale + bias, 0.0)
    o_ref[:, :TB, :, :] = yb.reshape(1, TB, W, cout).astype(o_ref.dtype)
    o_ref[:, TB:, :, :] = yt.reshape(1, HB, W, cout).astype(o_ref.dtype)


def rebnconv_pallas(x_nchw, weight_oihw, conv_bias, gamma, beta,
                    running_mean, running_var, *, dirate=1, eps=1e-5,
                    compute_dtype=jnp.bfloat16, out_dtype=None, tile_rows=None):
    """REBNCONV forward: Conv2d(3x3, dilation=dirate, padding=dirate) + BN(eval) + ReLU.

    x: (B, Cin, H, W) NCHW -> (B, Cout, H, W) NCHW.
    compute_dtype: dtype fed to the MXU (bf16 default); accumulation/epilogue in f32.
    out_dtype:     HBM output dtype (defaults to compute_dtype to halve writeback).
    tile_rows:     output rows per grid step (auto-sized to the VMEM budget if None).
    """
    B, Cin, H, W = x_nchw.shape
    Cout = weight_oihw.shape[0]
    d = int(dirate)
    HB = 2 * d
    out_dtype = compute_dtype if out_dtype is None else out_dtype

    # ---- width alignment: makes every in-kernel reshape layout-preserving ----
    sub = max(_sublane_pack(compute_dtype), _sublane_pack(out_dtype))
    W_al = _round_up(W, sub)                 # output columns computed per tile
    Wt = _round_up(W_al + HB, sub)           # padded input width (covers kx*d + W_al)

    # ---- generation-aware VMEM budget & row-tile selection ----
    budget, limit_cap, two_tc = _vmem_budget()
    const_bytes = (2 * 9 * _round_up(Cin, _sublane_pack(compute_dtype))
                   * _round_up(Cout, 128) * jnp.dtype(compute_dtype).itemsize
                   + 2 * 8 * _round_up(Cout, 128) * 4)
    # TODO(synk): single-buffer the constant weight / scale-bias inputs
    # (pipeline_mode=pl.Buffered(1)) to reclaim their second VMEM buffer.
    tile_budget = max(budget - const_bytes, 4 * _MIB)
    if tile_rows is None:
        TH = _pick_tile_rows(H, W_al, Wt, Cin, Cout, d, compute_dtype, out_dtype,
                             tile_budget)
    else:
        TH = _round_up(max(int(tile_rows), 2 * HB), HB)
    TH = max(2 * HB, min(TH, max(2 * HB, _round_up(H, HB))))
    if two_tc and tile_rows is None:
        # v7x: keep the total grid-step count even so both TensorCores stay busy.
        if (B * (-(-H // TH))) % 2 == 1:
            th = TH - HB
            while th >= 2 * HB:
                if (B * (-(-H // th))) % 2 == 0:
                    TH = th
                    break
                th -= HB
    H_pad = _round_up(H, TH)
    nH = H_pad // TH

    # ---- fold conv bias + BatchNorm(eval) into per-channel scale / bias ----
    scale = gamma / jnp.sqrt(running_var + eps)
    bias = beta + (conv_bias - running_mean) * scale
    sb = jnp.stack([scale, bias], axis=0).astype(jnp.float32)            # (2, Cout)

    # weights: OIHW -> (ky, kx, Cin, Cout) -> (9, Cin, Cout); tap index on the
    # leading dim makes per-tap slices free inside the kernel.
    w9 = (jnp.transpose(weight_oihw, (2, 3, 1, 0))
          .reshape(9, Cin, Cout).astype(compute_dtype))

    # ---- activations: NHWC + zero pad (conv halo + tile / alignment padding) ----
    # TODO(synk): when chaining REBNCONVs keep NHWC end-to-end and zero-fill the
    # halo at DMA time so this pad/transpose HBM round trip disappears.
    x_nhwc = jnp.transpose(x_nchw, (0, 2, 3, 1)).astype(compute_dtype)
    x_pad = jnp.pad(x_nhwc, ((0, 0), (d, d + (H_pad - H)), (d, Wt - W - d), (0, 0)))

    est = (_step_vmem_bytes(TH, HB, Wt, W_al, Cin, Cout, compute_dtype, out_dtype)
           + const_bytes)
    vmem_limit = int(min(max(est + est // 4, 32 * _MIB), limit_cap))

    use_roll = jnp.dtype(compute_dtype).itemsize == 4
    kernel = functools.partial(_rebnconv_kernel, TH=TH, W=W_al, d=d, Cin=Cin,
                               use_roll=use_roll)

    out = pl.pallas_call(
        kernel,
        out_shape=jax.ShapeDtypeStruct((B, H_pad, W_al, Cout), out_dtype),
        grid_spec=pltpu.PrefetchScalarGridSpec(
            num_scalar_prefetch=0,
            grid=(B, nH),
            in_specs=[
                # main TH rows of this tile's haloed window
                pl.BlockSpec((1, TH, Wt, Cin), lambda b, i: (b, i, 0, 0)),
                # bottom 2d halo rows (second view of the same padded array)
                pl.BlockSpec((1, HB, Wt, Cin),
                             lambda b, i, _m=TH // HB: (b, (i + 1) * _m, 0, 0)),
                pl.BlockSpec((9, Cin, Cout), lambda b, i: (0, 0, 0)),
                pl.BlockSpec((2, Cout), lambda b, i: (0, 0)),
            ],
            out_specs=pl.BlockSpec((1, TH, W_al, Cout), lambda b, i: (b, i, 0, 0)),
        ),
        compiler_params=pltpu.CompilerParams(
            dimension_semantics=("parallel", "parallel"),
            vmem_limit_bytes=vmem_limit),
    )(x_pad, x_pad, w9, sb)

    out = out[:, :H, :W]                                  # drop row / col padding
    return jnp.transpose(out, (0, 3, 1, 2))               # back to NCHW


def rebnconv_reference(x, w, b, gamma, beta, rm, rv, *, dirate=1, eps=1e-5):
    """Pure-JAX reference (matches PyTorch Conv2d + BN(eval) + ReLU)."""
    y = jax.lax.conv_general_dilated(
        x, w, window_strides=(1, 1),
        padding=((dirate, dirate), (dirate, dirate)),
        rhs_dilation=(dirate, dirate),
        dimension_numbers=("NCHW", "OIHW", "NCHW"))
    y = y + b[None, :, None, None]
    y = (y - rm[None, :, None, None]) / jnp.sqrt(rv[None, :, None, None] + eps)
    y = y * gamma[None, :, None, None] + beta[None, :, None, None]
    return jnp.maximum(y, 0.0)


def _make_case(key, B, Cin, Cout, H, W):
    ks = jax.random.split(key, 7)
    x = jax.random.normal(ks[0], (B, Cin, H, W), jnp.float32)
    weight = jax.random.normal(ks[1], (Cout, Cin, 3, 3), jnp.float32) * 0.1
    conv_bias = jax.random.normal(ks[2], (Cout,), jnp.float32) * 0.1
    gamma = 1.0 + 0.1 * jax.random.normal(ks[3], (Cout,), jnp.float32)
    beta = 0.1 * jax.random.normal(ks[4], (Cout,), jnp.float32)
    rm = 0.1 * jax.random.normal(ks[5], (Cout,), jnp.float32)
    rv = 1.0 + 0.1 * jax.random.uniform(ks[6], (Cout,), jnp.float32)
    return x, weight, conv_bias, gamma, beta, rm, rv


if __name__ == "__main__":
    key = jax.random.PRNGKey(0)
    k_main, k_odd = jax.random.split(key)

    # Case 1: canonical small shapes, exact f32 path, forced multi-row-tile grid.
    case1 = _make_case(k_main, 2, 4, 8, 16, 16)
    for dirate in (1, 2):
        out = rebnconv_pallas(*case1, dirate=dirate,
                              compute_dtype=jnp.float32, tile_rows=8)
        out = jax.block_until_ready(out)
        ref = jax.block_until_ready(rebnconv_reference(*case1, dirate=dirate))
        if out.shape != ref.shape or not jnp.allclose(out, ref, atol=1e-4, rtol=1e-4):
            err = float(jnp.max(jnp.abs(out.astype(jnp.float32) - ref)))
            raise AssertionError(f"f32 mismatch (case1, dirate={dirate}) max_err={err}")

    # Auto tile-sizing path (exercises the VMEM-budget row-tile selection).
    out = rebnconv_pallas(*case1, dirate=1, compute_dtype=jnp.float32)
    out = jax.block_until_ready(out)
    ref = jax.block_until_ready(rebnconv_reference(*case1, dirate=1))
    if not jnp.allclose(out, ref, atol=1e-4, rtol=1e-4):
        err = float(jnp.max(jnp.abs(out.astype(jnp.float32) - ref)))
        raise AssertionError(f"f32 mismatch (auto tile) max_err={err}")

    # Case 2: odd H/W, small Cin/Cout, dirate=2 multi-tile halo path, f32.
    case2 = _make_case(k_odd, 1, 3, 5, 13, 10)
    out = rebnconv_pallas(*case2, dirate=2, compute_dtype=jnp.float32, tile_rows=8)
    out = jax.block_until_ready(out)
    ref = jax.block_until_ready(rebnconv_reference(*case2, dirate=2))
    if out.shape != ref.shape or not jnp.allclose(out, ref, atol=1e-4, rtol=1e-4):
        err = float(jnp.max(jnp.abs(out.astype(jnp.float32) - ref)))
        raise AssertionError(f"f32 mismatch (case2) max_err={err}")

    # Case 3: bf16 fast path (bf16 MXU inputs + bf16 output) vs bf16-rounded reference.
    x, weight, conv_bias, gamma, beta, rm, rv = case1
    x_bf = x.astype(jnp.bfloat16).astype(jnp.float32)
    w_bf = weight.astype(jnp.bfloat16).astype(jnp.float32)
    for dirate in (1, 2):
        out = rebnconv_pallas(x, weight, conv_bias, gamma, beta, rm, rv,
                              dirate=dirate, compute_dtype=jnp.bfloat16,
                              tile_rows=8)
        out = jax.block_until_ready(out).astype(jnp.float32)
        ref = jax.block_until_ready(
            rebnconv_reference(x_bf, w_bf, conv_bias, gamma, beta, rm, rv,
                               dirate=dirate))
        if not jnp.allclose(out, ref, atol=2e-2, rtol=2e-2):
            err = float(jnp.max(jnp.abs(out - ref)))
            raise AssertionError(f"bf16 mismatch (dirate={dirate}) max_err={err}")

    print("KERNEL_OK")
</pallas_src>

<mosaic_0001>
module attributes {stable_mosaic.version = 11 : i64} {
  func.func @_rebnconv_kernel(%arg0: i32, %arg1: i32, %arg2: memref<1x8x24x4xf32, #tpu.memory_space<vmem>>, %arg3: memref<1x2x24x4xf32, #tpu.memory_space<vmem>>, %arg4: memref<9x4x8xf32, #tpu.memory_space<vmem>>, %arg5: memref<2x8xf32, #tpu.memory_space<vmem>>, %arg6: memref<1x8x16x8xf32, #tpu.memory_space<vmem>>) attributes {dimension_semantics = [#tpu.dimension_semantics<parallel>, #tpu.dimension_semantics<parallel>], iteration_bounds = array<i64: 2, 2>, scalar_prefetch = 0 : i64, scratch_operands = 0 : i64, tpu.core_type = #tpu.core_type<tc>, window_params = [{transform_indices = @transform_0, window_bounds = array<i64: 1, 8, 24, 4>}, {transform_indices = @transform_1, window_bounds = array<i64: 1, 2, 24, 4>}, {pipeline_mode = #tpu.pipeline_mode<synchronous>, transform_indices = @transform_2, window_bounds = array<i64: 9, 4, 8>}, {pipeline_mode = #tpu.pipeline_mode<synchronous>, transform_indices = @transform_3, window_bounds = array<i64: 2, 8>}, {transform_indices = @transform_4, window_bounds = array<i64: 1, 8, 16, 8>}]} {
    %c0 = arith.constant 0 : index
    %c0_0 = arith.constant 0 : index
    %0 = vector.load %arg5[%c0, %c0_0] : memref<2x8xf32, #tpu.memory_space<vmem>>, vector<2x8xf32>
    %1 = vector.extract_strided_slice %0 {offsets = [0, 0], sizes = [1, 8], strides = [1, 1]} : vector<2x8xf32> to vector<1x8xf32>
    %2 = vector.extract_strided_slice %0 {offsets = [1, 0], sizes = [1, 8], strides = [1, 1]} : vector<2x8xf32> to vector<1x8xf32>
    %c0_1 = arith.constant 0 : index
    %c0_2 = arith.constant 0 : index
    %c0_3 = arith.constant 0 : index
    %c0_4 = arith.constant 0 : index
    %3 = vector.load %arg2[%c0_1, %c0_2, %c0_3, %c0_4] : memref<1x8x24x4xf32, #tpu.memory_space<vmem>>, vector<1x8x24x4xf32>
    %4 = vector.shape_cast %3 : vector<1x8x24x4xf32> to vector<8x24x4xf32>
    %c0_5 = arith.constant 0 : index
    %c0_6 = arith.constant 0 : index
    %c0_7 = arith.constant 0 : index
    %c0_8 = arith.constant 0 : index
    %5 = vector.load %arg3[%c0_5, %c0_6, %c0_7, %c0_8] : memref<1x2x24x4xf32, #tpu.memory_space<vmem>>, vector<1x2x24x4xf32>
    %6 = vector.shape_cast %5 : vector<1x2x24x4xf32> to vector<2x24x4xf32>
    %7 = vector.extract_strided_slice %4 {offsets = [0, 0, 0], sizes = [8, 16, 4], strides = [1, 1, 1]} : vector<8x24x4xf32> to vector<8x16x4xf32>
    %8 = vector.extract_strided_slice %6 {offsets = [0, 0, 0], sizes = [2, 16, 4], strides = [1, 1, 1]} : vector<2x24x4xf32> to vector<2x16x4xf32>
    %c0_9 = arith.constant 0 : index
    %c0_10 = arith.constant 0 : index
    %c0_11 = arith.constant 0 : index
    %9 = vector.load %arg4[%c0_9, %c0_10, %c0_11] : memref<9x4x8xf32, #tpu.memory_space<vmem>>, vector<1x4x8xf32>
    %10 = vector.shape_cast %9 : vector<1x4x8xf32> to vector<4x8xf32>
    %11 = vector.extract_strided_slice %7 {offsets = [0, 0, 0], sizes = [6, 16, 4], strides = [1, 1, 1]} : vector<8x16x4xf32> to vector<6x16x4xf32>
    %12 = vector.shape_cast %11 : vector<6x16x4xf32> to vector<96x4xf32>
    %cst = arith.constant dense<0.000000e+00> : vector<96x8xf32>
    %13 = tpu.matmul %12, %10, %cst {dimension_numbers = #tpu.dot_dimension_numbers<[1], [0], [0], [1], [0, 0, 1, 1], [], []>} : vector<96x4xf32>, vector<4x8xf32>, vector<96x8xf32> -> vector<96x8xf32>
    %14 = vector.extract_strided_slice %7 {offsets = [6, 0, 0], sizes = [2, 16, 4], strides = [1, 1, 1]} : vector<8x16x4xf32> to vector<2x16x4xf32>
    %15 = vector.shape_cast %14 : vector<2x16x4xf32> to vector<32x4xf32>
    %cst_12 = arith.constant dense<0.000000e+00> : vector<32x8xf32>
    %16 = tpu.matmul %15, %10, %cst_12 {dimension_numbers = #tpu.dot_dimension_numbers<[1], [0], [0], [1], [0, 0, 1, 1], [], []>} : vector<32x4xf32>, vector<4x8xf32>, vector<32x8xf32> -> vector<32x8xf32>
    %c3 = arith.constant 3 : index
    %c0_13 = arith.constant 0 : index
    %c0_14 = arith.constant 0 : index
    %17 = vector.load %arg4[%c3, %c0_13, %c0_14] : memref<9x4x8xf32, #tpu.memory_space<vmem>>, vector<1x4x8xf32>
    %18 = vector.shape_cast %17 : vector<1x4x8xf32> to vector<4x8xf32>
    %19 = vector.extract_strided_slice %7 {offsets = [1, 0, 0], sizes = [6, 16, 4], strides = [1, 1, 1]} : vector<8x16x4xf32> to vector<6x16x4xf32>
    %20 = vector.shape_cast %19 : vector<6x16x4xf32> to vector<96x4xf32>
    %cst_15 = arith.constant dense<0.000000e+00> : vector<96x8xf32>
    %21 = tpu.matmul %20, %18, %cst_15 {dimension_numbers = #tpu.dot_dimension_numbers<[1], [0], [0], [1], [0, 0, 1, 1], [], []>} : vector<96x4xf32>, vector<4x8xf32>, vector<96x8xf32> -> vector<96x8xf32>
    %22 = arith.addf %13, %21 : vector<96x8xf32>
    %23 = vector.extract_strided_slice %7 {offsets = [7, 0, 0], sizes = [1, 16, 4], strides = [1, 1, 1]} : vector<8x16x4xf32> to vector<1x16x4xf32>
    %24 = vector.extract_strided_slice %8 {offsets = [0, 0, 0], sizes = [1, 16, 4], strides = [1, 1, 1]} : vector<2x16x4xf32> to vector<1x16x4xf32>
    %25 = tpu.concatenate %23, %24 in 0 : vector<1x16x4xf32>, vector<1x16x4xf32> -> vector<2x16x4xf32>
    %26 = vector.shape_cast %25 : vector<2x16x4xf32> to vector<32x4xf32>
    %cst_16 = arith.constant dense<0.000000e+00> : vector<32x8xf32>
    %27 = tpu.matmul %26, %18, %cst_16 {dimension_numbers = #tpu.dot_dimension_numbers<[1], [0], [0], [1], [0, 0, 1, 1], [], []>} : vector<32x4xf32>, vector<4x8xf32>, vector<32x8xf32> -> vector<32x8xf32>
    %28 = arith.addf %16, %27 : vector<32x8xf32>
    %c6 = arith.constant 6 : index
    %c0_17 = arith.constant 0 : index
    %c0_18 = arith.constant 0 : index
    %29 = vector.load %arg4[%c6, %c0_17, %c0_18] : memref<9x4x8xf32, #tpu.memory_space<vmem>>, vector<1x4x8xf32>
    %30 = vector.shape_cast %29 : vector<1x4x8xf32> to vector<4x8xf32>
    %31 = vector.extract_strided_slice %7 {offsets = [2, 0, 0], sizes = [6, 16, 4], strides = [1, 1, 1]} : vector<8x16x4xf32> to vector<6x16x4xf32>
    %32 = vector.shape_cast %31 : vector<6x16x4xf32> to vector<96x4xf32>
    %cst_19 = arith.constant dense<0.000000e+00> : vector<96x8xf32>
    %33 = tpu.matmul %32, %30, %cst_19 {dimension_numbers = #tpu.dot_dimension_numbers<[1], [0], [0], [1], [0, 0, 1, 1], [], []>} : vector<96x4xf32>, vector<4x8xf32>, vector<96x8xf32> -> vector<96x8xf32>
    %34 = arith.addf %22, %33 : vector<96x8xf32>
    %35 = vector.shape_cast %8 : vector<2x16x4xf32> to vector<32x4xf32>
    %cst_20 = arith.constant dense<0.000000e+00> : vector<32x8xf32>
    %36 = tpu.matmul %35, %30, %cst_20 {dimension_numbers = #tpu.dot_dimension_numbers<[1], [0], [0], [1], [0, 0, 1, 1], [], []>} : vector<32x4xf32>, vector<4x8xf32>, vector<32x8xf32> -> vector<32x8xf32>
    %37 = arith.addf %28, %36 : vector<32x8xf32>
    %c23_i32 = arith.constant 23 : i32
    %38 = tpu.dynamic_rotate %4 by %c23_i32 dim 1 : vector<8x24x4xf32>, i32 -> vector<8x24x4xf32>
    %39 = vector.extract_strided_slice %38 {offsets = [0, 0, 0], sizes = [8, 16, 4], strides = [1, 1, 1]} : vector<8x24x4xf32> to vector<8x16x4xf32>
    %c23_i32_21 = arith.constant 23 : i32
    %40 = tpu.dynamic_rotate %6 by %c23_i32_21 dim 1 : vector<2x24x4xf32>, i32 -> vector<2x24x4xf32>
    %41 = vector.extract_strided_slice %40 {offsets = [0, 0, 0], sizes = [2, 16, 4], strides = [1, 1, 1]} : vector<2x24x4xf32> to vector<2x16x4xf32>
    %c1 = arith.constant 1 : index
    %c0_22 = arith.constant 0 : index
    %c0_23 = arith.constant 0 : index
    %42 = vector.load %arg4[%c1, %c0_22, %c0_23] : memref<9x4x8xf32, #tpu.memory_space<vmem>>, vector<1x4x8xf32>
    %43 = vector.shape_cast %42 : vector<1x4x8xf32> to vector<4x8xf32>
    %44 = vector.extract_strided_slice %39 {offsets = [0, 0, 0], sizes = [6, 16, 4], strides = [1, 1, 1]} : vector<8x16x4xf32> to vector<6x16x4xf32>
    %45 = vector.shape_cast %44 : vector<6x16x4xf32> to vector<96x4xf32>
    %cst_24 = arith.constant dense<0.000000e+00> : vector<96x8xf32>
    %46 = tpu.matmul %45, %43, %cst_24 {dimension_numbers = #tpu.dot_dimension_numbers<[1], [0], [0], [1], [0, 0, 1, 1], [], []>} : vector<96x4xf32>, vector<4x8xf32>, vector<96x8xf32> -> vector<96x8xf32>
    %47 = arith.addf %34, %46 : vector<96x8xf32>
    %48 = vector.extract_strided_slice %39 {offsets = [6, 0, 0], sizes = [2, 16, 4], strides = [1, 1, 1]} : vector<8x16x4xf32> to vector<2x16x4xf32>
    %49 = vector.shape_cast %48 : vector<2x16x4xf32> to vector<32x4xf32>
    %cst_25 = arith.constant dense<0.000000e+00> : vector<32x8xf32>
    %50 = tpu.matmul %49, %43, %cst_25 {dimension_numbers = #tpu.dot_dimension_numbers<[1], [0], [0], [1], [0, 0, 1, 1], [], []>} : vector<32x4xf32>, vector<4x8xf32>, vector<32x8xf32> -> vector<32x8xf32>
    %51 = arith.addf %37, %50 : vector<32x8xf32>
    %c4 = arith.constant 4 : index
    %c0_26 = arith.constant 0 : index
    %c0_27 = arith.constant 0 : index
    %52 = vector.load %arg4[%c4, %c0_26, %c0_27] : memref<9x4x8xf32, #tpu.memory_space<vmem>>, vector<1x4x8xf32>
    %53 = vector.shape_cast %52 : vector<1x4x8xf32> to vector<4x8xf32>
    %54 = vector.extract_strided_slice %39 {offsets = [1, 0, 0], sizes = [6, 16, 4], strides = [1, 1, 1]} : vector<8x16x4xf32> to vector<6x16x4xf32>
    %55 = vector.shape_cast %54 : vector<6x16x4xf32> to vector<96x4xf32>
    %cst_28 = arith.constant dense<0.000000e+00> : vector<96x8xf32>
    %56 = tpu.matmul %55, %53, %cst_28 {dimension_numbers = #tpu.dot_dimension_numbers<[1], [0], [0], [1], [0, 0, 1, 1], [], []>} : vector<96x4xf32>, vector<4x8xf32>, vector<96x8xf32> -> vector<96x8xf32>
    %57 = arith.addf %47, %56 : vector<96x8xf32>
    %58 = vector.extract_strided_slice %39 {offsets = [7, 0, 0], sizes = [1, 16, 4], strides = [1, 1, 1]} : vector<8x16x4xf32> to vector<1x16x4xf32>
    %59 = vector.extract_strided_slice %41 {offsets = [0, 0, 0], sizes = [1, 16, 4], strides = [1, 1, 1]} : vector<2x16x4xf32> to vector<1x16x4xf32>
    %60 = tpu.concatenate %58, %59 in 0 : vector<1x16x4xf32>, vector<1x16x4xf32> -> vector<2x16x4xf32>
    %61 = vector.shape_cast %60 : vector<2x16x4xf32> to vector<32x4xf32>
    %cst_29 = arith.constant dense<0.000000e+00> : vector<32x8xf32>
    %62 = tpu.matmul %61, %53, %cst_29 {dimension_numbers = #tpu.dot_dimension_numbers<[1], [0], [0], [1], [0, 0, 1, 1], [], []>} : vector<32x4xf32>, vector<4x8xf32>, vector<32x8xf32> -> vector<32x8xf32>
    %63 = arith.addf %51, %62 : vector<32x8xf32>
    %c7 = arith.constant 7 : index
    %c0_30 = arith.constant 0 : index
    %c0_31 = arith.constant 0 : index
    %64 = vector.load %arg4[%c7, %c0_30, %c0_31] : memref<9x4x8xf32, #tpu.memory_space<vmem>>, vector<1x4x8xf32>
    %65 = vector.shape_cast %64 : vector<1x4x8xf32> to vector<4x8xf32>
    %66 = vector.extract_strided_slice %39 {offsets = [2, 0, 0], sizes = [6, 16, 4], strides = [1, 1, 1]} : vector<8x16x4xf32> to vector<6x16x4xf32>
    %67 = vector.shape_cast %66 : vector<6x16x4xf32> to vector<96x4xf32>
    %cst_32 = arith.constant dense<0.000000e+00> : vector<96x8xf32>
    %68 = tpu.matmul %67, %65, %cst_32 {dimension_numbers = #tpu.dot_dimension_numbers<[1], [0], [0], [1], [0, 0, 1, 1], [], []>} : vector<96x4xf32>, vector<4x8xf32>, vector<96x8xf32> -> vector<96x8xf32>
    %69 = arith.addf %57, %68 : vector<96x8xf32>
    %70 = vector.shape_cast %41 : vector<2x16x4xf32> to vector<32x4xf32>
    %cst_33 = arith.constant dense<0.000000e+00> : vector<32x8xf32>
    %71 = tpu.matmul %70, %65, %cst_33 {dimension_numbers = #tpu.dot_dimension_numbers<[1], [0], [0], [1], [0, 0, 1, 1], [], []>} : vector<32x4xf32>, vector<4x8xf32>, vector<32x8xf32> -> vector<32x8xf32>
    %72 = arith.addf %63, %71 : vector<32x8xf32>
    %c22_i32 = arith.constant 22 : i32
    %73 = tpu.dynamic_rotate %4 by %c22_i32 dim 1 : vector<8x24x4xf32>, i32 -> vector<8x24x4xf32>
    %74 = vector.extract_strided_slice %73 {offsets = [0, 0, 0], sizes = [8, 16, 4], strides = [1, 1, 1]} : vector<8x24x4xf32> to vector<8x16x4xf32>
    %c22_i32_34 = arith.constant 22 : i32
    %75 = tpu.dynamic_rotate %6 by %c22_i32_34 dim 1 : vector<2x24x4xf32>, i32 -> vector<2x24x4xf32>
    %76 = vector.extract_strided_slice %75 {offsets = [0, 0, 0], sizes = [2, 16, 4], strides = [1, 1, 1]} : vector<2x24x4xf32> to vector<2x16x4xf32>
    %c2 = arith.constant 2 : index
    %c0_35 = arith.constant 0 : index
    %c0_36 = arith.constant 0 : index
    %77 = vector.load %arg4[%c2, %c0_35, %c0_36] : memref<9x4x8xf32, #tpu.memory_space<vmem>>, vector<1x4x8xf32>
    %78 = vector.shape_cast %77 : vector<1x4x8xf32> to vector<4x8xf32>
    %79 = vector.extract_strided_slice %74 {offsets = [0, 0, 0], sizes = [6, 16, 4], strides = [1, 1, 1]} : vector<8x16x4xf32> to vector<6x16x4xf32>
    %80 = vector.shape_cast %79 : vector<6x16x4xf32> to vector<96x4xf32>
    %cst_37 = arith.constant dense<0.000000e+00> : vector<96x8xf32>
    %81 = tpu.matmul %80, %78, %cst_37 {dimension_numbers = #tpu.dot_dimension_numbers<[1], [0], [0], [1], [0, 0, 1, 1], [], []>} : vector<96x4xf32>, vector<4x8xf32>, vector<96x8xf32> -> vector<96x8xf32>
    %82 = arith.addf %69, %81 : vector<96x8xf32>
    %83 = vector.extract_strided_slice %74 {offsets = [6, 0, 0], sizes = [2, 16, 4], strides = [1, 1, 1]} : vector<8x16x4xf32> to vector<2x16x4xf32>
    %84 = vector.shape_cast %83 : vector<2x16x4xf32> to vector<32x4xf32>
    %cst_38 = arith.constant dense<0.000000e+00> : vector<32x8xf32>
    %85 = tpu.matmul %84, %78, %cst_38 {dimension_numbers = #tpu.dot_dimension_numbers<[1], [0], [0], [1], [0, 0, 1, 1], [], []>} : vector<32x4xf32>, vector<4x8xf32>, vector<32x8xf32> -> vector<32x8xf32>
    %86 = arith.addf %72, %85 : vector<32x8xf32>
    %c5 = arith.constant 5 : index
    %c0_39 = arith.constant 0 : index
    %c0_40 = arith.constant 0 : index
    %87 = vector.load %arg4[%c5, %c0_39, %c0_40] : memref<9x4x8xf32, #tpu.memory_space<vmem>>, vector<1x4x8xf32>
    %88 = vector.shape_cast %87 : vector<1x4x8xf32> to vector<4x8xf32>
    %89 = vector.extract_strided_slice %74 {offsets = [1, 0, 0], sizes = [6, 16, 4], strides = [1, 1, 1]} : vector<8x16x4xf32> to vector<6x16x4xf32>
    %90 = vector.shape_cast %89 : vector<6x16x4xf32> to vector<96x4xf32>
    %cst_41 = arith.constant dense<0.000000e+00> : vector<96x8xf32>
    %91 = tpu.matmul %90, %88, %cst_41 {dimension_numbers = #tpu.dot_dimension_numbers<[1], [0], [0], [1], [0, 0, 1, 1], [], []>} : vector<96x4xf32>, vector<4x8xf32>, vector<96x8xf32> -> vector<96x8xf32>
    %92 = arith.addf %82, %91 : vector<96x8xf32>
    %93 = vector.extract_strided_slice %74 {offsets = [7, 0, 0], sizes = [1, 16, 4], strides = [1, 1, 1]} : vector<8x16x4xf32> to vector<1x16x4xf32>
    %94 = vector.extract_strided_slice %76 {offsets = [0, 0, 0], sizes = [1, 16, 4], strides = [1, 1, 1]} : vector<2x16x4xf32> to vector<1x16x4xf32>
    %95 = tpu.concatenate %93, %94 in 0 : vector<1x16x4xf32>, vector<1x16x4xf32> -> vector<2x16x4xf32>
    %96 = vector.shape_cast %95 : vector<2x16x4xf32> to vector<32x4xf32>
    %cst_42 = arith.constant dense<0.000000e+00> : vector<32x8xf32>
    %97 = tpu.matmul %96, %88, %cst_42 {dimension_numbers = #tpu.dot_dimension_numbers<[1], [0], [0], [1], [0, 0, 1, 1], [], []>} : vector<32x4xf32>, vector<4x8xf32>, vector<32x8xf32> -> vector<32x8xf32>
    %98 = arith.addf %86, %97 : vector<32x8xf32>
    %c8 = arith.constant 8 : index
    %c0_43 = arith.constant 0 : index
    %c0_44 = arith.constant 0 : index
    %99 = vector.load %arg4[%c8, %c0_43, %c0_44] : memref<9x4x8xf32, #tpu.memory_space<vmem>>, vector<1x4x8xf32>
    %100 = vector.shape_cast %99 : vector<1x4x8xf32> to vector<4x8xf32>
    %101 = vector.extract_strided_slice %74 {offsets = [2, 0, 0], sizes = [6, 16, 4], strides = [1, 1, 1]} : vector<8x16x4xf32> to vector<6x16x4xf32>
    %102 = vector.shape_cast %101 : vector<6x16x4xf32> to vector<96x4xf32>
    %cst_45 = arith.constant dense<0.000000e+00> : vector<96x8xf32>
    %103 = tpu.matmul %102, %100, %cst_45 {dimension_numbers = #tpu.dot_dimension_numbers<[1], [0], [0], [1], [0, 0, 1, 1], [], []>} : vector<96x4xf32>, vector<4x8xf32>, vector<96x8xf32> -> vector<96x8xf32>
    %104 = arith.addf %92, %103 : vector<96x8xf32>
    %105 = vector.shape_cast %76 : vector<2x16x4xf32> to vector<32x4xf32>
    %cst_46 = arith.constant dense<0.000000e+00> : vector<32x8xf32>
    %106 = tpu.matmul %105, %100, %cst_46 {dimension_numbers = #tpu.dot_dimension_numbers<[1], [0], [0], [1], [0, 0, 1, 1], [], []>} : vector<32x4xf32>, vector<4x8xf32>, vector<32x8xf32> -> vector<32x8xf32>
    %107 = arith.addf %98, %106 : vector<32x8xf32>
    %108 = vector.broadcast %1 : vector<1x8xf32> to vector<96x8xf32>
    %109 = arith.mulf %104, %108 : vector<96x8xf32>
    %110 = vector.broadcast %2 : vector<1x8xf32> to vector<96x8xf32>
    %111 = arith.addf %109, %110 : vector<96x8xf32>
    %cst_47 = arith.constant 0.000000e+00 : f32
    %112 = vector.broadcast %cst_47 : f32 to vector<96x8xf32>
    %113 = arith.maximumf %111, %112 : vector<96x8xf32>
    %114 = vector.broadcast %1 : vector<1x8xf32> to vector<32x8xf32>
    %115 = arith.mulf %107, %114 : vector<32x8xf32>
    %116 = vector.broadcast %2 : vector<1x8xf32> to vector<32x8xf32>
    %117 = arith.addf %115, %116 : vector<32x8xf32>
    %cst_48 = arith.constant 0.000000e+00 : f32
    %118 = vector.broadcast %cst_48 : f32 to vector<32x8xf32>
    %119 = arith.maximumf %117, %118 : vector<32x8xf32>
    %120 = vector.shape_cast %113 : vector<96x8xf32> to vector<1x6x16x8xf32>
    %c0_49 = arith.constant 0 : index
    %c0_50 = arith.constant 0 : index
    %c0_51 = arith.constant 0 : index
    %c0_52 = arith.constant 0 : index
    %121 = vector.load %arg6[%c0_49, %c0_50, %c0_51, %c0_52] : memref<1x8x16x8xf32, #tpu.memory_space<vmem>>, vector<1x6x16x8xf32>
    tpu.vector_store %arg6[%c0_49, %c0_50, %c0_51, %c0_52], %120 {strides = array<i32>} : memref<1x8x16x8xf32, #tpu.memory_space<vmem>>, vector<1x6x16x8xf32>,
    %122 = vector.shape_cast %119 : vector<32x8xf32> to vector<1x2x16x8xf32>
    %c0_53 = arith.constant 0 : index
    %c6_54 = arith.constant 6 : index
    %c0_55 = arith.constant 0 : index
    %c0_56 = arith.constant 0 : index
    %123 = vector.load %arg6[%c0_53, %c6_54, %c0_55, %c0_56] : memref<1x8x16x8xf32, #tpu.memory_space<vmem>>, vector<1x2x16x8xf32>
    tpu.vector_store %arg6[%c0_53, %c6_54, %c0_55, %c0_56], %122 {strides = array<i32>} : memref<1x8x16x8xf32, #tpu.memory_space<vmem>>, vector<1x2x16x8xf32>,
    return
  }
  func.func @transform_0(%arg0: i32, %arg1: i32) -> (i32, i32, i32, i32) {
    %c0_i32 = arith.constant 0 : i32
    %c0_i32_0 = arith.constant 0 : i32
    %c0_i32_1 = arith.constant 0 : i32
    return %arg0, %arg1, %c0_i32, %c0_i32_0 : i32, i32, i32, i32
  }
  func.func @transform_1(%arg0: i32, %arg1: i32) -> (i32, i32, i32, i32) {
    %c1_i32 = arith.constant 1 : i32
    %0 = arith.addi %arg1, %c1_i32 : i32
    %c4_i32 = arith.constant 4 : i32
    %1 = arith.muli %0, %c4_i32 : i32
    %c0_i32 = arith.constant 0 : i32
    %c0_i32_0 = arith.constant 0 : i32
    %c0_i32_1 = arith.constant 0 : i32
    return %arg0, %1, %c0_i32, %c0_i32_0 : i32, i32, i32, i32
  }
  func.func @transform_2(%arg0: i32, %arg1: i32) -> (i32, i32, i32) {
    %c0_i32 = arith.constant 0 : i32
    %c0_i32_0 = arith.constant 0 : i32
    %c0_i32_1 = arith.constant 0 : i32
    %c0_i32_2 = arith.constant 0 : i32
    return %c0_i32, %c0_i32_0, %c0_i32_1 : i32, i32, i32
  }
  func.func @transform_3(%arg0: i32, %arg1: i32) -> (i32, i32) {
    %c0_i32 = arith.constant 0 : i32
    %c0_i32_0 = arith.constant 0 : i32
    %c0_i32_1 = arith.constant 0 : i32
    return %c0_i32, %c0_i32_0 : i32, i32
  }
  func.func @transform_4(%arg0: i32, %arg1: i32) -> (i32, i32, i32, i32) {
    %c0_i32 = arith.constant 0 : i32
    %c0_i32_0 = arith.constant 0 : i32
    %c0_i32_1 = arith.constant 0 : i32
    return %arg0, %arg1, %c0_i32, %c0_i32_0 : i32, i32, i32, i32
  }
}

</mosaic_0001>

<llo_original>
// kernel: tpu_custom_call.1
$region0: #{tpu_custom_call.1}
  #allocation0 [shape = 'u32[]', space=smem, size = 0x4, offset = 0x4, fixed_abs, tag = 'smem constant byte address 0x4 - core index']
  #allocation1 [shape = 'u32[144,128]{1,0:T(1,128)}', space=vmem, size = 0x12000, scoped, tag = 'internal scratch']
  %s0 = inlined_call_operand.vmem [shape: f32[2,18,24,4], index: 0, kind: input, shape index: {}]
  %s1 = inlined_call_operand.vmem [shape: f32[2,18,24,4], index: 1, kind: input, shape index: {}]
  %s2 = inlined_call_operand.vmem [shape: f32[9,4,8], index: 2, kind: input, shape index: {}]
  %s3 = inlined_call_operand.vmem [shape: f32[2,8], index: 3, kind: input, shape index: {}]
  %s4 = inlined_call_operand.vmem [shape: f32[2,16,16,8], index: 4, kind: output, shape index: {}]
  %s5 = sld [smem:[#allocation0]]
  $region49: #{tpu_custom_call.1} parent=0
    _
  %s7 = ssub.s32 1, %s5
  %s8 = scalar_select 0, %s7, %s5
  loop: start=0, step=1, limit=6
  $region2: #{tpu_custom_call.1} parent=0 // loop_pre_header
    _
  $region3: #{tpu_custom_call.1} parent=0 // loop_header
    %s10 = sphi 0, %s14
    %p11 = scmp.ge.s32.totalorder %s10, 6
    %s17 = sphi 0, %s29
    %s18 = sphi 0, %s25
    %s19 = sphi 0, %s17
    %s20 = sphi 0, %s18
    %s21 = sphi 0, %s19
    %s22 = sphi 0, %s20
    %s34 = sphi 0, %s36
    %s37 = sphi 0, %s34
    %s38 = sphi 0, %s37
    %s54 = sphi 0, %s38
    %s66 = sphi 0, %s68
    %s69 = sphi 0, %s66
    %s70 = sphi 0, %s69
    %s86 = sphi 0, %s70
    %s90 = sphi 0, %s90
    %s92 = sphi 0, %s90
    %s93 = sphi 0, %s92
    %s107 = sphi 0, %s93
    %s111 = sphi 0, %s111
    %s113 = sphi 0, %s111
    %s114 = sphi 0, %s113
    %s128 = sphi 0, %s114
    %s136 = sphi 0, %s138
    %s139 = sphi 0, %s136
    %s140 = sphi 0, %s139
    %s156 = sphi 0, %s140
  $region4: #{tpu_custom_call.1} parent=0 // loop_header_branch
    %13 = sbr.rel (%p11) target = $region8
  $region5: #{tpu_custom_call.1} parent=0 // loop_body
    %s15 = ssub.s32 %s10, 1
    %s16 = ssub.s32 %s10, 2
    %s23 = sadd.s32 1, %s18
    %p24 = scmp.ge.s32.totalorder %s23, 2
    %s25 = scalar_select %p24, 0, %s23
    %s26 = sadd.s32 1, %s17
    %s27 = scalar_select %p24, %s26, %s17
    %p28 = scmp.ge.s32.totalorder %s27, 2
    %s29 = scalar_select %p28, 0, %s27
    %s30 = ssub.s32 %s17, %s29
    %s31 = ssub.s32 %s18, %s25
    %s32 = sor.u32 %s30, %s31
    %p33 = scmp.eq.s32.totalorder %s32, 0
    %s35 = sadd.s32 %s34, 1
    %s36 = scalar_select %p33, %s34, %s35
    %p39 = pneg %p33
    %p40 = scmp.eq.s32.totalorder %s10, 3
    %p41 = por %p39, %p40
    %p42 = scmp.ne.s32.totalorder %s34, %s37
    %p43 = scmp.eq.s32.totalorder %s10, 0
    %p44 = por %p42, %p43
    %p45 = scmp.ne.s32.totalorder %s34, %s37
    %p46 = scmp.eq.s32.totalorder %s15, 3
    %p47 = por %p45, %p46
    %p48 = scmp.ne.s32.totalorder %s37, %s38
    %p49 = scmp.eq.s32.totalorder %s15, 0
    %p50 = por %p48, %p49
    %p51 = scmp.ne.s32.totalorder %s37, %s38
    %p52 = scmp.eq.s32.totalorder %s16, 3
    %p53 = por %p51, %p52
    %p55 = scmp.ne.s32.totalorder %s38, %s54
    %p56 = scmp.eq.s32.totalorder %s16, 0
    %p57 = por %p55, %p56
    %s58 = sadd.s32 %s18, 1
    %s59 = smul.u32 %s58, 4
    %s60 = sadd.s32 %s25, 1
    %s61 = smul.u32 %s60, 4
    %s62 = ssub.s32 %s17, %s29
    %s63 = ssub.s32 %s59, %s61
    %s64 = sor.u32 %s62, %s63
    %p65 = scmp.eq.s32.totalorder %s64, 0
    %s67 = sadd.s32 %s66, 1
    %s68 = scalar_select %p65, %s66, %s67
    %p71 = pneg %p65
    %p72 = scmp.eq.s32.totalorder %s10, 3
    %p73 = por %p71, %p72
    %p74 = scmp.ne.s32.totalorder %s66, %s69
    %p75 = scmp.eq.s32.totalorder %s10, 0
    %p76 = por %p74, %p75
    %p77 = scmp.ne.s32.totalorder %s66, %s69
    %p78 = scmp.eq.s32.totalorder %s15, 3
    %p79 = por %p77, %p78
    %p80 = scmp.ne.s32.totalorder %s69, %s70
    %p81 = scmp.eq.s32.totalorder %s15, 0
    %p82 = por %p80, %p81
    %p83 = scmp.ne.s32.totalorder %s69, %s70
    %p84 = scmp.eq.s32.totalorder %s16, 3
    %p85 = por %p83, %p84
    %p87 = scmp.ne.s32.totalorder %s70, %s86
    %p88 = scmp.eq.s32.totalorder %s16, 0
    %p89 = por %p87, %p88
    %s91 = sadd.s32 %s90, 1
    %p94 = scmp.eq.s32.totalorder %s10, 3
    %p95 = scmp.ne.s32.totalorder %s90, %s92
    %p96 = scmp.eq.s32.totalorder %s10, 0
    %p97 = por %p95, %p96
    %p98 = scmp.ne.s32.totalorder %s90, %s92
    %p99 = scmp.eq.s32.totalorder %s15, 3
    %p100 = por %p98, %p99
    %p101 = scmp.ne.s32.totalorder %s92, %s93
    %p102 = scmp.eq.s32.totalorder %s15, 0
    %p103 = por %p101, %p102
    %p104 = scmp.ne.s32.totalorder %s92, %s93
    %p105 = scmp.eq.s32.totalorder %s16, 3
    %p106 = por %p104, %p105
    %p108 = scmp.ne.s32.totalorder %s93, %s107
    %p109 = scmp.eq.s32.totalorder %s16, 0
    %p110 = por %p108, %p109
    %s112 = sadd.s32 %s111, 1
    %p115 = scmp.eq.s32.totalorder %s10, 3
    %p116 = scmp.ne.s32.totalorder %s111, %s113
    %p117 = scmp.eq.s32.totalorder %s10, 0
    %p118 = por %p116, %p117
    %p119 = scmp.ne.s32.totalorder %s111, %s113
    %p120 = scmp.eq.s32.totalorder %s15, 3
    %p121 = por %p119, %p120
    %p122 = scmp.ne.s32.totalorder %s113, %s114
    %p123 = scmp.eq.s32.totalorder %s15, 0
    %p124 = por %p122, %p123
    %p125 = scmp.ne.s32.totalorder %s113, %s114
    %p126 = scmp.eq.s32.totalorder %s16, 3
    %p127 = por %p125, %p126
    %p129 = scmp.ne.s32.totalorder %s114, %s128
    %p130 = scmp.eq.s32.totalorder %s16, 0
    %p131 = por %p129, %p130
    %s132 = ssub.s32 %s17, %s29
    %s133 = ssub.s32 %s18, %s25
    %s134 = sor.u32 %s132, %s133
    %p135 = scmp.eq.s32.totalorder %s134, 0
    %s137 = sadd.s32 %s136, 1
    %s138 = scalar_select %p135, %s136, %s137
    %p141 = pneg %p135
    %p142 = scmp.eq.s32.totalorder %s10, 3
    %p143 = por %p141, %p142
    %p144 = scmp.ne.s32.totalorder %s136, %s139
    %p145 = scmp.eq.s32.totalorder %s10, 0
    %p146 = por %p144, %p145
    %p147 = scmp.ne.s32.totalorder %s136, %s139
    %p148 = scmp.eq.s32.totalorder %s15, 3
    %p149 = por %p147, %p148
    %p150 = scmp.ne.s32.totalorder %s139, %s140
    %p151 = scmp.eq.s32.totalorder %s15, 0
    %p152 = por %p150, %p151
    %p153 = scmp.ne.s32.totalorder %s139, %s140
    %p154 = scmp.eq.s32.totalorder %s16, 3
    %p155 = por %p153, %p154
    %p157 = scmp.ne.s32.totalorder %s140, %s156
    %p158 = scmp.eq.s32.totalorder %s16, 0
    %p159 = por %p157, %p158
    %p160 = scmp.le.s32.totalorder 1, %s10
    %p161 = scmp.lt.s32.totalorder %s10, 5
    %p162 = pnand %p160, %p161
    %p163 = pneg %p162
    // Predicated region
    $region9: #{tpu_custom_call.1} parent=5 // pred_check
      _
    $region10: #{tpu_custom_call.1} parent=5 // pred_check_branch
      %165 = sbr.rel (%p162) target = $region12
    $region11: #{tpu_custom_call.1} parent=5 // pred_region
      %s166 = ssub.s32 %s10, 1
      // Predicated region
      $region13: #{tpu_custom_call.1} parent=11 // pred_check
        %p167 = pneg %p103
      $region14: #{tpu_custom_call.1} parent=11 // pred_check_branch
        %169 = sbr.rel (%p167) target = $region16
      $region15: #{tpu_custom_call.1} parent=11 // pred_region
        _
      $region16: #{tpu_custom_call.1} parent=11 // pred_fallthru
        _
      // Predicated region
      $region17: #{tpu_custom_call.1} parent=11 // pred_check
        %p170 = pneg %p124
      $region18: #{tpu_custom_call.1} parent=11 // pred_check_branch
        %172 = sbr.rel (%p170) target = $region20
      $region19: #{tpu_custom_call.1} parent=11 // pred_region
        _
      $region20: #{tpu_custom_call.1} parent=11 // pred_fallthru
        _
    $region12: #{tpu_custom_call.1} parent=5 // pred_fallthru
      _
    %p173 = scmp.lt.s32.totalorder %s10, 4
    // Predicated region
    $region21: #{tpu_custom_call.1} parent=5 // pred_check
      %p174 = pneg %p173
    $region22: #{tpu_custom_call.1} parent=5 // pred_check_branch
      %176 = sbr.rel (%p174) target = $region24
    $region23: #{tpu_custom_call.1} parent=5 // pred_region
      // Predicated region
      $region25: #{tpu_custom_call.1} parent=23 // pred_check
        %p177 = pneg %p44
      $region26: #{tpu_custom_call.1} parent=23 // pred_check_branch
        %179 = sbr.rel (%p177) target = $region28
      $region27: #{tpu_custom_call.1} parent=23 // pred_region
        %s180 = smul.u32 8, %s18
        %s181 = ssub.s32 18, %s180
        %p182 = scmp.lt.s32.totalorder %s181, 8
        %s183 = scalar_select %p182, %s181, 8
        %s184 = smul.u32 128, %s183
        %s185 = smul.u32 %s184, 3
        %p186 = scmp.lt.s32.totalorder %s17, 1
        %s187 = scalar_select %p186, %s17, 1
        %p188 = scmp.lt.s32.totalorder %s180, 17
        %s189 = scalar_select %p188, %s180, 17
        %s190 = smul.addr %s189, 3
        %s191 = smul.addr %s187, 54
        %s192 = sadd.s32 %s190, %s191
        %s193 = smul.addr %s192, 8
        %s194 = scalar_lea.vmem %s0, %s193
        %s195 = smul.u32 8, %s18
        %s196 = ssub.s32 18, %s195
        %p197 = scmp.lt.s32.totalorder %s196, 8
        %s198 = scalar_select %p197, %s196, 8
        %s199 = smul.u32 128, %s198
        %s200 = smul.u32 %s199, 3
      $region28: #{tpu_custom_call.1} parent=23 // pred_fallthru
        _
      // Predicated region
      $region29: #{tpu_custom_call.1} parent=23 // pred_check
        %p201 = pneg %p76
      $region30: #{tpu_custom_call.1} parent=23 // pred_check_branch
        %203 = sbr.rel (%p201) target = $region32
      $region31: #{tpu_custom_call.1} parent=23 // pred_region
        %s204 = sadd.s32 %s18, 1
        %s205 = smul.u32 %s204, 4
        %s206 = smul.u32 2, %s205
        %p207 = scmp.lt.s32.totalorder %s17, 1
        %s208 = scalar_select %p207, %s17, 1
        %p209 = scmp.lt.s32.totalorder %s206, 17
        %s210 = scalar_select %p209, %s206, 17
        %s211 = smul.addr %s210, 3
        %s212 = smul.addr %s208, 54
        %s213 = sadd.s32 %s211, %s212
        %s214 = smul.addr %s213, 8
        %s215 = scalar_lea.vmem %s1, %s214
        %s216 = sadd.s32 %s18, 1
        %s217 = smul.u32 %s216, 4
        %s218 = smul.u32 2, %s217
      $region32: #{tpu_custom_call.1} parent=23 // pred_fallthru
        _
    $region24: #{tpu_custom_call.1} parent=5 // pred_fallthru
      _
    %p219 = scmp.le.s32.totalorder 1, %s10
    %p220 = scmp.lt.s32.totalorder %s10, 5
    %p221 = pnand %p219, %p220
    %p222 = pneg %p221
    // Predicated region
    $region33: #{tpu_custom_call.1} parent=5 // pred_check
      _
    $region34: #{tpu_custom_call.1} parent=5 // pred_check_branch
      %224 = sbr.rel (%p221) target = $region36
    $region35: #{tpu_custom_call.1} parent=5 // pred_region
      %s225 = ssub.s32 %s10, 1
      %s226 = smul.u32 8, %s20
      %s227 = ssub.s32 18, %s226
      %p228 = scmp.lt.s32.totalorder %s227, 8
      %s229 = scalar_select %p228, %s227, 8
      %s230 = smul.u32 128, %s229
      %s231 = smul.u32 %s230, 3
      %p232 = scmp.lt.s32.totalorder %s19, 1
      %s233 = scalar_select %p232, %s19, 1
      %p234 = scmp.lt.s32.totalorder %s226, 17
      %s235 = scalar_select %p234, %s226, 17
      %s236 = smul.addr %s235, 3
      %s237 = smul.addr %s233, 54
      %s238 = sadd.s32 %s236, %s237
      %s239 = smul.addr %s238, 8
      %s240 = scalar_lea.vmem %s0, %s239
      %p241 = pneg %p50
      %p242 = pneg %p47
      %s243 = sadd.s32 %s20, 1
      %s244 = smul.u32 %s243, 4
      %s245 = smul.u32 2, %s244
      %p246 = scmp.lt.s32.totalorder %s19, 1
      %s247 = scalar_select %p246, %s19, 1
      %p248 = scmp.lt.s32.totalorder %s245, 17
      %s249 = scalar_select %p248, %s245, 17
      %s250 = smul.addr %s249, 3
      %s251 = smul.addr %s247, 54
      %s252 = sadd.s32 %s250, %s251
      %s253 = smul.addr %s252, 8
      %s254 = scalar_lea.vmem %s1, %s253
      %p255 = pneg %p82
      %p256 = pneg %p79
      %p257 = pneg %p103
      %p258 = pneg %p100
      %p259 = pneg %p124
      %p260 = pneg %p121
      %p261 = pneg %p152
      %p262 = pneg %p149
      %s263 = smul.u32 8, %s20
      %p264 = scmp.lt.s32.totalorder %s19, 1
      %s265 = scalar_select %p264, %s19, 1
      %p266 = scmp.lt.s32.totalorder %s263, 15
      %s267 = scalar_select %p266, %s263, 15
      %s268 = smul.addr %s267, 2
      %s269 = smul.addr %s265, 32
      %s270 = sadd.s32 %s268, %s269
      %s271 = smul.addr %s270, 8
      %s272 = scalar_lea.vmem %s4, %s271
      %s273 = smul.u32 8, %s20
      %s274 = ssub.s32 18, %s273
      %p275 = scmp.lt.s32.totalorder %s274, 8
      %s276 = scalar_select %p275, %s274, 8
      %s277 = smul.u32 128, %s276
      %s278 = smul.u32 %s277, 3
      %p279 = scmp.lt.s32.totalorder %s19, 1
      %s280 = scalar_select %p279, %s19, 1
      %p281 = scmp.lt.s32.totalorder %s273, 17
      %s282 = scalar_select %p281, %s273, 17
      %s283 = smul.addr %s282, 3
      %s284 = smul.addr %s280, 54
      %s285 = sadd.s32 %s283, %s284
      %s286 = smul.addr %s285, 8
      %s287 = scalar_lea.vmem %s0, %s286
      %s288 = smul.u32 8, %s20
      %s289 = ssub.s32 18, %s288
      %p290 = scmp.lt.s32.totalorder %s289, 8
      %s291 = scalar_select %p290, %s289, 8
      %s292 = smul.u32 128, %s291
      %s293 = smul.u32 %s292, 3
      %s294 = sadd.s32 %s20, 1
      %s295 = smul.u32 %s294, 4
      %s296 = smul.u32 2, %s295
      %p297 = scmp.lt.s32.totalorder %s19, 1
      %s298 = scalar_select %p297, %s19, 1
      %p299 = scmp.lt.s32.totalorder %s296, 17
      %s300 = scalar_select %p299, %s296, 17
      %s301 = smul.addr %s300, 3
      %s302 = smul.addr %s298, 54
      %s303 = sadd.s32 %s301, %s302
      %s304 = smul.addr %s303, 8
      %s305 = scalar_lea.vmem %s1, %s304
      %s306 = sadd.s32 %s20, 1
      %s307 = smul.u32 %s306, 4
      %s308 = smul.u32 2, %s307
      %s309 = smul.u32 8, %s20
      %p310 = scmp.lt.s32.totalorder %s19, 1
      %s311 = scalar_select %p310, %s19, 1
      %p312 = scmp.lt.s32.totalorder %s309, 15
      %s313 = scalar_select %p312, %s309, 15
      %s314 = smul.addr %s313, 2
      %s315 = smul.addr %s311, 32
      %s316 = sadd.s32 %s314, %s315
      %s317 = smul.addr %s316, 8
      %s318 = scalar_lea.vmem %s4, %s317
      %s319 = smul.u32 8, %s20
      %v320 = vld [vmem:[%s3] sm:$0x3]
      %v321 = vld [vmem:[%s287] sm:$0xff]
      %v322 = vld [vmem:[%s287 + $0x8] sm:$0xff]
      %v323 = vld [vmem:[%s287 + $0x10] sm:$0xff]
      %v324 = vld [vmem:[%s287 + $0x18] sm:$0xff]
      %v325 = vld [vmem:[%s287 + $0x20] sm:$0xff]
      %v326 = vld [vmem:[%s287 + $0x28] sm:$0xff]
      %v327 = vld [vmem:[%s287 + $0x30] sm:$0xff]
      %v328 = vld [vmem:[%s287 + $0x38] sm:$0xff]
      %v329 = vld [vmem:[%s287 + $0x40] sm:$0xff]
      %v330 = vld [vmem:[%s287 + $0x48] sm:$0xff]
      %v331 = vld [vmem:[%s287 + $0x50] sm:$0xff]
      %v332 = vld [vmem:[%s287 + $0x58] sm:$0xff]
      %v333 = vld [vmem:[%s287 + $0x60] sm:$0xff]
      %v334 = vld [vmem:[%s287 + $0x68] sm:$0xff]
      %v335 = vld [vmem:[%s287 + $0x70] sm:$0xff]
      %v336 = vld [vmem:[%s287 + $0x78] sm:$0xff]
      %v337 = vld [vmem:[%s287 + $0x80] sm:$0xff]
      %v338 = vld [vmem:[%s287 + $0x88] sm:$0xff]
      %v339 = vld [vmem:[%s287 + $0x90] sm:$0xff]
      %v340 = vld [vmem:[%s287 + $0x98] sm:$0xff]
      %v341 = vld [vmem:[%s287 + $0xa0] sm:$0xff]
      %v342 = vld [vmem:[%s287 + $0xa8] sm:$0xff]
      %v343 = vld [vmem:[%s287 + $0xb0] sm:$0xff]
      %v344 = vld [vmem:[%s287 + $0xb8] sm:$0xff]
      %v345 = vld [vmem:[%s305] sm:$0xff]
      %v346 = vld [vmem:[%s305 + $0x8] sm:$0xff]
      %v347 = vld [vmem:[%s305 + $0x10] sm:$0xff]
      %v348 = vld [vmem:[%s305 + $0x18] sm:$0xff]
      %v349 = vld [vmem:[%s305 + $0x20] sm:$0xff]
      %v350 = vld [vmem:[%s305 + $0x28] sm:$0xff]
      %v351 = vld [vmem:[%s2] sm:$0xf]
      %s352 = scalar_lea.vmem %s2, 12
      %v353 = vld [vmem:[%s352] sm:$0xf]
      %vm354 = vcmask 31744
      %v356 = vsel %vm354, %v324, 0
      %v359 = vsel %vm354, %v325, 0
      %v362 = vsel %vm354, %v327, 0
      %v365 = vsel %vm354, %v328, 0
      %v368 = vsel %vm354, %v330, 0
      %v371 = vsel %vm354, %v331, 0
      %v374 = vsel %vm354, %v333, 0
      %v377 = vsel %vm354, %v334, 0
      %v380 = vsel %vm354, %v336, 0
      %v383 = vsel %vm354, %v337, 0
      %v386 = vsel %vm354, %v339, 0
      %v389 = vsel %vm354, %v340, 0
      %vm391 = vcmask 1043456
      %v393 = vsel %vm391, %v353, 0
      %395 = vmatprep.subr.mxu0 0.0
      %396 = vmatpush1.msra.mxu0 %v393
      %397 = vmatprep.subr.mxu0 0.0
      %398 = vmatpush1.msra.mxu0 0.0
      %399 = vmatprep.subr.mxu0 0.0
      %400 = vmatpush1.msra.mxu0 0.0
      %401 = vmatprep.subr.mxu0 0.0
      %402 = vmatpush1.msra.mxu0 0.0
      %403 = vmatprep.subr.mxu0 0.0
      %404 = vmatpush1.msra.mxu0 0.0
      %405 = vmatprep.subr.mxu0 0.0
      %406 = vmatpush1.msra.mxu0 0.0
      %407 = vmatprep.subr.mxu0 0.0
      %408 = vmatpush1.msra.mxu0 0.0
      %409 = vmatprep.subr.mxu0 0.0
      %410 = vmatpush1.msra.mxu0 0.0
      %411 = vmatprep.subr.mxu0 0.0
      %412 = vmatpush1.msra.mxu0 0.0
      %413 = vmatprep.subr.mxu0 0.0
      %414 = vmatpush1.msra.mxu0 0.0
      %415 = vmatprep.subr.mxu0 0.0
      %416 = vmatpush1.msra.mxu0 0.0
      %417 = vmatprep.subr.mxu0 0.0
      %418 = vmatpush1.msra.mxu0 0.0
      %419 = vmatprep.subr.mxu0 0.0
      %420 = vmatpush1.msra.mxu0 0.0
      %421 = vmatprep.subr.mxu0 0.0
      %422 = vmatpush1.msra.mxu0 0.0
      %423 = vmatprep.subr.mxu0 0.0
      %424 = vmatpush1.msra.mxu0 0.0
      %425 = vmatprep.subr.mxu0 0.0
      %426 = vmatpush1.msra.mxu0 0.0
      %427 = vmatprep.subr.mxu0 0.0
      %428 = vmatpush1.msra.mxu0 0.0
      %429 = vmatprep.subr.mxu0 0.0
      %430 = vmatpush1.msra.mxu0 0.0
      %431 = vmatprep.subr.mxu0 0.0
      %432 = vmatpush1.msra.mxu0 0.0
      %433 = vmatprep.subr.mxu0 0.0
      %434 = vmatpush1.msra.mxu0 0.0
      %435 = vmatprep.subr.mxu0 0.0
      %436 = vmatpush1.msra.mxu0 0.0
      %437 = vmatprep.subr.mxu0 0.0
      %438 = vmatpush1.msra.mxu0 0.0
      %439 = vmatprep.subr.mxu0 0.0
      %440 = vmatpush1.msra.mxu0 0.0
      %441 = vmatprep.subr.mxu0 0.0
      %442 = vmatpush1.msra.mxu0 0.0
      %443 = vmatprep.subr.mxu0 0.0
      %444 = vmatpush1.msra.mxu0 0.0
      %445 = vmatprep.subr.mxu0 0.0
      %446 = vmatpush1.msra.mxu0 0.0
      %447 = vmatprep.subr.mxu0 0.0
      %448 = vmatpush1.msra.mxu0 0.0
      %449 = vmatprep.subr.mxu0 0.0
      %450 = vmatpush1.msra.mxu0 0.0
      %451 = vmatprep.subr.mxu0 0.0
      %452 = vmatpush1.msra.mxu0 0.0
      %453 = vmatprep.subr.mxu0 0.0
      %454 = vmatpush1.msra.mxu0 0.0
      %455 = vmatprep.subr.mxu0 0.0
      %456 = vmatpush1.msra.mxu0 0.0
      %457 = vmatprep.subr.mxu0 0.0
      %458 = vmatpush1.msra.mxu0 0.0
      %459 = vmatprep.mubr.f32.mxu0 0.0
      %460 = vmatmul.mubr.f32.gmra.mrb[0].mxu0 %v356
      %v461 = vpop.f32.mrb[0].mxu0
      %v462 = vadd.f32 0.0, %v461
      %v463 = vpop.f32.mrb[0].mxu0
      %464 = vmatprep.mubr.f32.mxu0 0.0
      %465 = vmatmul.mubr.f32.gmra.mrb[0].mxu0 %v359
      %v466 = vpop.f32.mrb[0].mxu0
      %v467 = vadd.f32 0.0, %v466
      %v468 = vpop.f32.mrb[0].mxu0
      %469 = vmatprep.mubr.f32.mxu0 0.0
      %470 = vmatmul.mubr.f32.gmra.mrb[0].mxu0 %v362
      %v471 = vpop.f32.mrb[0].mxu0
      %v472 = vadd.f32 0.0, %v471
      %v473 = vpop.f32.mrb[0].mxu0
      %474 = vmatprep.mubr.f32.mxu0 0.0
      %475 = vmatmul.mubr.f32.gmra.mrb[0].mxu0 %v365
      %v476 = vpop.f32.mrb[0].mxu0
      %v477 = vadd.f32 0.0, %v476
      %v478 = vpop.f32.mrb[0].mxu0
      %479 = vmatprep.mubr.f32.mxu0 0.0
      %480 = vmatmul.mubr.f32.gmra.mrb[0].mxu0 %v368
      %v481 = vpop.f32.mrb[0].mxu0
      %v482 = vadd.f32 0.0, %v481
      %v483 = vpop.f32.mrb[0].mxu0
      %484 = vmatprep.mubr.f32.mxu0 0.0
      %485 = vmatmul.mubr.f32.gmra.mrb[0].mxu0 %v371
      %v486 = vpop.f32.mrb[0].mxu0
      %v487 = vadd.f32 0.0, %v486
      %v488 = vpop.f32.mrb[0].mxu0
      %489 = vmatprep.mubr.f32.mxu0 0.0
      %490 = vmatmul.mubr.f32.gmra.mrb[0].mxu0 %v374
      %v491 = vpop.f32.mrb[0].mxu0
      %v492 = vadd.f32 0.0, %v491
      %v493 = vpop.f32.mrb[0].mxu0
      %494 = vmatprep.mubr.f32.mxu0 0.0
      %495 = vmatmul.mubr.f32.gmra.mrb[0].mxu0 %v377
      %v496 = vpop.f32.mrb[0].mxu0
      %v497 = vadd.f32 0.0, %v496
      %v498 = vpop.f32.mrb[0].mxu0
      %499 = vmatprep.mubr.f32.mxu0 0.0
      %500 = vmatmul.mubr.f32.gmra.mrb[0].mxu0 %v380
      %v501 = vpop.f32.mrb[0].mxu0
      %v502 = vadd.f32 0.0, %v501
      %v503 = vpop.f32.mrb[0].mxu0
      %504 = vmatprep.mubr.f32.mxu0 0.0
      %505 = vmatmul.mubr.f32.gmra.mrb[0].mxu0 %v383
      %v506 = vpop.f32.mrb[0].mxu0
      %v507 = vadd.f32 0.0, %v506
      %v508 = vpop.f32.mrb[0].mxu0
      %509 = vmatprep.mubr.f32.mxu0 0.0
      %510 = vmatmul.mubr.f32.gmra.mrb[0].mxu0 %v386
      %v511 = vpop.f32.mrb[0].mxu0
      %v512 = vadd.f32 0.0, %v511
      %v513 = vpop.f32.mrb[0].mxu0
      %514 = vmatprep.mubr.f32.mxu0 0.0
      %515 = vmatmul.mubr.f32.gmra.mrb[0].mxu0 %v389
      %v516 = vpop.f32.mrb[0].mxu0
      %v517 = vadd.f32 0.0, %v516
      %v518 = vpop.f32.mrb[0].mxu0
      %519 = vdwg.mxu0
      %v521 = vsel %vm354, %v321, 0
      %v524 = vsel %vm354, %v322, 0
      %v527 = vsel %vm391, %v351, 0
      %529 = vmatprep.subr.mxu0 0.0
      %530 = vmatpush1.msra.mxu0 %v527
      %531 = vmatprep.subr.mxu0 0.0
      %532 = vmatpush1.msra.mxu0 0.0
      %533 = vmatprep.subr.mxu0 0.0
      %534 = vmatpush1.msra.mxu0 0.0
      %535 = vmatprep.subr.mxu0 0.0
      %536 = vmatpush1.msra.mxu0 0.0
      %537 = vmatprep.subr.mxu0 0.0
      %538 = vmatpush1.msra.mxu0 0.0
      %539 = vmatprep.subr.mxu0 0.0
      %540 = vmatpush1.msra.mxu0 0.0
      %541 = vmatprep.subr.mxu0 0.0
      %542 = vmatpush1.msra.mxu0 0.0
      %543 = vmatprep.subr.mxu0 0.0
      %544 = vmatpush1.msra.mxu0 0.0
      %545 = vmatprep.subr.mxu0 0.0
      %546 = vmatpush1.msra.mxu0 0.0
      %547 = vmatprep.subr.mxu0 0.0
      %548 = vmatpush1.msra.mxu0 0.0
      %549 = vmatprep.subr.mxu0 0.0
      %550 = vmatpush1.msra.mxu0 0.0
      %551 = vmatprep.subr.mxu0 0.0
      %552 = vmatpush1.msra.mxu0 0.0
      %553 = vmatprep.subr.mxu0 0.0
      %554 = vmatpush1.msra.mxu0 0.0
      %555 = vmatprep.subr.mxu0 0.0
      %556 = vmatpush1.msra.mxu0 0.0
      %557 = vmatprep.subr.mxu0 0.0
      %558 = vmatpush1.msra.mxu0 0.0
      %559 = vmatprep.subr.mxu0 0.0
      %560 = vmatpush1.msra.mxu0 0.0
      %561 = vmatprep.subr.mxu0 0.0
      %562 = vmatpush1.msra.mxu0 0.0
      %563 = vmatprep.subr.mxu0 0.0
      %564 = vmatpush1.msra.mxu0 0.0
      %565 = vmatprep.subr.mxu0 0.0
      %566 = vmatpush1.msra.mxu0 0.0
      %567 = vmatprep.subr.mxu0 0.0
      %568 = vmatpush1.msra.mxu0 0.0
      %569 = vmatprep.subr.mxu0 0.0
      %570 = vmatpush1.msra.mxu0 0.0
      %571 = vmatprep.subr.mxu0 0.0
      %572 = vmatpush1.msra.mxu0 0.0
      %573 = vmatprep.subr.mxu0 0.0
      %574 = vmatpush1.msra.mxu0 0.0
      %575 = vmatprep.subr.mxu0 0.0
      %576 = vmatpush1.msra.mxu0 0.0
      %577 = vmatprep.subr.mxu0 0.0
      %578 = vmatpush1.msra.mxu0 0.0
      %579 = vmatprep.subr.mxu0 0.0
      %580 = vmatpush1.msra.mxu0 0.0
      %581 = vmatprep.subr.mxu0 0.0
      %582 = vmatpush1.msra.mxu0 0.0
      %583 = vmatprep.subr.mxu0 0.0
      %584 = vmatpush1.msra.mxu0 0.0
      %585 = vmatprep.subr.mxu0 0.0
      %586 = vmatpush1.msra.mxu0 0.0
      %587 = vmatprep.subr.mxu0 0.0
      %588 = vmatpush1.msra.mxu0 0.0
      %589 = vmatprep.subr.mxu0 0.0
      %590 = vmatpush1.msra.mxu0 0.0
      %591 = vmatprep.subr.mxu0 0.0
      %592 = vmatpush1.msra.mxu0 0.0
      %593 = vmatprep.mubr.f32.mxu0 0.0
      %594 = vmatmul.mubr.f32.gmra.mrb[0].mxu0 %v521
      %v595 = vpop.f32.mrb[0].mxu0
      %v596 = vadd.f32 %v462, %v595
      %v597 = vpop.f32.mrb[0].mxu0
      %598 = vmatprep.mubr.f32.mxu0 0.0
      %599 = vmatmul.mubr.f32.gmra.mrb[0].mxu0 %v524
      %v600 = vpop.f32.mrb[0].mxu0
      %v601 = vadd.f32 %v467, %v600
      %v602 = vpop.f32.mrb[0].mxu0
      %603 = vmatprep.mubr.f32.mxu0 0.0
      %604 = vmatmul.mubr.f32.gmra.mrb[0].mxu0 %v356
      %v605 = vpop.f32.mrb[0].mxu0
      %v606 = vadd.f32 %v472, %v605
      %v607 = vpop.f32.mrb[0].mxu0
      %608 = vmatprep.mubr.f32.mxu0 0.0
      %609 = vmatmul.mubr.f32.gmra.mrb[0].mxu0 %v359
      %v610 = vpop.f32.mrb[0].mxu0
      %v611 = vadd.f32 %v477, %v610
      %v612 = vpop.f32.mrb[0].mxu0
      %613 = vmatprep.mubr.f32.mxu0 0.0
      %614 = vmatmul.mubr.f32.gmra.mrb[0].mxu0 %v362
      %v615 = vpop.f32.mrb[0].mxu0
      %v616 = vadd.f32 %v482, %v615
      %v617 = vpop.f32.mrb[0].mxu0
      %618 = vmatprep.mubr.f32.mxu0 0.0
      %619 = vmatmul.mubr.f32.gmra.mrb[0].mxu0 %v365
      %v620 = vpop.f32.mrb[0].mxu0
      %v621 = vadd.f32 %v487, %v620
      %v622 = vpop.f32.mrb[0].mxu0
      %623 = vmatprep.mubr.f32.mxu0 0.0
      %624 = vmatmul.mubr.f32.gmra.mrb[0].mxu0 %v368
      %v625 = vpop.f32.mrb[0].mxu0
      %v626 = vadd.f32 %v492, %v625
      %v627 = vpop.f32.mrb[0].mxu0
      %628 = vmatprep.mubr.f32.mxu0 0.0
      %629 = vmatmul.mubr.f32.gmra.mrb[0].mxu0 %v371
      %v630 = vpop.f32.mrb[0].mxu0
      %v631 = vadd.f32 %v497, %v630
      %v632 = vpop.f32.mrb[0].mxu0
      %633 = vmatprep.mubr.f32.mxu0 0.0
      %634 = vmatmul.mubr.f32.gmra.mrb[0].mxu0 %v374
      %v635 = vpop.f32.mrb[0].mxu0
      %v636 = vadd.f32 %v502, %v635
      %v637 = vpop.f32.mrb[0].mxu0
      %638 = vmatprep.mubr.f32.mxu0 0.0
      %639 = vmatmul.mubr.f32.gmra.mrb[0].mxu0 %v377
      %v640 = vpop.f32.mrb[0].mxu0
      %v641 = vadd.f32 %v507, %v640
      %v642 = vpop.f32.mrb[0].mxu0
      %643 = vmatprep.mubr.f32.mxu0 0.0
      %644 = vmatmul.mubr.f32.gmra.mrb[0].mxu0 %v380
      %v645 = vpop.f32.mrb[0].mxu0
      %v646 = vadd.f32 %v512, %v645
      %v647 = vpop.f32.mrb[0].mxu0
      %648 = vmatprep.mubr.f32.mxu0 0.0
      %649 = vmatmul.mubr.f32.gmra.mrb[0].mxu0 %v383
      %v650 = vpop.f32.mrb[0].mxu0
      %v651 = vadd.f32 %v517, %v650
      %v652 = vpop.f32.mrb[0].mxu0
      %653 = vdwg.mxu0
      %v655 = vsel %vm354, %v342, 0
      %v658 = vsel %vm354, %v343, 0
      %v661 = vsel %vm354, %v345, 0
      %v664 = vsel %vm354, %v346, 0
      %666 = vmatprep.subr.mxu0 0.0
      %667 = vmatpush1.msra.mxu0 %v393
      %668 = vmatprep.subr.mxu0 0.0
      %669 = vmatpush1.msra.mxu0 0.0
      %670 = vmatprep.subr.mxu0 0.0
      %671 = vmatpush1.msra.mxu0 0.0
      %672 = vmatprep.subr.mxu0 0.0
      %673 = vmatpush1.msra.mxu0 0.0
      %674 = vmatprep.subr.mxu0 0.0
      %675 = vmatpush1.msra.mxu0 0.0
      %676 = vmatprep.subr.mxu0 0.0
      %677 = vmatpush1.msra.mxu0 0.0
      %678 = vmatprep.subr.mxu0 0.0
      %679 = vmatpush1.msra.mxu0 0.0
      %680 = vmatprep.subr.mxu0 0.0
      %681 = vmatpush1.msra.mxu0 0.0
      %682 = vmatprep.subr.mxu0 0.0
      %683 = vmatpush1.msra.mxu0 0.0
      %684 = vmatprep.subr.mxu0 0.0
      %685 = vmatpush1.msra.mxu0 0.0
      %686 = vmatprep.subr.mxu0 0.0
      %687 = vmatpush1.msra.mxu0 0.0
      %688 = vmatprep.subr.mxu0 0.0
      %689 = vmatpush1.msra.mxu0 0.0
      %690 = vmatprep.subr.mxu0 0.0
      %691 = vmatpush1.msra.mxu0 0.0
      %692 = vmatprep.subr.mxu0 0.0
      %693 = vmatpush1.msra.mxu0 0.0
      %694 = vmatprep.subr.mxu0 0.0
      %695 = vmatpush1.msra.mxu0 0.0
      %696 = vmatprep.subr.mxu0 0.0
      %697 = vmatpush1.msra.mxu0 0.0
      %698 = vmatprep.subr.mxu0 0.0
      %699 = vmatpush1.msra.mxu0 0.0
      %700 = vmatprep.subr.mxu0 0.0
      %701 = vmatpush1.msra.mxu0 0.0
      %702 = vmatprep.subr.mxu0 0.0
      %703 = vmatpush1.msra.mxu0 0.0
      %704 = vmatprep.subr.mxu0 0.0
      %705 = vmatpush1.msra.mxu0 0.0
      %706 = vmatprep.subr.mxu0 0.0
      %707 = vmatpush1.msra.mxu0 0.0
      %708 = vmatprep.subr.mxu0 0.0
      %709 = vmatpush1.msra.mxu0 0.0
      %710 = vmatprep.subr.mxu0 0.0
      %711 = vmatpush1.msra.mxu0 0.0
      %712 = vmatprep.subr.mxu0 0.0
      %713 = vmatpush1.msra.mxu0 0.0
      %714 = vmatprep.subr.mxu0 0.0
      %715 = vmatpush1.msra.mxu0 0.0
      %716 = vmatprep.subr.mxu0 0.0
      %717 = vmatpush1.msra.mxu0 0.0
      %718 = vmatprep.subr.mxu0 0.0
      %719 = vmatpush1.msra.mxu0 0.0
      %720 = vmatprep.subr.mxu0 0.0
      %721 = vmatpush1.msra.mxu0 0.0
      %722 = vmatprep.subr.mxu0 0.0
      %723 = vmatpush1.msra.mxu0 0.0
      %724 = vmatprep.subr.mxu0 0.0
      %725 = vmatpush1.msra.mxu0 0.0
      %726 = vmatprep.subr.mxu0 0.0
      %727 = vmatpush1.msra.mxu0 0.0
      %728 = vmatprep.subr.mxu0 0.0
      %729 = vmatpush1.msra.mxu0 0.0
      %730 = vmatprep.mubr.f32.mxu0 0.0
      %731 = vmatmul.mubr.f32.gmra.mrb[0].mxu0 %v655
      %v732 = vpop.f32.mrb[0].mxu0
      %v733 = vadd.f32 0.0, %v732
      %v734 = vpop.f32.mrb[0].mxu0
      %735 = vmatprep.mubr.f32.mxu0 0.0
      %736 = vmatmul.mubr.f32.gmra.mrb[0].mxu0 %v658
      %v737 = vpop.f32.mrb[0].mxu0
      %v738 = vadd.f32 0.0, %v737
      %v739 = vpop.f32.mrb[0].mxu0
      %740 = vmatprep.mubr.f32.mxu0 0.0
      %741 = vmatmul.mubr.f32.gmra.mrb[0].mxu0 %v661
      %v742 = vpop.f32.mrb[0].mxu0
      %v743 = vadd.f32 0.0, %v742
      %v744 = vpop.f32.mrb[0].mxu0
      %745 = vmatprep.mubr.f32.mxu0 0.0
      %746 = vmatmul.mubr.f32.gmra.mrb[0].mxu0 %v664
      %v747 = vpop.f32.mrb[0].mxu0
      %v748 = vadd.f32 0.0, %v747
      %v749 = vpop.f32.mrb[0].mxu0
      %750 = vdwg.mxu0
      %751 = vmatprep.subr.mxu0 0.0
      %752 = vmatpush1.msra.mxu0 %v527
      %753 = vmatprep.subr.mxu0 0.0
      %754 = vmatpush1.msra.mxu0 0.0
      %755 = vmatprep.subr.mxu0 0.0
      %756 = vmatpush1.msra.mxu0 0.0
      %757 = vmatprep.subr.mxu0 0.0
      %758 = vmatpush1.msra.mxu0 0.0
      %759 = vmatprep.subr.mxu0 0.0
      %760 = vmatpush1.msra.mxu0 0.0
      %761 = vmatprep.subr.mxu0 0.0
      %762 = vmatpush1.msra.mxu0 0.0
      %763 = vmatprep.subr.mxu0 0.0
      %764 = vmatpush1.msra.mxu0 0.0
      %765 = vmatprep.subr.mxu0 0.0
      %766 = vmatpush1.msra.mxu0 0.0
      %767 = vmatprep.subr.mxu0 0.0
      %768 = vmatpush1.msra.mxu0 0.0
      %769 = vmatprep.subr.mxu0 0.0
      %770 = vmatpush1.msra.mxu0 0.0
      %771 = vmatprep.subr.mxu0 0.0
      %772 = vmatpush1.msra.mxu0 0.0
      %773 = vmatprep.subr.mxu0 0.0
      %774 = vmatpush1.msra.mxu0 0.0
      %775 = vmatprep.subr.mxu0 0.0
      %776 = vmatpush1.msra.mxu0 0.0
      %777 = vmatprep.subr.mxu0 0.0
      %778 = vmatpush1.msra.mxu0 0.0
      %779 = vmatprep.subr.mxu0 0.0
      %780 = vmatpush1.msra.mxu0 0.0
      %781 = vmatprep.subr.mxu0 0.0
      %782 = vmatpush1.msra.mxu0 0.0
      %783 = vmatprep.subr.mxu0 0.0
      %784 = vmatpush1.msra.mxu0 0.0
      %785 = vmatprep.subr.mxu0 0.0
      %786 = vmatpush1.msra.mxu0 0.0
      %787 = vmatprep.subr.mxu0 0.0
      %788 = vmatpush1.msra.mxu0 0.0
      %789 = vmatprep.subr.mxu0 0.0
      %790 = vmatpush1.msra.mxu0 0.0
      %791 = vmatprep.subr.mxu0 0.0
      %792 = vmatpush1.msra.mxu0 0.0
      %793 = vmatprep.subr.mxu0 0.0
      %794 = vmatpush1.msra.mxu0 0.0
      %795 = vmatprep.subr.mxu0 0.0
      %796 = vmatpush1.msra.mxu0 0.0
      %797 = vmatprep.subr.mxu0 0.0
      %798 = vmatpush1.msra.mxu0 0.0
      %799 = vmatprep.subr.mxu0 0.0
      %800 = vmatpush1.msra.mxu0 0.0
      %801 = vmatprep.subr.mxu0 0.0
      %802 = vmatpush1.msra.mxu0 0.0
      %803 = vmatprep.subr.mxu0 0.0
      %804 = vmatpush1.msra.mxu0 0.0
      %805 = vmatprep.subr.mxu0 0.0
      %806 = vmatpush1.msra.mxu0 0.0
      %807 = vmatprep.subr.mxu0 0.0
      %808 = vmatpush1.msra.mxu0 0.0
      %809 = vmatprep.subr.mxu0 0.0
      %810 = vmatpush1.msra.mxu0 0.0
      %811 = vmatprep.subr.mxu0 0.0
      %812 = vmatpush1.msra.mxu0 0.0
      %813 = vmatprep.subr.mxu0 0.0
      %814 = vmatpush1.msra.mxu0 0.0
      %815 = vmatprep.mubr.f32.mxu0 0.0
      %816 = vmatmul.mubr.f32.gmra.mrb[0].mxu0 %v386
      %v817 = vpop.f32.mrb[0].mxu0
      %v818 = vadd.f32 %v733, %v817
      %v819 = vpop.f32.mrb[0].mxu0
      %820 = vmatprep.mubr.f32.mxu0 0.0
      %821 = vmatmul.mubr.f32.gmra.mrb[0].mxu0 %v389
      %v822 = vpop.f32.mrb[0].mxu0
      %v823 = vadd.f32 %v738, %v822
      %v824 = vpop.f32.mrb[0].mxu0
      %825 = vmatprep.mubr.f32.mxu0 0.0
      %826 = vmatmul.mubr.f32.gmra.mrb[0].mxu0 %v655
      %v827 = vpop.f32.mrb[0].mxu0
      %v828 = vadd.f32 %v743, %v827
      %v829 = vpop.f32.mrb[0].mxu0
      %830 = vmatprep.mubr.f32.mxu0 0.0
      %831 = vmatmul.mubr.f32.gmra.mrb[0].mxu0 %v658
      %v832 = vpop.f32.mrb[0].mxu0
      %v833 = vadd.f32 %v748, %v832
      %v834 = vpop.f32.mrb[0].mxu0
      %835 = vdwg.mxu0
      %s836 = scalar_lea.vmem %s2, 24
      %v837 = vld [vmem:[%s836] sm:$0xf]
      %v839 = vsel %vm391, %v837, 0
      %841 = vmatprep.subr.mxu0 0.0
      %842 = vmatpush1.msra.mxu0 %v839
      %843 = vmatprep.subr.mxu0 0.0
      %844 = vmatpush1.msra.mxu0 0.0
      %845 = vmatprep.subr.mxu0 0.0
      %846 = vmatpush1.msra.mxu0 0.0
      %847 = vmatprep.subr.mxu0 0.0
      %848 = vmatpush1.msra.mxu0 0.0
      %849 = vmatprep.subr.mxu0 0.0
      %850 = vmatpush1.msra.mxu0 0.0
      %851 = vmatprep.subr.mxu0 0.0
      %852 = vmatpush1.msra.mxu0 0.0
      %853 = vmatprep.subr.mxu0 0.0
      %854 = vmatpush1.msra.mxu0 0.0
      %855 = vmatprep.subr.mxu0 0.0
      %856 = vmatpush1.msra.mxu0 0.0
      %857 = vmatprep.subr.mxu0 0.0
      %858 = vmatpush1.msra.mxu0 0.0
      %859 = vmatprep.subr.mxu0 0.0
      %860 = vmatpush1.msra.mxu0 0.0
      %861 = vmatprep.subr.mxu0 0.0
      %862 = vmatpush1.msra.mxu0 0.0
      %863 = vmatprep.subr.mxu0 0.0
      %864 = vmatpush1.msra.mxu0 0.0
      %865 = vmatprep.subr.mxu0 0.0
      %866 = vmatpush1.msra.mxu0 0.0
      %867 = vmatprep.subr.mxu0 0.0
      %868 = vmatpush1.msra.mxu0 0.0
      %869 = vmatprep.subr.mxu0 0.0
      %870 = vmatpush1.msra.mxu0 0.0
      %871 = vmatprep.subr.mxu0 0.0
      %872 = vmatpush1.msra.mxu0 0.0
      %873 = vmatprep.subr.mxu0 0.0
      %874 = vmatpush1.msra.mxu0 0.0
      %875 = vmatprep.subr.mxu0 0.0
      %876 = vmatpush1.msra.mxu0 0.0
      %877 = vmatprep.subr.mxu0 0.0
      %878 = vmatpush1.msra.mxu0 0.0
      %879 = vmatprep.subr.mxu0 0.0
      %880 = vmatpush1.msra.mxu0 0.0
      %881 = vmatprep.subr.mxu0 0.0
      %882 = vmatpush1.msra.mxu0 0.0
      %883 = vmatprep.subr.mxu0 0.0
      %884 = vmatpush1.msra.mxu0 0.0
      %885 = vmatprep.subr.mxu0 0.0
      %886 = vmatpush1.msra.mxu0 0.0
      %887 = vmatprep.subr.mxu0 0.0
      %888 = vmatpush1.msra.mxu0 0.0
      %889 = vmatprep.subr.mxu0 0.0
      %890 = vmatpush1.msra.mxu0 0.0
      %891 = vmatprep.subr.mxu0 0.0
      %892 = vmatpush1.msra.mxu0 0.0
      %893 = vmatprep.subr.mxu0 0.0
      %894 = vmatpush1.msra.mxu0 0.0
      %895 = vmatprep.subr.mxu0 0.0
      %896 = vmatpush1.msra.mxu0 0.0
      %897 = vmatprep.subr.mxu0 0.0
      %898 = vmatpush1.msra.mxu0 0.0
      %899 = vmatprep.subr.mxu0 0.0
      %900 = vmatpush1.msra.mxu0 0.0
      %901 = vmatprep.subr.mxu0 0.0
      %902 = vmatpush1.msra.mxu0 0.0
      %903 = vmatprep.subr.mxu0 0.0
      %904 = vmatpush1.msra.mxu0 0.0
      %905 = vmatprep.mubr.f32.mxu0 0.0
      %906 = vmatmul.mubr.f32.gmra.mrb[0].mxu0 %v362
      %v907 = vpop.f32.mrb[0].mxu0
      %v908 = vadd.f32 0.0, %v907
      %v909 = vpop.f32.mrb[0].mxu0
      %910 = vmatprep.mubr.f32.mxu0 0.0
      %911 = vmatmul.mubr.f32.gmra.mrb[0].mxu0 %v365
      %v912 = vpop.f32.mrb[0].mxu0
      %v913 = vadd.f32 0.0, %v912
      %v914 = vpop.f32.mrb[0].mxu0
      %915 = vmatprep.mubr.f32.mxu0 0.0
      %916 = vmatmul.mubr.f32.gmra.mrb[0].mxu0 %v368
      %v917 = vpop.f32.mrb[0].mxu0
      %v918 = vadd.f32 0.0, %v917
      %v919 = vpop.f32.mrb[0].mxu0
      %920 = vmatprep.mubr.f32.mxu0 0.0
      %921 = vmatmul.mubr.f32.gmra.mrb[0].mxu0 %v371
      %v922 = vpop.f32.mrb[0].mxu0
      %v923 = vadd.f32 0.0, %v922
      %v924 = vpop.f32.mrb[0].mxu0
      %925 = vmatprep.mubr.f32.mxu0 0.0
      %926 = vmatmul.mubr.f32.gmra.mrb[0].mxu0 %v374
      %v927 = vpop.f32.mrb[0].mxu0
      %v928 = vadd.f32 0.0, %v927
      %v929 = vpop.f32.mrb[0].mxu0
      %930 = vmatprep.mubr.f32.mxu0 0.0
      %931 = vmatmul.mubr.f32.gmra.mrb[0].mxu0 %v377
      %v932 = vpop.f32.mrb[0].mxu0
      %v933 = vadd.f32 0.0, %v932
      %v934 = vpop.f32.mrb[0].mxu0
      %935 = vmatprep.mubr.f32.mxu0 0.0
      %936 = vmatmul.mubr.f32.gmra.mrb[0].mxu0 %v380
      %v937 = vpop.f32.mrb[0].mxu0
      %v938 = vadd.f32 0.0, %v937
      %v939 = vpop.f32.mrb[0].mxu0
      %940 = vmatprep.mubr.f32.mxu0 0.0
      %941 = vmatmul.mubr.f32.gmra.mrb[0].mxu0 %v383
      %v942 = vpop.f32.mrb[0].mxu0
      %v943 = vadd.f32 0.0, %v942
      %v944 = vpop.f32.mrb[0].mxu0
      %945 = vmatprep.mubr.f32.mxu0 0.0
      %946 = vmatmul.mubr.f32.gmra.mrb[0].mxu0 %v386
      %v947 = vpop.f32.mrb[0].mxu0
      %v948 = vadd.f32 0.0, %v947
      %v949 = vpop.f32.mrb[0].mxu0
      %950 = vmatprep.mubr.f32.mxu0 0.0
      %951 = vmatmul.mubr.f32.gmra.mrb[0].mxu0 %v389
      %v952 = vpop.f32.mrb[0].mxu0
      %v953 = vadd.f32 0.0, %v952
      %v954 = vpop.f32.mrb[0].mxu0
      %955 = vmatprep.mubr.f32.mxu0 0.0
      %956 = vmatmul.mubr.f32.gmra.mrb[0].mxu0 %v655
      %v957 = vpop.f32.mrb[0].mxu0
      %v958 = vadd.f32 0.0, %v957
      %v959 = vpop.f32.mrb[0].mxu0
      %960 = vmatprep.mubr.f32.mxu0 0.0
      %961 = vmatmul.mubr.f32.gmra.mrb[0].mxu0 %v658
      %v962 = vpop.f32.mrb[0].mxu0
      %v963 = vadd.f32 0.0, %v962
      %v964 = vpop.f32.mrb[0].mxu0
      %965 = vdwg.mxu0
      %v966 = vadd.f32 %v596, %v908
      %v967 = vadd.f32 %v601, %v913
      %v968 = vadd.f32 %v606, %v918
      %v969 = vadd.f32 %v611, %v923
      %v970 = vadd.f32 %v616, %v928
      %v971 = vadd.f32 %v621, %v933
      %v972 = vadd.f32 %v626, %v938
      %v973 = vadd.f32 %v631, %v943
      %v974 = vadd.f32 %v636, %v948
      %v975 = vadd.f32 %v641, %v953
      %v976 = vadd.f32 %v646, %v958
      %v977 = vadd.f32 %v651, %v963
      %v979 = vsel %vm354, %v348, 0
      %v982 = vsel %vm354, %v349, 0
      %984 = vmatprep.subr.mxu0 0.0
      %985 = vmatpush1.msra.mxu0 %v839
      %986 = vmatprep.subr.mxu0 0.0
      %987 = vmatpush1.msra.mxu0 0.0
      %988 = vmatprep.subr.mxu0 0.0
      %989 = vmatpush1.msra.mxu0 0.0
      %990 = vmatprep.subr.mxu0 0.0
      %991 = vmatpush1.msra.mxu0 0.0
      %992 = vmatprep.subr.mxu0 0.0
      %993 = vmatpush1.msra.mxu0 0.0
      %994 = vmatprep.subr.mxu0 0.0
      %995 = vmatpush1.msra.mxu0 0.0
      %996 = vmatprep.subr.mxu0 0.0
      %997 = vmatpush1.msra.mxu0 0.0
      %998 = vmatprep.subr.mxu0 0.0
      %999 = vmatpush1.msra.mxu0 0.0
      %1000 = vmatprep.subr.mxu0 0.0
      %1001 = vmatpush1.msra.mxu0 0.0
      %1002 = vmatprep.subr.mxu0 0.0
      %1003 = vmatpush1.msra.mxu0 0.0
      %1004 = vmatprep.subr.mxu0 0.0
      %1005 = vmatpush1.msra.mxu0 0.0
      %1006 = vmatprep.subr.mxu0 0.0
      %1007 = vmatpush1.msra.mxu0 0.0
      %1008 = vmatprep.subr.mxu0 0.0
      %1009 = vmatpush1.msra.mxu0 0.0
      %1010 = vmatprep.subr.mxu0 0.0
      %1011 = vmatpush1.msra.mxu0 0.0
      %1012 = vmatprep.subr.mxu0 0.0
      %1013 = vmatpush1.msra.mxu0 0.0
      %1014 = vmatprep.subr.mxu0 0.0
      %1015 = vmatpush1.msra.mxu0 0.0
      %1016 = vmatprep.subr.mxu0 0.0
      %1017 = vmatpush1.msra.mxu0 0.0
      %1018 = vmatprep.subr.mxu0 0.0
      %1019 = vmatpush1.msra.mxu0 0.0
      %1020 = vmatprep.subr.mxu0 0.0
      %1021 = vmatpush1.msra.mxu0 0.0
      %1022 = vmatprep.subr.mxu0 0.0
      %1023 = vmatpush1.msra.mxu0 0.0
      %1024 = vmatprep.subr.mxu0 0.0
      %1025 = vmatpush1.msra.mxu0 0.0
      %1026 = vmatprep.subr.mxu0 0.0
      %1027 = vmatpush1.msra.mxu0 0.0
      %1028 = vmatprep.subr.mxu0 0.0
      %1029 = vmatpush1.msra.mxu0 0.0
      %1030 = vmatprep.subr.mxu0 0.0
      %1031 = vmatpush1.msra.mxu0 0.0
      %1032 = vmatprep.subr.mxu0 0.0
      %1033 = vmatpush1.msra.mxu0 0.0
      %1034 = vmatprep.subr.mxu0 0.0
      %1035 = vmatpush1.msra.mxu0 0.0
      %1036 = vmatprep.subr.mxu0 0.0
      %1037 = vmatpush1.msra.mxu0 0.0
      %1038 = vmatprep.subr.mxu0 0.0
      %1039 = vmatpush1.msra.mxu0 0.0
      %1040 = vmatprep.subr.mxu0 0.0
      %1041 = vmatpush1.msra.mxu0 0.0
      %1042 = vmatprep.subr.mxu0 0.0
      %1043 = vmatpush1.msra.mxu0 0.0
      %1044 = vmatprep.subr.mxu0 0.0
      %1045 = vmatpush1.msra.mxu0 0.0
      %1046 = vmatprep.subr.mxu0 0.0
      %1047 = vmatpush1.msra.mxu0 0.0
      %1048 = vmatprep.mubr.f32.mxu0 0.0
      %1049 = vmatmul.mubr.f32.gmra.mrb[0].mxu0 %v661
      %v1050 = vpop.f32.mrb[0].mxu0
      %v1051 = vadd.f32 0.0, %v1050
      %v1052 = vpop.f32.mrb[0].mxu0
      %1053 = vmatprep.mubr.f32.mxu0 0.0
      %1054 = vmatmul.mubr.f32.gmra.mrb[0].mxu0 %v664
      %v1055 = vpop.f32.mrb[0].mxu0
      %v1056 = vadd.f32 0.0, %v1055
      %v1057 = vpop.f32.mrb[0].mxu0
      %1058 = vmatprep.mubr.f32.mxu0 0.0
      %1059 = vmatmul.mubr.f32.gmra.mrb[0].mxu0 %v979
      %v1060 = vpop.f32.mrb[0].mxu0
      %v1061 = vadd.f32 0.0, %v1060
      %v1062 = vpop.f32.mrb[0].mxu0
      %1063 = vmatprep.mubr.f32.mxu0 0.0
      %1064 = vmatmul.mubr.f32.gmra.mrb[0].mxu0 %v982
      %v1065 = vpop.f32.mrb[0].mxu0
      %v1066 = vadd.f32 0.0, %v1065
      %v1067 = vpop.f32.mrb[0].mxu0
      %1068 = vdwg.mxu0
      %v1069 = vadd.f32 %v818, %v1051
      %v1070 = vadd.f32 %v823, %v1056
      %v1071 = vadd.f32 %v828, %v1061
      %v1072 = vadd.f32 %v833, %v1066
      %v1073 = vrot.slane %v321, 1
      %v1074 = vrot.slane %v324, 1
      %v1075 = vrot.slane %v327, 1
      %v1076 = vrot.slane %v330, 1
      %v1077 = vrot.slane %v333, 1
      %v1078 = vrot.slane %v336, 1
      %v1079 = vrot.slane %v339, 1
      %v1080 = vrot.slane %v342, 1
      %v1081 = vrot.slane %v322, 1
      %v1082 = vrot.slane %v325, 1
      %v1083 = vrot.slane %v328, 1
      %v1084 = vrot.slane %v331, 1
      %v1085 = vrot.slane %v334, 1
      %v1086 = vrot.slane %v337, 1
      %v1087 = vrot.slane %v340, 1
      %v1088 = vrot.slane %v343, 1
      %v1089 = vrot.slane %v323, 1
      %v1090 = vrot.slane %v326, 1
      %v1091 = vrot.slane %v329, 1
      %v1092 = vrot.slane %v332, 1
      %v1093 = vrot.slane %v335, 1
      %v1094 = vrot.slane %v338, 1
      %v1095 = vrot.slane %v341, 1
      %v1096 = vrot.slane %v344, 1
      %v1097 = vlaneseq
      %v1098 = vshrl.u32 %v1097, 7
      %vm1099 = vcmp.lt.s32.totalorder %v1098, 7
      %v1100 = vsel %vm1099, %v1081, %v1089
      %v1101 = vsel %vm1099, %v1082, %v1090
      %v1102 = vsel %vm1099, %v1083, %v1091
      %v1103 = vsel %vm1099, %v1084, %v1092
      %v1104 = vsel %vm1099, %v1085, %v1093
      %v1105 = vsel %vm1099, %v1086, %v1094
      %v1106 = vsel %vm1099, %v1087, %v1095
      %v1107 = vsel %vm1099, %v1088, %v1096
      %v1108 = vsel %vm1099, %v1073, %v1081
      %v1109 = vsel %vm1099, %v1074, %v1082
      %v1110 = vsel %vm1099, %v1075, %v1083
      %v1111 = vsel %vm1099, %v1076, %v1084
      %v1112 = vsel %vm1099, %v1077, %v1085
      %v1113 = vsel %vm1099, %v1078, %v1086
      %v1114 = vsel %vm1099, %v1079, %v1087
      %v1115 = vsel %vm1099, %v1080, %v1088
      %v1116 = vrot.slane %v345, 1
      %v1117 = vrot.slane %v348, 1
      %v1118 = vrot.slane %v346, 1
      %v1119 = vrot.slane %v349, 1
      %v1120 = vrot.slane %v347, 1
      %v1121 = vrot.slane %v350, 1
      %v1122 = vsel %vm1099, %v1118, %v1120
      %v1123 = vsel %vm1099, %v1119, %v1121
      %v1124 = vsel %vm1099, %v1116, %v1118
      %v1125 = vsel %vm1099, %v1117, %v1119
      %s1126 = scalar_lea.vmem %s2, 4
      %v1127 = vld [vmem:[%s1126] sm:$0xf]
      %v1129 = vsel %vm354, %v1108, 0
      %v1132 = vsel %vm354, %v1100, 0
      %v1135 = vsel %vm354, %v1109, 0
      %v1138 = vsel %vm354, %v1101, 0
      %v1141 = vsel %vm354, %v1110, 0
      %v1144 = vsel %vm354, %v1102, 0
      %v1147 = vsel %vm354, %v1111, 0
      %v1150 = vsel %vm354, %v1103, 0
      %v1153 = vsel %vm354, %v1112, 0
      %v1156 = vsel %vm354, %v1104, 0
      %v1159 = vsel %vm354, %v1113, 0
      %v1162 = vsel %vm354, %v1105, 0
      %v1165 = vsel %vm391, %v1127, 0
      %1167 = vmatprep.subr.mxu0 0.0
      %1168 = vmatpush1.msra.mxu0 %v1165
      %1169 = vmatprep.subr.mxu0 0.0
      %1170 = vmatpush1.msra.mxu0 0.0
      %1171 = vmatprep.subr.mxu0 0.0
      %1172 = vmatpush1.msra.mxu0 0.0
      %1173 = vmatprep.subr.mxu0 0.0
      %1174 = vmatpush1.msra.mxu0 0.0
      %1175 = vmatprep.subr.mxu0 0.0
      %1176 = vmatpush1.msra.mxu0 0.0
      %1177 = vmatprep.subr.mxu0 0.0
      %1178 = vmatpush1.msra.mxu0 0.0
      %1179 = vmatprep.subr.mxu0 0.0
      %1180 = vmatpush1.msra.mxu0 0.0
      %1181 = vmatprep.subr.mxu0 0.0
      %1182 = vmatpush1.msra.mxu0 0.0
      %1183 = vmatprep.subr.mxu0 0.0
      %1184 = vmatpush1.msra.mxu0 0.0
      %1185 = vmatprep.subr.mxu0 0.0
      %1186 = vmatpush1.msra.mxu0 0.0
      %1187 = vmatprep.subr.mxu0 0.0
      %1188 = vmatpush1.msra.mxu0 0.0
      %1189 = vmatprep.subr.mxu0 0.0
      %1190 = vmatpush1.msra.mxu0 0.0
      %1191 = vmatprep.subr.mxu0 0.0
      %1192 = vmatpush1.msra.mxu0 0.0
      %1193 = vmatprep.subr.mxu0 0.0
      %1194 = vmatpush1.msra.mxu0 0.0
      %1195 = vmatprep.subr.mxu0 0.0
      %1196 = vmatpush1.msra.mxu0 0.0
      %1197 = vmatprep.subr.mxu0 0.0
      %1198 = vmatpush1.msra.mxu0 0.0
      %1199 = vmatprep.subr.mxu0 0.0
      %1200 = vmatpush1.msra.mxu0 0.0
      %1201 = vmatprep.subr.mxu0 0.0
      %1202 = vmatpush1.msra.mxu0 0.0
      %1203 = vmatprep.subr.mxu0 0.0
      %1204 = vmatpush1.msra.mxu0 0.0
      %1205 = vmatprep.subr.mxu0 0.0
      %1206 = vmatpush1.msra.mxu0 0.0
      %1207 = vmatprep.subr.mxu0 0.0
      %1208 = vmatpush1.msra.mxu0 0.0
      %1209 = vmatprep.subr.mxu0 0.0
      %1210 = vmatpush1.msra.mxu0 0.0
      %1211 = vmatprep.subr.mxu0 0.0
      %1212 = vmatpush1.msra.mxu0 0.0
      %1213 = vmatprep.subr.mxu0 0.0
      %1214 = vmatpush1.msra.mxu0 0.0
      %1215 = vmatprep.subr.mxu0 0.0
      %1216 = vmatpush1.msra.mxu0 0.0
      %1217 = vmatprep.subr.mxu0 0.0
      %1218 = vmatpush1.msra.mxu0 0.0
      %1219 = vmatprep.subr.mxu0 0.0
      %1220 = vmatpush1.msra.mxu0 0.0
      %1221 = vmatprep.subr.mxu0 0.0
      %1222 = vmatpush1.msra.mxu0 0.0
      %1223 = vmatprep.subr.mxu0 0.0
      %1224 = vmatpush1.msra.mxu0 0.0
      %1225 = vmatprep.subr.mxu0 0.0
      %1226 = vmatpush1.msra.mxu0 0.0
      %1227 = vmatprep.subr.mxu0 0.0
      %1228 = vmatpush1.msra.mxu0 0.0
      %1229 = vmatprep.subr.mxu0 0.0
      %1230 = vmatpush1.msra.mxu0 0.0
      %1231 = vmatprep.mubr.f32.mxu0 0.0
      %1232 = vmatmul.mubr.f32.gmra.mrb[0].mxu0 %v1129
      %v1233 = vpop.f32.mrb[0].mxu0
      %v1234 = vadd.f32 0.0, %v1233
      %v1235 = vpop.f32.mrb[0].mxu0
      %1236 = vmatprep.mubr.f32.mxu0 0.0
      %1237 = vmatmul.mubr.f32.gmra.mrb[0].mxu0 %v1132
      %v1238 = vpop.f32.mrb[0].mxu0
      %v1239 = vadd.f32 0.0, %v1238
      %v1240 = vpop.f32.mrb[0].mxu0
      %1241 = vmatprep.mubr.f32.mxu0 0.0
      %1242 = vmatmul.mubr.f32.gmra.mrb[0].mxu0 %v1135
      %v1243 = vpop.f32.mrb[0].mxu0
      %v1244 = vadd.f32 0.0, %v1243
      %v1245 = vpop.f32.mrb[0].mxu0
      %1246 = vmatprep.mubr.f32.mxu0 0.0
      %1247 = vmatmul.mubr.f32.gmra.mrb[0].mxu0 %v1138
      %v1248 = vpop.f32.mrb[0].mxu0
      %v1249 = vadd.f32 0.0, %v1248
      %v1250 = vpop.f32.mrb[0].mxu0
      %1251 = vmatprep.mubr.f32.mxu0 0.0
      %1252 = vmatmul.mubr.f32.gmra.mrb[0].mxu0 %v1141
      %v1253 = vpop.f32.mrb[0].mxu0
      %v1254 = vadd.f32 0.0, %v1253
      %v1255 = vpop.f32.mrb[0].mxu0
      %1256 = vmatprep.mubr.f32.mxu0 0.0
      %1257 = vmatmul.mubr.f32.gmra.mrb[0].mxu0 %v1144
      %v1258 = vpop.f32.mrb[0].mxu0
      %v1259 = vadd.f32 0.0, %v1258
      %v1260 = vpop.f32.mrb[0].mxu0
      %1261 = vmatprep.mubr.f32.mxu0 0.0
      %1262 = vmatmul.mubr.f32.gmra.mrb[0].mxu0 %v1147
      %v1263 = vpop.f32.mrb[0].mxu0
      %v1264 = vadd.f32 0.0, %v1263
      %v1265 = vpop.f32.mrb[0].mxu0
      %1266 = vmatprep.mubr.f32.mxu0 0.0
      %1267 = vmatmul.mubr.f32.gmra.mrb[0].mxu0 %v1150
      %v1268 = vpop.f32.mrb[0].mxu0
      %v1269 = vadd.f32 0.0, %v1268
      %v1270 = vpop.f32.mrb[0].mxu0
      %1271 = vmatprep.mubr.f32.mxu0 0.0
      %1272 = vmatmul.mubr.f32.gmra.mrb[0].mxu0 %v1153
      %v1273 = vpop.f32.mrb[0].mxu0
      %v1274 = vadd.f32 0.0, %v1273
      %v1275 = vpop.f32.mrb[0].mxu0
      %1276 = vmatprep.mubr.f32.mxu0 0.0
      %1277 = vmatmul.mubr.f32.gmra.mrb[0].mxu0 %v1156
      %v1278 = vpop.f32.mrb[0].mxu0
      %v1279 = vadd.f32 0.0, %v1278
      %v1280 = vpop.f32.mrb[0].mxu0
      %1281 = vmatprep.mubr.f32.mxu0 0.0
      %1282 = vmatmul.mubr.f32.gmra.mrb[0].mxu0 %v1159
      %v1283 = vpop.f32.mrb[0].mxu0
      %v1284 = vadd.f32 0.0, %v1283
      %v1285 = vpop.f32.mrb[0].mxu0
      %1286 = vmatprep.mubr.f32.mxu0 0.0
      %1287 = vmatmul.mubr.f32.gmra.mrb[0].mxu0 %v1162
      %v1288 = vpop.f32.mrb[0].mxu0
      %v1289 = vadd.f32 0.0, %v1288
      %v1290 = vpop.f32.mrb[0].mxu0
      %1291 = vdwg.mxu0
      %v1292 = vadd.f32 %v966, %v1234
      %v1293 = vadd.f32 %v967, %v1239
      %v1294 = vadd.f32 %v968, %v1244
      %v1295 = vadd.f32 %v969, %v1249
      %v1296 = vadd.f32 %v970, %v1254
      %v1297 = vadd.f32 %v971, %v1259
      %v1298 = vadd.f32 %v972, %v1264
      %v1299 = vadd.f32 %v973, %v1269
      %v1300 = vadd.f32 %v974, %v1274
      %v1301 = vadd.f32 %v975, %v1279
      %v1302 = vadd.f32 %v976, %v1284
      %v1303 = vadd.f32 %v977, %v1289
      %v1305 = vsel %vm354, %v1114, 0
      %v1308 = vsel %vm354, %v1106, 0
      %v1311 = vsel %vm354, %v1115, 0
      %v1314 = vsel %vm354, %v1107, 0
      %1316 = vmatprep.subr.mxu0 0.0
      %1317 = vmatpush1.msra.mxu0 %v1165
      %1318 = vmatprep.subr.mxu0 0.0
      %1319 = vmatpush1.msra.mxu0 0.0
      %1320 = vmatprep.subr.mxu0 0.0
      %1321 = vmatpush1.msra.mxu0 0.0
      %1322 = vmatprep.subr.mxu0 0.0
      %1323 = vmatpush1.msra.mxu0 0.0
      %1324 = vmatprep.subr.mxu0 0.0
      %1325 = vmatpush1.msra.mxu0 0.0
      %1326 = vmatprep.subr.mxu0 0.0
      %1327 = vmatpush1.msra.mxu0 0.0
      %1328 = vmatprep.subr.mxu0 0.0
      %1329 = vmatpush1.msra.mxu0 0.0
      %1330 = vmatprep.subr.mxu0 0.0
      %1331 = vmatpush1.msra.mxu0 0.0
      %1332 = vmatprep.subr.mxu0 0.0
      %1333 = vmatpush1.msra.mxu0 0.0
      %1334 = vmatprep.subr.mxu0 0.0
      %1335 = vmatpush1.msra.mxu0 0.0
      %1336 = vmatprep.subr.mxu0 0.0
      %1337 = vmatpush1.msra.mxu0 0.0
      %1338 = vmatprep.subr.mxu0 0.0
      %1339 = vmatpush1.msra.mxu0 0.0
      %1340 = vmatprep.subr.mxu0 0.0
      %1341 = vmatpush1.msra.mxu0 0.0
      %1342 = vmatprep.subr.mxu0 0.0
      %1343 = vmatpush1.msra.mxu0 0.0
      %1344 = vmatprep.subr.mxu0 0.0
      %1345 = vmatpush1.msra.mxu0 0.0
      %1346 = vmatprep.subr.mxu0 0.0
      %1347 = vmatpush1.msra.mxu0 0.0
      %1348 = vmatprep.subr.mxu0 0.0
      %1349 = vmatpush1.msra.mxu0 0.0
      %1350 = vmatprep.subr.mxu0 0.0
      %1351 = vmatpush1.msra.mxu0 0.0
      %1352 = vmatprep.subr.mxu0 0.0
      %1353 = vmatpush1.msra.mxu0 0.0
      %1354 = vmatprep.subr.mxu0 0.0
      %1355 = vmatpush1.msra.mxu0 0.0
      %1356 = vmatprep.subr.mxu0 0.0
      %1357 = vmatpush1.msra.mxu0 0.0
      %1358 = vmatprep.subr.mxu0 0.0
      %1359 = vmatpush1.msra.mxu0 0.0
      %1360 = vmatprep.subr.mxu0 0.0
      %1361 = vmatpush1.msra.mxu0 0.0
      %1362 = vmatprep.subr.mxu0 0.0
      %1363 = vmatpush1.msra.mxu0 0.0
      %1364 = vmatprep.subr.mxu0 0.0
      %1365 = vmatpush1.msra.mxu0 0.0
      %1366 = vmatprep.subr.mxu0 0.0
      %1367 = vmatpush1.msra.mxu0 0.0
      %1368 = vmatprep.subr.mxu0 0.0
      %1369 = vmatpush1.msra.mxu0 0.0
      %1370 = vmatprep.subr.mxu0 0.0
      %1371 = vmatpush1.msra.mxu0 0.0
      %1372 = vmatprep.subr.mxu0 0.0
      %1373 = vmatpush1.msra.mxu0 0.0
      %1374 = vmatprep.subr.mxu0 0.0
      %1375 = vmatpush1.msra.mxu0 0.0
      %1376 = vmatprep.subr.mxu0 0.0
      %1377 = vmatpush1.msra.mxu0 0.0
      %1378 = vmatprep.subr.mxu0 0.0
      %1379 = vmatpush1.msra.mxu0 0.0
      %1380 = vmatprep.mubr.f32.mxu0 0.0
      %1381 = vmatmul.mubr.f32.gmra.mrb[0].mxu0 %v1305
      %v1382 = vpop.f32.mrb[0].mxu0
      %v1383 = vadd.f32 0.0, %v1382
      %v1384 = vpop.f32.mrb[0].mxu0
      %1385 = vmatprep.mubr.f32.mxu0 0.0
      %1386 = vmatmul.mubr.f32.gmra.mrb[0].mxu0 %v1308
      %v1387 = vpop.f32.mrb[0].mxu0
      %v1388 = vadd.f32 0.0, %v1387
      %v1389 = vpop.f32.mrb[0].mxu0
      %1390 = vmatprep.mubr.f32.mxu0 0.0
      %1391 = vmatmul.mubr.f32.gmra.mrb[0].mxu0 %v1311
      %v1392 = vpop.f32.mrb[0].mxu0
      %v1393 = vadd.f32 0.0, %v1392
      %v1394 = vpop.f32.mrb[0].mxu0
      %1395 = vmatprep.mubr.f32.mxu0 0.0
      %1396 = vmatmul.mubr.f32.gmra.mrb[0].mxu0 %v1314
      %v1397 = vpop.f32.mrb[0].mxu0
      %v1398 = vadd.f32 0.0, %v1397
      %v1399 = vpop.f32.mrb[0].mxu0
      %1400 = vdwg.mxu0
      %v1401 = vadd.f32 %v1069, %v1383
      %v1402 = vadd.f32 %v1070, %v1388
      %v1403 = vadd.f32 %v1071, %v1393
      %v1404 = vadd.f32 %v1072, %v1398
      %s1405 = scalar_lea.vmem %s2, 16
      %v1406 = vld [vmem:[%s1405] sm:$0xf]
      %v1408 = vsel %vm391, %v1406, 0
      %1410 = vmatprep.subr.mxu0 0.0
      %1411 = vmatpush1.msra.mxu0 %v1408
      %1412 = vmatprep.subr.mxu0 0.0
      %1413 = vmatpush1.msra.mxu0 0.0
      %1414 = vmatprep.subr.mxu0 0.0
      %1415 = vmatpush1.msra.mxu0 0.0
      %1416 = vmatprep.subr.mxu0 0.0
      %1417 = vmatpush1.msra.mxu0 0.0
      %1418 = vmatprep.subr.mxu0 0.0
      %1419 = vmatpush1.msra.mxu0 0.0
      %1420 = vmatprep.subr.mxu0 0.0
      %1421 = vmatpush1.msra.mxu0 0.0
      %1422 = vmatprep.subr.mxu0 0.0
      %1423 = vmatpush1.msra.mxu0 0.0
      %1424 = vmatprep.subr.mxu0 0.0
      %1425 = vmatpush1.msra.mxu0 0.0
      %1426 = vmatprep.subr.mxu0 0.0
      %1427 = vmatpush1.msra.mxu0 0.0
      %1428 = vmatprep.subr.mxu0 0.0
      %1429 = vmatpush1.msra.mxu0 0.0
      %1430 = vmatprep.subr.mxu0 0.0
      %1431 = vmatpush1.msra.mxu0 0.0
      %1432 = vmatprep.subr.mxu0 0.0
      %1433 = vmatpush1.msra.mxu0 0.0
      %1434 = vmatprep.subr.mxu0 0.0
      %1435 = vmatpush1.msra.mxu0 0.0
      %1436 = vmatprep.subr.mxu0 0.0
      %1437 = vmatpush1.msra.mxu0 0.0
      %1438 = vmatprep.subr.mxu0 0.0
      %1439 = vmatpush1.msra.mxu0 0.0
      %1440 = vmatprep.subr.mxu0 0.0
      %1441 = vmatpush1.msra.mxu0 0.0
      %1442 = vmatprep.subr.mxu0 0.0
      %1443 = vmatpush1.msra.mxu0 0.0
      %1444 = vmatprep.subr.mxu0 0.0
      %1445 = vmatpush1.msra.mxu0 0.0
      %1446 = vmatprep.subr.mxu0 0.0
      %1447 = vmatpush1.msra.mxu0 0.0
      %1448 = vmatprep.subr.mxu0 0.0
      %1449 = vmatpush1.msra.mxu0 0.0
      %1450 = vmatprep.subr.mxu0 0.0
      %1451 = vmatpush1.msra.mxu0 0.0
      %1452 = vmatprep.subr.mxu0 0.0
      %1453 = vmatpush1.msra.mxu0 0.0
      %1454 = vmatprep.subr.mxu0 0.0
      %1455 = vmatpush1.msra.mxu0 0.0
      %1456 = vmatprep.subr.mxu0 0.0
      %1457 = vmatpush1.msra.mxu0 0.0
      %1458 = vmatprep.subr.mxu0 0.0
      %1459 = vmatpush1.msra.mxu0 0.0
      %1460 = vmatprep.subr.mxu0 0.0
      %1461 = vmatpush1.msra.mxu0 0.0
      %1462 = vmatprep.subr.mxu0 0.0
      %1463 = vmatpush1.msra.mxu0 0.0
      %1464 = vmatprep.subr.mxu0 0.0
      %1465 = vmatpush1.msra.mxu0 0.0
      %1466 = vmatprep.subr.mxu0 0.0
      %1467 = vmatpush1.msra.mxu0 0.0
      %1468 = vmatprep.subr.mxu0 0.0
      %1469 = vmatpush1.msra.mxu0 0.0
      %1470 = vmatprep.subr.mxu0 0.0
      %1471 = vmatpush1.msra.mxu0 0.0
      %1472 = vmatprep.subr.mxu0 0.0
      %1473 = vmatpush1.msra.mxu0 0.0
      %1474 = vmatprep.mubr.f32.mxu0 0.0
      %1475 = vmatmul.mubr.f32.gmra.mrb[0].mxu0 %v1135
      %v1476 = vpop.f32.mrb[0].mxu0
      %v1477 = vadd.f32 0.0, %v1476
      %v1478 = vpop.f32.mrb[0].mxu0
      %1479 = vmatprep.mubr.f32.mxu0 0.0
      %1480 = vmatmul.mubr.f32.gmra.mrb[0].mxu0 %v1138
      %v1481 = vpop.f32.mrb[0].mxu0
      %v1482 = vadd.f32 0.0, %v1481
      %v1483 = vpop.f32.mrb[0].mxu0
      %1484 = vmatprep.mubr.f32.mxu0 0.0
      %1485 = vmatmul.mubr.f32.gmra.mrb[0].mxu0 %v1141
      %v1486 = vpop.f32.mrb[0].mxu0
      %v1487 = vadd.f32 0.0, %v1486
      %v1488 = vpop.f32.mrb[0].mxu0
      %1489 = vmatprep.mubr.f32.mxu0 0.0
      %1490 = vmatmul.mubr.f32.gmra.mrb[0].mxu0 %v1144
      %v1491 = vpop.f32.mrb[0].mxu0
      %v1492 = vadd.f32 0.0, %v1491
      %v1493 = vpop.f32.mrb[0].mxu0
      %1494 = vmatprep.mubr.f32.mxu0 0.0
      %1495 = vmatmul.mubr.f32.gmra.mrb[0].mxu0 %v1147
      %v1496 = vpop.f32.mrb[0].mxu0
      %v1497 = vadd.f32 0.0, %v1496
      %v1498 = vpop.f32.mrb[0].mxu0
      %1499 = vmatprep.mubr.f32.mxu0 0.0
      %1500 = vmatmul.mubr.f32.gmra.mrb[0].mxu0 %v1150
      %v1501 = vpop.f32.mrb[0].mxu0
      %v1502 = vadd.f32 0.0, %v1501
      %v1503 = vpop.f32.mrb[0].mxu0
      %1504 = vmatprep.mubr.f32.mxu0 0.0
      %1505 = vmatmul.mubr.f32.gmra.mrb[0].mxu0 %v1153
      %v1506 = vpop.f32.mrb[0].mxu0
      %v1507 = vadd.f32 0.0, %v1506
      %v1508 = vpop.f32.mrb[0].mxu0
      %1509 = vmatprep.mubr.f32.mxu0 0.0
      %1510 = vmatmul.mubr.f32.gmra.mrb[0].mxu0 %v1156
      %v1511 = vpop.f32.mrb[0].mxu0
      %v1512 = vadd.f32 0.0, %v1511
      %v1513 = vpop.f32.mrb[0].mxu0
      %1514 = vmatprep.mubr.f32.mxu0 0.0
      %1515 = vmatmul.mubr.f32.gmra.mrb[0].mxu0 %v1159
      %v1516 = vpop.f32.mrb[0].mxu0
      %v1517 = vadd.f32 0.0, %v1516
      %v1518 = vpop.f32.mrb[0].mxu0
      %1519 = vmatprep.mubr.f32.mxu0 0.0
      %1520 = vmatmul.mubr.f32.gmra.mrb[0].mxu0 %v1162
      %v1521 = vpop.f32.mrb[0].mxu0
      %v1522 = vadd.f32 0.0, %v1521
      %v1523 = vpop.f32.mrb[0].mxu0
      %1524 = vmatprep.mubr.f32.mxu0 0.0
      %1525 = vmatmul.mubr.f32.gmra.mrb[0].mxu0 %v1305
      %v1526 = vpop.f32.mrb[0].mxu0
      %v1527 = vadd.f32 0.0, %v1526
      %v1528 = vpop.f32.mrb[0].mxu0
      %1529 = vmatprep.mubr.f32.mxu0 0.0
      %1530 = vmatmul.mubr.f32.gmra.mrb[0].mxu0 %v1308
      %v1531 = vpop.f32.mrb[0].mxu0
      %v1532 = vadd.f32 0.0, %v1531
      %v1533 = vpop.f32.mrb[0].mxu0
      %1534 = vdwg.mxu0
      %v1535 = vadd.f32 %v1292, %v1477
      %v1536 = vadd.f32 %v1293, %v1482
      %v1537 = vadd.f32 %v1294, %v1487
      %v1538 = vadd.f32 %v1295, %v1492
      %v1539 = vadd.f32 %v1296, %v1497
      %v1540 = vadd.f32 %v1297, %v1502
      %v1541 = vadd.f32 %v1298, %v1507
      %v1542 = vadd.f32 %v1299, %v1512
      %v1543 = vadd.f32 %v1300, %v1517
      %v1544 = vadd.f32 %v1301, %v1522
      %v1545 = vadd.f32 %v1302, %v1527
      %v1546 = vadd.f32 %v1303, %v1532
      %v1548 = vsel %vm354, %v1124, 0
      %v1551 = vsel %vm354, %v1122, 0
      %1553 = vmatprep.subr.mxu0 0.0
      %1554 = vmatpush1.msra.mxu0 %v1408
      %1555 = vmatprep.subr.mxu0 0.0
      %1556 = vmatpush1.msra.mxu0 0.0
      %1557 = vmatprep.subr.mxu0 0.0
      %1558 = vmatpush1.msra.mxu0 0.0
      %1559 = vmatprep.subr.mxu0 0.0
      %1560 = vmatpush1.msra.mxu0 0.0
      %1561 = vmatprep.subr.mxu0 0.0
      %1562 = vmatpush1.msra.mxu0 0.0
      %1563 = vmatprep.subr.mxu0 0.0
      %1564 = vmatpush1.msra.mxu0 0.0
      %1565 = vmatprep.subr.mxu0 0.0
      %1566 = vmatpush1.msra.mxu0 0.0
      %1567 = vmatprep.subr.mxu0 0.0
      %1568 = vmatpush1.msra.mxu0 0.0
      %1569 = vmatprep.subr.mxu0 0.0
      %1570 = vmatpush1.msra.mxu0 0.0
      %1571 = vmatprep.subr.mxu0 0.0
      %1572 = vmatpush1.msra.mxu0 0.0
      %1573 = vmatprep.subr.mxu0 0.0
      %1574 = vmatpush1.msra.mxu0 0.0
      %1575 = vmatprep.subr.mxu0 0.0
      %1576 = vmatpush1.msra.mxu0 0.0
      %1577 = vmatprep.subr.mxu0 0.0
      %1578 = vmatpush1.msra.mxu0 0.0
      %1579 = vmatprep.subr.mxu0 0.0
      %1580 = vmatpush1.msra.mxu0 0.0
      %1581 = vmatprep.subr.mxu0 0.0
      %1582 = vmatpush1.msra.mxu0 0.0
      %1583 = vmatprep.subr.mxu0 0.0
      %1584 = vmatpush1.msra.mxu0 0.0
      %1585 = vmatprep.subr.mxu0 0.0
      %1586 = vmatpush1.msra.mxu0 0.0
      %1587 = vmatprep.subr.mxu0 0.0
      %1588 = vmatpush1.msra.mxu0 0.0
      %1589 = vmatprep.subr.mxu0 0.0
      %1590 = vmatpush1.msra.mxu0 0.0
      %1591 = vmatprep.subr.mxu0 0.0
      %1592 = vmatpush1.msra.mxu0 0.0
      %1593 = vmatprep.subr.mxu0 0.0
      %1594 = vmatpush1.msra.mxu0 0.0
      %1595 = vmatprep.subr.mxu0 0.0
      %1596 = vmatpush1.msra.mxu0 0.0
      %1597 = vmatprep.subr.mxu0 0.0
      %1598 = vmatpush1.msra.mxu0 0.0
      %1599 = vmatprep.subr.mxu0 0.0
      %1600 = vmatpush1.msra.mxu0 0.0
      %1601 = vmatprep.subr.mxu0 0.0
      %1602 = vmatpush1.msra.mxu0 0.0
      %1603 = vmatprep.subr.mxu0 0.0
      %1604 = vmatpush1.msra.mxu0 0.0
      %1605 = vmatprep.subr.mxu0 0.0
      %1606 = vmatpush1.msra.mxu0 0.0
      %1607 = vmatprep.subr.mxu0 0.0
      %1608 = vmatpush1.msra.mxu0 0.0
      %1609 = vmatprep.subr.mxu0 0.0
      %1610 = vmatpush1.msra.mxu0 0.0
      %1611 = vmatprep.subr.mxu0 0.0
      %1612 = vmatpush1.msra.mxu0 0.0
      %1613 = vmatprep.subr.mxu0 0.0
      %1614 = vmatpush1.msra.mxu0 0.0
      %1615 = vmatprep.subr.mxu0 0.0
      %1616 = vmatpush1.msra.mxu0 0.0
      %1617 = vmatprep.mubr.f32.mxu0 0.0
      %1618 = vmatmul.mubr.f32.gmra.mrb[0].mxu0 %v1311
      %v1619 = vpop.f32.mrb[0].mxu0
      %v1620 = vadd.f32 0.0, %v1619
      %v1621 = vpop.f32.mrb[0].mxu0
      %1622 = vmatprep.mubr.f32.mxu0 0.0
      %1623 = vmatmul.mubr.f32.gmra.mrb[0].mxu0 %v1314
      %v1624 = vpop.f32.mrb[0].mxu0
      %v1625 = vadd.f32 0.0, %v1624
      %v1626 = vpop.f32.mrb[0].mxu0
      %1627 = vmatprep.mubr.f32.mxu0 0.0
      %1628 = vmatmul.mubr.f32.gmra.mrb[0].mxu0 %v1548
      %v1629 = vpop.f32.mrb[0].mxu0
      %v1630 = vadd.f32 0.0, %v1629
      %v1631 = vpop.f32.mrb[0].mxu0
      %1632 = vmatprep.mubr.f32.mxu0 0.0
      %1633 = vmatmul.mubr.f32.gmra.mrb[0].mxu0 %v1551
      %v1634 = vpop.f32.mrb[0].mxu0
      %v1635 = vadd.f32 0.0, %v1634
      %v1636 = vpop.f32.mrb[0].mxu0
      %1637 = vdwg.mxu0
      %v1638 = vadd.f32 %v1401, %v1620
      %v1639 = vadd.f32 %v1402, %v1625
      %v1640 = vadd.f32 %v1403, %v1630
      %v1641 = vadd.f32 %v1404, %v1635
      %s1642 = scalar_lea.vmem %s2, 28
      %v1643 = vld [vmem:[%s1642] sm:$0xf]
      %v1645 = vsel %vm391, %v1643, 0
      %1647 = vmatprep.subr.mxu0 0.0
      %1648 = vmatpush1.msra.mxu0 %v1645
      %1649 = vmatprep.subr.mxu0 0.0
      %1650 = vmatpush1.msra.mxu0 0.0
      %1651 = vmatprep.subr.mxu0 0.0
      %1652 = vmatpush1.msra.mxu0 0.0
      %1653 = vmatprep.subr.mxu0 0.0
      %1654 = vmatpush1.msra.mxu0 0.0
      %1655 = vmatprep.subr.mxu0 0.0
      %1656 = vmatpush1.msra.mxu0 0.0
      %1657 = vmatprep.subr.mxu0 0.0
      %1658 = vmatpush1.msra.mxu0 0.0
      %1659 = vmatprep.subr.mxu0 0.0
      %1660 = vmatpush1.msra.mxu0 0.0
      %1661 = vmatprep.subr.mxu0 0.0
      %1662 = vmatpush1.msra.mxu0 0.0
      %1663 = vmatprep.subr.mxu0 0.0
      %1664 = vmatpush1.msra.mxu0 0.0
      %1665 = vmatprep.subr.mxu0 0.0
      %1666 = vmatpush1.msra.mxu0 0.0
      %1667 = vmatprep.subr.mxu0 0.0
      %1668 = vmatpush1.msra.mxu0 0.0
      %1669 = vmatprep.subr.mxu0 0.0
      %1670 = vmatpush1.msra.mxu0 0.0
      %1671 = vmatprep.subr.mxu0 0.0
      %1672 = vmatpush1.msra.mxu0 0.0
      %1673 = vmatprep.subr.mxu0 0.0
      %1674 = vmatpush1.msra.mxu0 0.0
      %1675 = vmatprep.subr.mxu0 0.0
      %1676 = vmatpush1.msra.mxu0 0.0
      %1677 = vmatprep.subr.mxu0 0.0
      %1678 = vmatpush1.msra.mxu0 0.0
      %1679 = vmatprep.subr.mxu0 0.0
      %1680 = vmatpush1.msra.mxu0 0.0
      %1681 = vmatprep.subr.mxu0 0.0
      %1682 = vmatpush1.msra.mxu0 0.0
      %1683 = vmatprep.subr.mxu0 0.0
      %1684 = vmatpush1.msra.mxu0 0.0
      %1685 = vmatprep.subr.mxu0 0.0
      %1686 = vmatpush1.msra.mxu0 0.0
      %1687 = vmatprep.subr.mxu0 0.0
      %1688 = vmatpush1.msra.mxu0 0.0
      %1689 = vmatprep.subr.mxu0 0.0
      %1690 = vmatpush1.msra.mxu0 0.0
      %1691 = vmatprep.subr.mxu0 0.0
      %1692 = vmatpush1.msra.mxu0 0.0
      %1693 = vmatprep.subr.mxu0 0.0
      %1694 = vmatpush1.msra.mxu0 0.0
      %1695 = vmatprep.subr.mxu0 0.0
      %1696 = vmatpush1.msra.mxu0 0.0
      %1697 = vmatprep.subr.mxu0 0.0
      %1698 = vmatpush1.msra.mxu0 0.0
      %1699 = vmatprep.subr.mxu0 0.0
      %1700 = vmatpush1.msra.mxu0 0.0
      %1701 = vmatprep.subr.mxu0 0.0
      %1702 = vmatpush1.msra.mxu0 0.0
      %1703 = vmatprep.subr.mxu0 0.0
      %1704 = vmatpush1.msra.mxu0 0.0
      %1705 = vmatprep.subr.mxu0 0.0
      %1706 = vmatpush1.msra.mxu0 0.0
      %1707 = vmatprep.subr.mxu0 0.0
      %1708 = vmatpush1.msra.mxu0 0.0
      %1709 = vmatprep.subr.mxu0 0.0
      %1710 = vmatpush1.msra.mxu0 0.0
      %1711 = vmatprep.mubr.f32.mxu0 0.0
      %1712 = vmatmul.mubr.f32.gmra.mrb[0].mxu0 %v1141
      %v1713 = vpop.f32.mrb[0].mxu0
      %v1714 = vadd.f32 0.0, %v1713
      %v1715 = vpop.f32.mrb[0].mxu0
      %1716 = vmatprep.mubr.f32.mxu0 0.0
      %1717 = vmatmul.mubr.f32.gmra.mrb[0].mxu0 %v1144
      %v1718 = vpop.f32.mrb[0].mxu0
      %v1719 = vadd.f32 0.0, %v1718
      %v1720 = vpop.f32.mrb[0].mxu0
      %1721 = vmatprep.mubr.f32.mxu0 0.0
      %1722 = vmatmul.mubr.f32.gmra.mrb[0].mxu0 %v1147
      %v1723 = vpop.f32.mrb[0].mxu0
      %v1724 = vadd.f32 0.0, %v1723
      %v1725 = vpop.f32.mrb[0].mxu0
      %1726 = vmatprep.mubr.f32.mxu0 0.0
      %1727 = vmatmul.mubr.f32.gmra.mrb[0].mxu0 %v1150
      %v1728 = vpop.f32.mrb[0].mxu0
      %v1729 = vadd.f32 0.0, %v1728
      %v1730 = vpop.f32.mrb[0].mxu0
      %1731 = vmatprep.mubr.f32.mxu0 0.0
      %1732 = vmatmul.mubr.f32.gmra.mrb[0].mxu0 %v1153
      %v1733 = vpop.f32.mrb[0].mxu0
      %v1734 = vadd.f32 0.0, %v1733
      %v1735 = vpop.f32.mrb[0].mxu0
      %1736 = vmatprep.mubr.f32.mxu0 0.0
      %1737 = vmatmul.mubr.f32.gmra.mrb[0].mxu0 %v1156
      %v1738 = vpop.f32.mrb[0].mxu0
      %v1739 = vadd.f32 0.0, %v1738
      %v1740 = vpop.f32.mrb[0].mxu0
      %1741 = vmatprep.mubr.f32.mxu0 0.0
      %1742 = vmatmul.mubr.f32.gmra.mrb[0].mxu0 %v1159
      %v1743 = vpop.f32.mrb[0].mxu0
      %v1744 = vadd.f32 0.0, %v1743
      %v1745 = vpop.f32.mrb[0].mxu0
      %1746 = vmatprep.mubr.f32.mxu0 0.0
      %1747 = vmatmul.mubr.f32.gmra.mrb[0].mxu0 %v1162
      %v1748 = vpop.f32.mrb[0].mxu0
      %v1749 = vadd.f32 0.0, %v1748
      %v1750 = vpop.f32.mrb[0].mxu0
      %1751 = vmatprep.mubr.f32.mxu0 0.0
      %1752 = vmatmul.mubr.f32.gmra.mrb[0].mxu0 %v1305
      %v1753 = vpop.f32.mrb[0].mxu0
      %v1754 = vadd.f32 0.0, %v1753
      %v1755 = vpop.f32.mrb[0].mxu0
      %1756 = vmatprep.mubr.f32.mxu0 0.0
      %1757 = vmatmul.mubr.f32.gmra.mrb[0].mxu0 %v1308
      %v1758 = vpop.f32.mrb[0].mxu0
      %v1759 = vadd.f32 0.0, %v1758
      %v1760 = vpop.f32.mrb[0].mxu0
      %1761 = vmatprep.mubr.f32.mxu0 0.0
      %1762 = vmatmul.mubr.f32.gmra.mrb[0].mxu0 %v1311
      %v1763 = vpop.f32.mrb[0].mxu0
      %v1764 = vadd.f32 0.0, %v1763
      %v1765 = vpop.f32.mrb[0].mxu0
      %1766 = vmatprep.mubr.f32.mxu0 0.0
      %1767 = vmatmul.mubr.f32.gmra.mrb[0].mxu0 %v1314
      %v1768 = vpop.f32.mrb[0].mxu0
      %v1769 = vadd.f32 0.0, %v1768
      %v1770 = vpop.f32.mrb[0].mxu0
      %1771 = vdwg.mxu0
      %v1772 = vadd.f32 %v1535, %v1714
      %v1773 = vadd.f32 %v1536, %v1719
      %v1774 = vadd.f32 %v1537, %v1724
      %v1775 = vadd.f32 %v1538, %v1729
      %v1776 = vadd.f32 %v1539, %v1734
      %v1777 = vadd.f32 %v1540, %v1739
      %v1778 = vadd.f32 %v1541, %v1744
      %v1779 = vadd.f32 %v1542, %v1749
      %v1780 = vadd.f32 %v1543, %v1754
      %v1781 = vadd.f32 %v1544, %v1759
      %v1782 = vadd.f32 %v1545, %v1764
      %v1783 = vadd.f32 %v1546, %v1769
      %v1785 = vsel %vm354, %v1125, 0
      %v1788 = vsel %vm354, %v1123, 0
      %1790 = vmatprep.subr.mxu0 0.0
      %1791 = vmatpush1.msra.mxu0 %v1645
      %1792 = vmatprep.subr.mxu0 0.0
      %1793 = vmatpush1.msra.mxu0 0.0
      %1794 = vmatprep.subr.mxu0 0.0
      %1795 = vmatpush1.msra.mxu0 0.0
      %1796 = vmatprep.subr.mxu0 0.0
      %1797 = vmatpush1.msra.mxu0 0.0
      %1798 = vmatprep.subr.mxu0 0.0
      %1799 = vmatpush1.msra.mxu0 0.0
      %1800 = vmatprep.subr.mxu0 0.0
      %1801 = vmatpush1.msra.mxu0 0.0
      %1802 = vmatprep.subr.mxu0 0.0
      %1803 = vmatpush1.msra.mxu0 0.0
      %1804 = vmatprep.subr.mxu0 0.0
      %1805 = vmatpush1.msra.mxu0 0.0
      %1806 = vmatprep.subr.mxu0 0.0
      %1807 = vmatpush1.msra.mxu0 0.0
      %1808 = vmatprep.subr.mxu0 0.0
      %1809 = vmatpush1.msra.mxu0 0.0
      %1810 = vmatprep.subr.mxu0 0.0
      %1811 = vmatpush1.msra.mxu0 0.0
      %1812 = vmatprep.subr.mxu0 0.0
      %1813 = vmatpush1.msra.mxu0 0.0
      %1814 = vmatprep.subr.mxu0 0.0
      %1815 = vmatpush1.msra.mxu0 0.0
      %1816 = vmatprep.subr.mxu0 0.0
      %1817 = vmatpush1.msra.mxu0 0.0
      %1818 = vmatprep.subr.mxu0 0.0
      %1819 = vmatpush1.msra.mxu0 0.0
      %1820 = vmatprep.subr.mxu0 0.0
      %1821 = vmatpush1.msra.mxu0 0.0
      %1822 = vmatprep.subr.mxu0 0.0
      %1823 = vmatpush1.msra.mxu0 0.0
      %1824 = vmatprep.subr.mxu0 0.0
      %1825 = vmatpush1.msra.mxu0 0.0
      %1826 = vmatprep.subr.mxu0 0.0
      %1827 = vmatpush1.msra.mxu0 0.0
      %1828 = vmatprep.subr.mxu0 0.0
      %1829 = vmatpush1.msra.mxu0 0.0
      %1830 = vmatprep.subr.mxu0 0.0
      %1831 = vmatpush1.msra.mxu0 0.0
      %1832 = vmatprep.subr.mxu0 0.0
      %1833 = vmatpush1.msra.mxu0 0.0
      %1834 = vmatprep.subr.mxu0 0.0
      %1835 = vmatpush1.msra.mxu0 0.0
      %1836 = vmatprep.subr.mxu0 0.0
      %1837 = vmatpush1.msra.mxu0 0.0
      %1838 = vmatprep.subr.mxu0 0.0
      %1839 = vmatpush1.msra.mxu0 0.0
      %1840 = vmatprep.subr.mxu0 0.0
      %1841 = vmatpush1.msra.mxu0 0.0
      %1842 = vmatprep.subr.mxu0 0.0
      %1843 = vmatpush1.msra.mxu0 0.0
      %1844 = vmatprep.subr.mxu0 0.0
      %1845 = vmatpush1.msra.mxu0 0.0
      %1846 = vmatprep.subr.mxu0 0.0
      %1847 = vmatpush1.msra.mxu0 0.0
      %1848 = vmatprep.subr.mxu0 0.0
      %1849 = vmatpush1.msra.mxu0 0.0
      %1850 = vmatprep.subr.mxu0 0.0
      %1851 = vmatpush1.msra.mxu0 0.0
      %1852 = vmatprep.subr.mxu0 0.0
      %1853 = vmatpush1.msra.mxu0 0.0
      %1854 = vmatprep.mubr.f32.mxu0 0.0
      %1855 = vmatmul.mubr.f32.gmra.mrb[0].mxu0 %v1548
      %v1856 = vpop.f32.mrb[0].mxu0
      %v1857 = vadd.f32 0.0, %v1856
      %v1858 = vpop.f32.mrb[0].mxu0
      %1859 = vmatprep.mubr.f32.mxu0 0.0
      %1860 = vmatmul.mubr.f32.gmra.mrb[0].mxu0 %v1551
      %v1861 = vpop.f32.mrb[0].mxu0
      %v1862 = vadd.f32 0.0, %v1861
      %v1863 = vpop.f32.mrb[0].mxu0
      %1864 = vmatprep.mubr.f32.mxu0 0.0
      %1865 = vmatmul.mubr.f32.gmra.mrb[0].mxu0 %v1785
      %v1866 = vpop.f32.mrb[0].mxu0
      %v1867 = vadd.f32 0.0, %v1866
      %v1868 = vpop.f32.mrb[0].mxu0
      %1869 = vmatprep.mubr.f32.mxu0 0.0
      %1870 = vmatmul.mubr.f32.gmra.mrb[0].mxu0 %v1788
      %v1871 = vpop.f32.mrb[0].mxu0
      %v1872 = vadd.f32 0.0, %v1871
      %v1873 = vpop.f32.mrb[0].mxu0
      %1874 = vdwg.mxu0
      %v1875 = vadd.f32 %v1638, %v1857
      %v1876 = vadd.f32 %v1639, %v1862
      %v1877 = vadd.f32 %v1640, %v1867
      %v1878 = vadd.f32 %v1641, %v1872
      %v1879 = vrot.slane %v321, 2
      %v1880 = vrot.slane %v324, 2
      %v1881 = vrot.slane %v327, 2
      %v1882 = vrot.slane %v330, 2
      %v1883 = vrot.slane %v333, 2
      %v1884 = vrot.slane %v336, 2
      %v1885 = vrot.slane %v339, 2
      %v1886 = vrot.slane %v342, 2
      %v1887 = vrot.slane %v322, 2
      %v1888 = vrot.slane %v325, 2
      %v1889 = vrot.slane %v328, 2
      %v1890 = vrot.slane %v331, 2
      %v1891 = vrot.slane %v334, 2
      %v1892 = vrot.slane %v337, 2
      %v1893 = vrot.slane %v340, 2
      %v1894 = vrot.slane %v343, 2
      %v1895 = vrot.slane %v323, 2
      %v1896 = vrot.slane %v326, 2
      %v1897 = vrot.slane %v329, 2
      %v1898 = vrot.slane %v332, 2
      %v1899 = vrot.slane %v335, 2
      %v1900 = vrot.slane %v338, 2
      %v1901 = vrot.slane %v341, 2
      %v1902 = vrot.slane %v344, 2
      %vm1903 = vcmp.lt.s32.totalorder %v1098, 6
      %v1904 = vsel %vm1903, %v1887, %v1895
      %v1905 = vsel %vm1903, %v1888, %v1896
      %v1906 = vsel %vm1903, %v1889, %v1897
      %v1907 = vsel %vm1903, %v1890, %v1898
      %v1908 = vsel %vm1903, %v1891, %v1899
      %v1909 = vsel %vm1903, %v1892, %v1900
      %v1910 = vsel %vm1903, %v1893, %v1901
      %v1911 = vsel %vm1903, %v1894, %v1902
      %v1912 = vsel %vm1903, %v1879, %v1887
      %v1913 = vsel %vm1903, %v1880, %v1888
      %v1914 = vsel %vm1903, %v1881, %v1889
      %v1915 = vsel %vm1903, %v1882, %v1890
      %v1916 = vsel %vm1903, %v1883, %v1891
      %v1917 = vsel %vm1903, %v1884, %v1892
      %v1918 = vsel %vm1903, %v1885, %v1893
      %v1919 = vsel %vm1903, %v1886, %v1894
      %v1920 = vrot.slane %v345, 2
      %v1921 = vrot.slane %v348, 2
      %v1922 = vrot.slane %v346, 2
      %v1923 = vrot.slane %v349, 2
      %v1924 = vrot.slane %v347, 2
      %v1925 = vrot.slane %v350, 2
      %v1926 = vsel %vm1903, %v1922, %v1924
      %v1927 = vsel %vm1903, %v1923, %v1925
      %v1928 = vsel %vm1903, %v1920, %v1922
      %v1929 = vsel %vm1903, %v1921, %v1923
      %s1930 = scalar_lea.vmem %s2, 8
      %v1931 = vld [vmem:[%s1930] sm:$0xf]
      %v1933 = vsel %vm354, %v1912, 0
      %v1936 = vsel %vm354, %v1904, 0
      %v1939 = vsel %vm354, %v1913, 0
      %v1942 = vsel %vm354, %v1905, 0
      %v1945 = vsel %vm354, %v1914, 0
      %v1948 = vsel %vm354, %v1906, 0
      %v1951 = vsel %vm354, %v1915, 0
      %v1954 = vsel %vm354, %v1907, 0
      %v1957 = vsel %vm354, %v1916, 0
      %v1960 = vsel %vm354, %v1908, 0
      %v1963 = vsel %vm354, %v1917, 0
      %v1966 = vsel %vm354, %v1909, 0
      %v1969 = vsel %vm391, %v1931, 0
      %1971 = vmatprep.subr.mxu0 0.0
      %1972 = vmatpush1.msra.mxu0 %v1969
      %1973 = vmatprep.subr.mxu0 0.0
      %1974 = vmatpush1.msra.mxu0 0.0
      %1975 = vmatprep.subr.mxu0 0.0
      %1976 = vmatpush1.msra.mxu0 0.0
      %1977 = vmatprep.subr.mxu0 0.0
      %1978 = vmatpush1.msra.mxu0 0.0
      %1979 = vmatprep.subr.mxu0 0.0
      %1980 = vmatpush1.msra.mxu0 0.0
      %1981 = vmatprep.subr.mxu0 0.0
      %1982 = vmatpush1.msra.mxu0 0.0
      %1983 = vmatprep.subr.mxu0 0.0
      %1984 = vmatpush1.msra.mxu0 0.0
      %1985 = vmatprep.subr.mxu0 0.0
      %1986 = vmatpush1.msra.mxu0 0.0
      %1987 = vmatprep.subr.mxu0 0.0
      %1988 = vmatpush1.msra.mxu0 0.0
      %1989 = vmatprep.subr.mxu0 0.0
      %1990 = vmatpush1.msra.mxu0 0.0
      %1991 = vmatprep.subr.mxu0 0.0
      %1992 = vmatpush1.msra.mxu0 0.0
      %1993 = vmatprep.subr.mxu0 0.0
      %1994 = vmatpush1.msra.mxu0 0.0
      %1995 = vmatprep.subr.mxu0 0.0
      %1996 = vmatpush1.msra.mxu0 0.0
      %1997 = vmatprep.subr.mxu0 0.0
      %1998 = vmatpush1.msra.mxu0 0.0
      %1999 = vmatprep.subr.mxu0 0.0
      %2000 = vmatpush1.msra.mxu0 0.0
      %2001 = vmatprep.subr.mxu0 0.0
      %2002 = vmatpush1.msra.mxu0 0.0
      %2003 = vmatprep.subr.mxu0 0.0
      %2004 = vmatpush1.msra.mxu0 0.0
      %2005 = vmatprep.subr.mxu0 0.0
      %2006 = vmatpush1.msra.mxu0 0.0
      %2007 = vmatprep.subr.mxu0 0.0
      %2008 = vmatpush1.msra.mxu0 0.0
      %2009 = vmatprep.subr.mxu0 0.0
      %2010 = vmatpush1.msra.mxu0 0.0
      %2011 = vmatprep.subr.mxu0 0.0
      %2012 = vmatpush1.msra.mxu0 0.0
      %2013 = vmatprep.subr.mxu0 0.0
      %2014 = vmatpush1.msra.mxu0 0.0
      %2015 = vmatprep.subr.mxu0 0.0
      %2016 = vmatpush1.msra.mxu0 0.0
      %2017 = vmatprep.subr.mxu0 0.0
      %2018 = vmatpush1.msra.mxu0 0.0
      %2019 = vmatprep.subr.mxu0 0.0
      %2020 = vmatpush1.msra.mxu0 0.0
      %2021 = vmatprep.subr.mxu0 0.0
      %2022 = vmatpush1.msra.mxu0 0.0
      %2023 = vmatprep.subr.mxu0 0.0
      %2024 = vmatpush1.msra.mxu0 0.0
      %2025 = vmatprep.subr.mxu0 0.0
      %2026 = vmatpush1.msra.mxu0 0.0
      %2027 = vmatprep.subr.mxu0 0.0
      %2028 = vmatpush1.msra.mxu0 0.0
      %2029 = vmatprep.subr.mxu0 0.0
      %2030 = vmatpush1.msra.mxu0 0.0
      %2031 = vmatprep.subr.mxu0 0.0
      %2032 = vmatpush1.msra.mxu0 0.0
      %2033 = vmatprep.subr.mxu0 0.0
      %2034 = vmatpush1.msra.mxu0 0.0
      %2035 = vmatprep.mubr.f32.mxu0 0.0
      %2036 = vmatmul.mubr.f32.gmra.mrb[0].mxu0 %v1933
      %v2037 = vpop.f32.mrb[0].mxu0
      %v2038 = vadd.f32 0.0, %v2037
      %v2039 = vpop.f32.mrb[0].mxu0
      %2040 = vmatprep.mubr.f32.mxu0 0.0
      %2041 = vmatmul.mubr.f32.gmra.mrb[0].mxu0 %v1936
      %v2042 = vpop.f32.mrb[0].mxu0
      %v2043 = vadd.f32 0.0, %v2042
      %v2044 = vpop.f32.mrb[0].mxu0
      %2045 = vmatprep.mubr.f32.mxu0 0.0
      %2046 = vmatmul.mubr.f32.gmra.mrb[0].mxu0 %v1939
      %v2047 = vpop.f32.mrb[0].mxu0
      %v2048 = vadd.f32 0.0, %v2047
      %v2049 = vpop.f32.mrb[0].mxu0
      %2050 = vmatprep.mubr.f32.mxu0 0.0
      %2051 = vmatmul.mubr.f32.gmra.mrb[0].mxu0 %v1942
      %v2052 = vpop.f32.mrb[0].mxu0
      %v2053 = vadd.f32 0.0, %v2052
      %v2054 = vpop.f32.mrb[0].mxu0
      %2055 = vmatprep.mubr.f32.mxu0 0.0
      %2056 = vmatmul.mubr.f32.gmra.mrb[0].mxu0 %v1945
      %v2057 = vpop.f32.mrb[0].mxu0
      %v2058 = vadd.f32 0.0, %v2057
      %v2059 = vpop.f32.mrb[0].mxu0
      %2060 = vmatprep.mubr.f32.mxu0 0.0
      %2061 = vmatmul.mubr.f32.gmra.mrb[0].mxu0 %v1948
      %v2062 = vpop.f32.mrb[0].mxu0
      %v2063 = vadd.f32 0.0, %v2062
      %v2064 = vpop.f32.mrb[0].mxu0
      %2065 = vmatprep.mubr.f32.mxu0 0.0
      %2066 = vmatmul.mubr.f32.gmra.mrb[0].mxu0 %v1951
      %v2067 = vpop.f32.mrb[0].mxu0
      %v2068 = vadd.f32 0.0, %v2067
      %v2069 = vpop.f32.mrb[0].mxu0
      %2070 = vmatprep.mubr.f32.mxu0 0.0
      %2071 = vmatmul.mubr.f32.gmra.mrb[0].mxu0 %v1954
      %v2072 = vpop.f32.mrb[0].mxu0
      %v2073 = vadd.f32 0.0, %v2072
      %v2074 = vpop.f32.mrb[0].mxu0
      %2075 = vmatprep.mubr.f32.mxu0 0.0
      %2076 = vmatmul.mubr.f32.gmra.mrb[0].mxu0 %v1957
      %v2077 = vpop.f32.mrb[0].mxu0
      %v2078 = vadd.f32 0.0, %v2077
      %v2079 = vpop.f32.mrb[0].mxu0
      %2080 = vmatprep.mubr.f32.mxu0 0.0
      %2081 = vmatmul.mubr.f32.gmra.mrb[0].mxu0 %v1960
      %v2082 = vpop.f32.mrb[0].mxu0
      %v2083 = vadd.f32 0.0, %v2082
      %v2084 = vpop.f32.mrb[0].mxu0
      %2085 = vmatprep.mubr.f32.mxu0 0.0
      %2086 = vmatmul.mubr.f32.gmra.mrb[0].mxu0 %v1963
      %v2087 = vpop.f32.mrb[0].mxu0
      %v2088 = vadd.f32 0.0, %v2087
      %v2089 = vpop.f32.mrb[0].mxu0
      %2090 = vmatprep.mubr.f32.mxu0 0.0
      %2091 = vmatmul.mubr.f32.gmra.mrb[0].mxu0 %v1966
      %v2092 = vpop.f32.mrb[0].mxu0
      %v2093 = vadd.f32 0.0, %v2092
      %v2094 = vpop.f32.mrb[0].mxu0
      %2095 = vdwg.mxu0
      %v2096 = vadd.f32 %v1772, %v2038
      %v2097 = vadd.f32 %v1773, %v2043
      %v2098 = vadd.f32 %v1774, %v2048
      %v2099 = vadd.f32 %v1775, %v2053
      %v2100 = vadd.f32 %v1776, %v2058
      %v2101 = vadd.f32 %v1777, %v2063
      %v2102 = vadd.f32 %v1778, %v2068
      %v2103 = vadd.f32 %v1779, %v2073
      %v2104 = vadd.f32 %v1780, %v2078
      %v2105 = vadd.f32 %v1781, %v2083
      %v2106 = vadd.f32 %v1782, %v2088
      %v2107 = vadd.f32 %v1783, %v2093
      %v2109 = vsel %vm354, %v1918, 0
      %v2112 = vsel %vm354, %v1910, 0
      %v2115 = vsel %vm354, %v1919, 0
      %v2118 = vsel %vm354, %v1911, 0
      %2120 = vmatprep.subr.mxu0 0.0
      %2121 = vmatpush1.msra.mxu0 %v1969
      %2122 = vmatprep.subr.mxu0 0.0
      %2123 = vmatpush1.msra.mxu0 0.0
      %2124 = vmatprep.subr.mxu0 0.0
      %2125 = vmatpush1.msra.mxu0 0.0
      %2126 = vmatprep.subr.mxu0 0.0
      %2127 = vmatpush1.msra.mxu0 0.0
      %2128 = vmatprep.subr.mxu0 0.0
      %2129 = vmatpush1.msra.mxu0 0.0
      %2130 = vmatprep.subr.mxu0 0.0
      %2131 = vmatpush1.msra.mxu0 0.0
      %2132 = vmatprep.subr.mxu0 0.0
      %2133 = vmatpush1.msra.mxu0 0.0
      %2134 = vmatprep.subr.mxu0 0.0
      %2135 = vmatpush1.msra.mxu0 0.0
      %2136 = vmatprep.subr.mxu0 0.0
      %2137 = vmatpush1.msra.mxu0 0.0
      %2138 = vmatprep.subr.mxu0 0.0
      %2139 = vmatpush1.msra.mxu0 0.0
      %2140 = vmatprep.subr.mxu0 0.0
      %2141 = vmatpush1.msra.mxu0 0.0
      %2142 = vmatprep.subr.mxu0 0.0
      %2143 = vmatpush1.msra.mxu0 0.0
      %2144 = vmatprep.subr.mxu0 0.0
      %2145 = vmatpush1.msra.mxu0 0.0
      %2146 = vmatprep.subr.mxu0 0.0
      %2147 = vmatpush1.msra.mxu0 0.0
      %2148 = vmatprep.subr.mxu0 0.0
      %2149 = vmatpush1.msra.mxu0 0.0
      %2150 = vmatprep.subr.mxu0 0.0
      %2151 = vmatpush1.msra.mxu0 0.0
      %2152 = vmatprep.subr.mxu0 0.0
      %2153 = vmatpush1.msra.mxu0 0.0
      %2154 = vmatprep.subr.mxu0 0.0
      %2155 = vmatpush1.msra.mxu0 0.0
      %2156 = vmatprep.subr.mxu0 0.0
      %2157 = vmatpush1.msra.mxu0 0.0
      %2158 = vmatprep.subr.mxu0 0.0
      %2159 = vmatpush1.msra.mxu0 0.0
      %2160 = vmatprep.subr.mxu0 0.0
      %2161 = vmatpush1.msra.mxu0 0.0
      %2162 = vmatprep.subr.mxu0 0.0
      %2163 = vmatpush1.msra.mxu0 0.0
      %2164 = vmatprep.subr.mxu0 0.0
      %2165 = vmatpush1.msra.mxu0 0.0
      %2166 = vmatprep.subr.mxu0 0.0
      %2167 = vmatpush1.msra.mxu0 0.0
      %2168 = vmatprep.subr.mxu0 0.0
      %2169 = vmatpush1.msra.mxu0 0.0
      %2170 = vmatprep.subr.mxu0 0.0
      %2171 = vmatpush1.msra.mxu0 0.0
      %2172 = vmatprep.subr.mxu0 0.0
      %2173 = vmatpush1.msra.mxu0 0.0
      %2174 = vmatprep.subr.mxu0 0.0
      %2175 = vmatpush1.msra.mxu0 0.0
      %2176 = vmatprep.subr.mxu0 0.0
      %2177 = vmatpush1.msra.mxu0 0.0
      %2178 = vmatprep.subr.mxu0 0.0
      %2179 = vmatpush1.msra.mxu0 0.0
      %2180 = vmatprep.subr.mxu0 0.0
      %2181 = vmatpush1.msra.mxu0 0.0
      %2182 = vmatprep.subr.mxu0 0.0
      %2183 = vmatpush1.msra.mxu0 0.0
      %2184 = vmatprep.mubr.f32.mxu0 0.0
      %2185 = vmatmul.mubr.f32.gmra.mrb[0].mxu0 %v2109
      %v2186 = vpop.f32.mrb[0].mxu0
      %v2187 = vadd.f32 0.0, %v2186
      %v2188 = vpop.f32.mrb[0].mxu0
      %2189 = vmatprep.mubr.f32.mxu0 0.0
      %2190 = vmatmul.mubr.f32.gmra.mrb[0].mxu0 %v2112
      %v2191 = vpop.f32.mrb[0].mxu0
      %v2192 = vadd.f32 0.0, %v2191
      %v2193 = vpop.f32.mrb[0].mxu0
      %2194 = vmatprep.mubr.f32.mxu0 0.0
      %2195 = vmatmul.mubr.f32.gmra.mrb[0].mxu0 %v2115
      %v2196 = vpop.f32.mrb[0].mxu0
      %v2197 = vadd.f32 0.0, %v2196
      %v2198 = vpop.f32.mrb[0].mxu0
      %2199 = vmatprep.mubr.f32.mxu0 0.0
      %2200 = vmatmul.mubr.f32.gmra.mrb[0].mxu0 %v2118
      %v2201 = vpop.f32.mrb[0].mxu0
      %v2202 = vadd.f32 0.0, %v2201
      %v2203 = vpop.f32.mrb[0].mxu0
      %2204 = vdwg.mxu0
      %v2205 = vadd.f32 %v1875, %v2187
      %v2206 = vadd.f32 %v1876, %v2192
      %v2207 = vadd.f32 %v1877, %v2197
      %v2208 = vadd.f32 %v1878, %v2202
      %s2209 = scalar_lea.vmem %s2, 20
      %v2210 = vld [vmem:[%s2209] sm:$0xf]
      %v2212 = vsel %vm391, %v2210, 0
      %2214 = vmatprep.subr.mxu0 0.0
      %2215 = vmatpush1.msra.mxu0 %v2212
      %2216 = vmatprep.subr.mxu0 0.0
      %2217 = vmatpush1.msra.mxu0 0.0
      %2218 = vmatprep.subr.mxu0 0.0
      %2219 = vmatpush1.msra.mxu0 0.0
      %2220 = vmatprep.subr.mxu0 0.0
      %2221 = vmatpush1.msra.mxu0 0.0
      %2222 = vmatprep.subr.mxu0 0.0
      %2223 = vmatpush1.msra.mxu0 0.0
      %2224 = vmatprep.subr.mxu0 0.0
      %2225 = vmatpush1.msra.mxu0 0.0
      %2226 = vmatprep.subr.mxu0 0.0
      %2227 = vmatpush1.msra.mxu0 0.0
      %2228 = vmatprep.subr.mxu0 0.0
      %2229 = vmatpush1.msra.mxu0 0.0
      %2230 = vmatprep.subr.mxu0 0.0
      %2231 = vmatpush1.msra.mxu0 0.0
      %2232 = vmatprep.subr.mxu0 0.0
      %2233 = vmatpush1.msra.mxu0 0.0
      %2234 = vmatprep.subr.mxu0 0.0
      %2235 = vmatpush1.msra.mxu0 0.0
      %2236 = vmatprep.subr.mxu0 0.0
      %2237 = vmatpush1.msra.mxu0 0.0
      %2238 = vmatprep.subr.mxu0 0.0
      %2239 = vmatpush1.msra.mxu0 0.0
      %2240 = vmatprep.subr.mxu0 0.0
      %2241 = vmatpush1.msra.mxu0 0.0
      %2242 = vmatprep.subr.mxu0 0.0
      %2243 = vmatpush1.msra.mxu0 0.0
      %2244 = vmatprep.subr.mxu0 0.0
      %2245 = vmatpush1.msra.mxu0 0.0
      %2246 = vmatprep.subr.mxu0 0.0
      %2247 = vmatpush1.msra.mxu0 0.0
      %2248 = vmatprep.subr.mxu0 0.0
      %2249 = vmatpush1.msra.mxu0 0.0
      %2250 = vmatprep.subr.mxu0 0.0
      %2251 = vmatpush1.msra.mxu0 0.0
      %2252 = vmatprep.subr.mxu0 0.0
      %2253 = vmatpush1.msra.mxu0 0.0
      %2254 = vmatprep.subr.mxu0 0.0
      %2255 = vmatpush1.msra.mxu0 0.0
      %2256 = vmatprep.subr.mxu0 0.0
      %2257 = vmatpush1.msra.mxu0 0.0
      %2258 = vmatprep.subr.mxu0 0.0
      %2259 = vmatpush1.msra.mxu0 0.0
      %2260 = vmatprep.subr.mxu0 0.0
      %2261 = vmatpush1.msra.mxu0 0.0
      %2262 = vmatprep.subr.mxu0 0.0
      %2263 = vmatpush1.msra.mxu0 0.0
      %2264 = vmatprep.subr.mxu0 0.0
      %2265 = vmatpush1.msra.mxu0 0.0
      %2266 = vmatprep.subr.mxu0 0.0
      %2267 = vmatpush1.msra.mxu0 0.0
      %2268 = vmatprep.subr.mxu0 0.0
      %2269 = vmatpush1.msra.mxu0 0.0
      %2270 = vmatprep.subr.mxu0 0.0
      %2271 = vmatpush1.msra.mxu0 0.0
      %2272 = vmatprep.subr.mxu0 0.0
      %2273 = vmatpush1.msra.mxu0 0.0
      %2274 = vmatprep.subr.mxu0 0.0
      %2275 = vmatpush1.msra.mxu0 0.0
      %2276 = vmatprep.subr.mxu0 0.0
      %2277 = vmatpush1.msra.mxu0 0.0
      %2278 = vmatprep.mubr.f32.mxu0 0.0
      %2279 = vmatmul.mubr.f32.gmra.mrb[0].mxu0 %v1939
      %v2280 = vpop.f32.mrb[0].mxu0
      %v2281 = vadd.f32 0.0, %v2280
      %v2282 = vpop.f32.mrb[0].mxu0
      %2283 = vmatprep.mubr.f32.mxu0 0.0
      %2284 = vmatmul.mubr.f32.gmra.mrb[0].mxu0 %v1942
      %v2285 = vpop.f32.mrb[0].mxu0
      %v2286 = vadd.f32 0.0, %v2285
      %v2287 = vpop.f32.mrb[0].mxu0
      %2288 = vmatprep.mubr.f32.mxu0 0.0
      %2289 = vmatmul.mubr.f32.gmra.mrb[0].mxu0 %v1945
      %v2290 = vpop.f32.mrb[0].mxu0
      %v2291 = vadd.f32 0.0, %v2290
      %v2292 = vpop.f32.mrb[0].mxu0
      %2293 = vmatprep.mubr.f32.mxu0 0.0
      %2294 = vmatmul.mubr.f32.gmra.mrb[0].mxu0 %v1948
      %v2295 = vpop.f32.mrb[0].mxu0
      %v2296 = vadd.f32 0.0, %v2295
      %v2297 = vpop.f32.mrb[0].mxu0
      %2298 = vmatprep.mubr.f32.mxu0 0.0
      %2299 = vmatmul.mubr.f32.gmra.mrb[0].mxu0 %v1951
      %v2300 = vpop.f32.mrb[0].mxu0
      %v2301 = vadd.f32 0.0, %v2300
      %v2302 = vpop.f32.mrb[0].mxu0
      %2303 = vmatprep.mubr.f32.mxu0 0.0
      %2304 = vmatmul.mubr.f32.gmra.mrb[0].mxu0 %v1954
      %v2305 = vpop.f32.mrb[0].mxu0
      %v2306 = vadd.f32 0.0, %v2305
      %v2307 = vpop.f32.mrb[0].mxu0
      %2308 = vmatprep.mubr.f32.mxu0 0.0
      %2309 = vmatmul.mubr.f32.gmra.mrb[0].mxu0 %v1957
      %v2310 = vpop.f32.mrb[0].mxu0
      %v2311 = vadd.f32 0.0, %v2310
      %v2312 = vpop.f32.mrb[0].mxu0
      %2313 = vmatprep.mubr.f32.mxu0 0.0
      %2314 = vmatmul.mubr.f32.gmra.mrb[0].mxu0 %v1960
      %v2315 = vpop.f32.mrb[0].mxu0
      %v2316 = vadd.f32 0.0, %v2315
      %v2317 = vpop.f32.mrb[0].mxu0
      %2318 = vmatprep.mubr.f32.mxu0 0.0
      %2319 = vmatmul.mubr.f32.gmra.mrb[0].mxu0 %v1963
      %v2320 = vpop.f32.mrb[0].mxu0
      %v2321 = vadd.f32 0.0, %v2320
      %v2322 = vpop.f32.mrb[0].mxu0
      %2323 = vmatprep.mubr.f32.mxu0 0.0
      %2324 = vmatmul.mubr.f32.gmra.mrb[0].mxu0 %v1966
      %v2325 = vpop.f32.mrb[0].mxu0
      %v2326 = vadd.f32 0.0, %v2325
      %v2327 = vpop.f32.mrb[0].mxu0
      %2328 = vmatprep.mubr.f32.mxu0 0.0
      %2329 = vmatmul.mubr.f32.gmra.mrb[0].mxu0 %v2109
      %v2330 = vpop.f32.mrb[0].mxu0
      %v2331 = vadd.f32 0.0, %v2330
      %v2332 = vpop.f32.mrb[0].mxu0
      %2333 = vmatprep.mubr.f32.mxu0 0.0
      %2334 = vmatmul.mubr.f32.gmra.mrb[0].mxu0 %v2112
      %v2335 = vpop.f32.mrb[0].mxu0
      %v2336 = vadd.f32 0.0, %v2335
      %v2337 = vpop.f32.mrb[0].mxu0
      %2338 = vdwg.mxu0
      %v2339 = vadd.f32 %v2096, %v2281
      %v2340 = vadd.f32 %v2097, %v2286
      %v2341 = vadd.f32 %v2098, %v2291
      %v2342 = vadd.f32 %v2099, %v2296
      %v2343 = vadd.f32 %v2100, %v2301
      %v2344 = vadd.f32 %v2101, %v2306
      %v2345 = vadd.f32 %v2102, %v2311
      %v2346 = vadd.f32 %v2103, %v2316
      %v2347 = vadd.f32 %v2104, %v2321
      %v2348 = vadd.f32 %v2105, %v2326
      %v2349 = vadd.f32 %v2106, %v2331
      %v2350 = vadd.f32 %v2107, %v2336
      %v2352 = vsel %vm354, %v1928, 0
      %v2355 = vsel %vm354, %v1926, 0
      %2357 = vmatprep.subr.mxu0 0.0
      %2358 = vmatpush1.msra.mxu0 %v2212
      %2359 = vmatprep.subr.mxu0 0.0
      %2360 = vmatpush1.msra.mxu0 0.0
      %2361 = vmatprep.subr.mxu0 0.0
      %2362 = vmatpush1.msra.mxu0 0.0
      %2363 = vmatprep.subr.mxu0 0.0
      %2364 = vmatpush1.msra.mxu0 0.0
      %2365 = vmatprep.subr.mxu0 0.0
      %2366 = vmatpush1.msra.mxu0 0.0
      %2367 = vmatprep.subr.mxu0 0.0
      %2368 = vmatpush1.msra.mxu0 0.0
      %2369 = vmatprep.subr.mxu0 0.0
      %2370 = vmatpush1.msra.mxu0 0.0
      %2371 = vmatprep.subr.mxu0 0.0
      %2372 = vmatpush1.msra.mxu0 0.0
      %2373 = vmatprep.subr.mxu0 0.0
      %2374 = vmatpush1.msra.mxu0 0.0
      %2375 = vmatprep.subr.mxu0 0.0
      %2376 = vmatpush1.msra.mxu0 0.0
      %2377 = vmatprep.subr.mxu0 0.0
      %2378 = vmatpush1.msra.mxu0 0.0
      %2379 = vmatprep.subr.mxu0 0.0
      %2380 = vmatpush1.msra.mxu0 0.0
      %2381 = vmatprep.subr.mxu0 0.0
      %2382 = vmatpush1.msra.mxu0 0.0
      %2383 = vmatprep.subr.mxu0 0.0
      %2384 = vmatpush1.msra.mxu0 0.0
      %2385 = vmatprep.subr.mxu0 0.0
      %2386 = vmatpush1.msra.mxu0 0.0
      %2387 = vmatprep.subr.mxu0 0.0
      %2388 = vmatpush1.msra.mxu0 0.0
      %2389 = vmatprep.subr.mxu0 0.0
      %2390 = vmatpush1.msra.mxu0 0.0
      %2391 = vmatprep.subr.mxu0 0.0
      %2392 = vmatpush1.msra.mxu0 0.0
      %2393 = vmatprep.subr.mxu0 0.0
      %2394 = vmatpush1.msra.mxu0 0.0
      %2395 = vmatprep.subr.mxu0 0.0
      %2396 = vmatpush1.msra.mxu0 0.0
      %2397 = vmatprep.subr.mxu0 0.0
      %2398 = vmatpush1.msra.mxu0 0.0
      %2399 = vmatprep.subr.mxu0 0.0
      %2400 = vmatpush1.msra.mxu0 0.0
      %2401 = vmatprep.subr.mxu0 0.0
      %2402 = vmatpush1.msra.mxu0 0.0
      %2403 = vmatprep.subr.mxu0 0.0
      %2404 = vmatpush1.msra.mxu0 0.0
      %2405 = vmatprep.subr.mxu0 0.0
      %2406 = vmatpush1.msra.mxu0 0.0
      %2407 = vmatprep.subr.mxu0 0.0
      %2408 = vmatpush1.msra.mxu0 0.0
      %2409 = vmatprep.subr.mxu0 0.0
      %2410 = vmatpush1.msra.mxu0 0.0
      %2411 = vmatprep.subr.mxu0 0.0
      %2412 = vmatpush1.msra.mxu0 0.0
      %2413 = vmatprep.subr.mxu0 0.0
      %2414 = vmatpush1.msra.mxu0 0.0
      %2415 = vmatprep.subr.mxu0 0.0
      %2416 = vmatpush1.msra.mxu0 0.0
      %2417 = vmatprep.subr.mxu0 0.0
      %2418 = vmatpush1.msra.mxu0 0.0
      %2419 = vmatprep.subr.mxu0 0.0
      %2420 = vmatpush1.msra.mxu0 0.0
      %2421 = vmatprep.mubr.f32.mxu0 0.0
      %2422 = vmatmul.mubr.f32.gmra.mrb[0].mxu0 %v2115
      %v2423 = vpop.f32.mrb[0].mxu0
      %v2424 = vadd.f32 0.0, %v2423
      %v2425 = vpop.f32.mrb[0].mxu0
      %2426 = vmatprep.mubr.f32.mxu0 0.0
      %2427 = vmatmul.mubr.f32.gmra.mrb[0].mxu0 %v2118
      %v2428 = vpop.f32.mrb[0].mxu0
      %v2429 = vadd.f32 0.0, %v2428
      %v2430 = vpop.f32.mrb[0].mxu0
      %2431 = vmatprep.mubr.f32.mxu0 0.0
      %2432 = vmatmul.mubr.f32.gmra.mrb[0].mxu0 %v2352
      %v2433 = vpop.f32.mrb[0].mxu0
      %v2434 = vadd.f32 0.0, %v2433
      %v2435 = vpop.f32.mrb[0].mxu0
      %2436 = vmatprep.mubr.f32.mxu0 0.0
      %2437 = vmatmul.mubr.f32.gmra.mrb[0].mxu0 %v2355
      %v2438 = vpop.f32.mrb[0].mxu0
      %v2439 = vadd.f32 0.0, %v2438
      %v2440 = vpop.f32.mrb[0].mxu0
      %2441 = vdwg.mxu0
      %v2442 = vadd.f32 %v2205, %v2424
      %v2443 = vadd.f32 %v2206, %v2429
      %v2444 = vadd.f32 %v2207, %v2434
      %v2445 = vadd.f32 %v2208, %v2439
      %s2446 = scalar_lea.vmem %s2, 32
      %v2447 = vld [vmem:[%s2446] sm:$0xf]
      %v2449 = vsel %vm391, %v2447, 0
      %2451 = vmatprep.subr.mxu0 0.0
      %2452 = vmatpush1.msra.mxu0 %v2449
      %2453 = vmatprep.subr.mxu0 0.0
      %2454 = vmatpush1.msra.mxu0 0.0
      %2455 = vmatprep.subr.mxu0 0.0
      %2456 = vmatpush1.msra.mxu0 0.0
      %2457 = vmatprep.subr.mxu0 0.0
      %2458 = vmatpush1.msra.mxu0 0.0
      %2459 = vmatprep.subr.mxu0 0.0
      %2460 = vmatpush1.msra.mxu0 0.0
      %2461 = vmatprep.subr.mxu0 0.0
      %2462 = vmatpush1.msra.mxu0 0.0
      %2463 = vmatprep.subr.mxu0 0.0
      %2464 = vmatpush1.msra.mxu0 0.0
      %2465 = vmatprep.subr.mxu0 0.0
      %2466 = vmatpush1.msra.mxu0 0.0
      %2467 = vmatprep.subr.mxu0 0.0
      %2468 = vmatpush1.msra.mxu0 0.0
      %2469 = vmatprep.subr.mxu0 0.0
      %2470 = vmatpush1.msra.mxu0 0.0
      %2471 = vmatprep.subr.mxu0 0.0
      %2472 = vmatpush1.msra.mxu0 0.0
      %2473 = vmatprep.subr.mxu0 0.0
      %2474 = vmatpush1.msra.mxu0 0.0
      %2475 = vmatprep.subr.mxu0 0.0
      %2476 = vmatpush1.msra.mxu0 0.0
      %2477 = vmatprep.subr.mxu0 0.0
      %2478 = vmatpush1.msra.mxu0 0.0
      %2479 = vmatprep.subr.mxu0 0.0
      %2480 = vmatpush1.msra.mxu0 0.0
      %2481 = vmatprep.subr.mxu0 0.0
      %2482 = vmatpush1.msra.mxu0 0.0
      %2483 = vmatprep.subr.mxu0 0.0
      %2484 = vmatpush1.msra.mxu0 0.0
      %2485 = vmatprep.subr.mxu0 0.0
      %2486 = vmatpush1.msra.mxu0 0.0
      %2487 = vmatprep.subr.mxu0 0.0
      %2488 = vmatpush1.msra.mxu0 0.0
      %2489 = vmatprep.subr.mxu0 0.0
      %2490 = vmatpush1.msra.mxu0 0.0
      %2491 = vmatprep.subr.mxu0 0.0
      %2492 = vmatpush1.msra.mxu0 0.0
      %2493 = vmatprep.subr.mxu0 0.0
      %2494 = vmatpush1.msra.mxu0 0.0
      %2495 = vmatprep.subr.mxu0 0.0
      %2496 = vmatpush1.msra.mxu0 0.0
      %2497 = vmatprep.subr.mxu0 0.0
      %2498 = vmatpush1.msra.mxu0 0.0
      %2499 = vmatprep.subr.mxu0 0.0
      %2500 = vmatpush1.msra.mxu0 0.0
      %2501 = vmatprep.subr.mxu0 0.0
      %2502 = vmatpush1.msra.mxu0 0.0
      %2503 = vmatprep.subr.mxu0 0.0
      %2504 = vmatpush1.msra.mxu0 0.0
      %2505 = vmatprep.subr.mxu0 0.0
      %2506 = vmatpush1.msra.mxu0 0.0
      %2507 = vmatprep.subr.mxu0 0.0
      %2508 = vmatpush1.msra.mxu0 0.0
      %2509 = vmatprep.subr.mxu0 0.0
      %2510 = vmatpush1.msra.mxu0 0.0
      %2511 = vmatprep.subr.mxu0 0.0
      %2512 = vmatpush1.msra.mxu0 0.0
      %2513 = vmatprep.subr.mxu0 0.0
      %2514 = vmatpush1.msra.mxu0 0.0
      %2515 = vmatprep.mubr.f32.mxu0 0.0
      %2516 = vmatmul.mubr.f32.gmra.mrb[0].mxu0 %v1945
      %v2517 = vpop.f32.mrb[0].mxu0
      %v2518 = vadd.f32 0.0, %v2517
      %v2519 = vpop.f32.mrb[0].mxu0
      %2520 = vmatprep.mubr.f32.mxu0 0.0
      %2521 = vmatmul.mubr.f32.gmra.mrb[0].mxu0 %v1948
      %v2522 = vpop.f32.mrb[0].mxu0
      %v2523 = vadd.f32 0.0, %v2522
      %v2524 = vpop.f32.mrb[0].mxu0
      %2525 = vmatprep.mubr.f32.mxu0 0.0
      %2526 = vmatmul.mubr.f32.gmra.mrb[0].mxu0 %v1951
      %v2527 = vpop.f32.mrb[0].mxu0
      %v2528 = vadd.f32 0.0, %v2527
      %v2529 = vpop.f32.mrb[0].mxu0
      %2530 = vmatprep.mubr.f32.mxu0 0.0
      %2531 = vmatmul.mubr.f32.gmra.mrb[0].mxu0 %v1954
      %v2532 = vpop.f32.mrb[0].mxu0
      %v2533 = vadd.f32 0.0, %v2532
      %v2534 = vpop.f32.mrb[0].mxu0
      %2535 = vmatprep.mubr.f32.mxu0 0.0
      %2536 = vmatmul.mubr.f32.gmra.mrb[0].mxu0 %v1957
      %v2537 = vpop.f32.mrb[0].mxu0
      %v2538 = vadd.f32 0.0, %v2537
      %v2539 = vpop.f32.mrb[0].mxu0
      %2540 = vmatprep.mubr.f32.mxu0 0.0
      %2541 = vmatmul.mubr.f32.gmra.mrb[0].mxu0 %v1960
      %v2542 = vpop.f32.mrb[0].mxu0
      %v2543 = vadd.f32 0.0, %v2542
      %v2544 = vpop.f32.mrb[0].mxu0
      %2545 = vmatprep.mubr.f32.mxu0 0.0
      %2546 = vmatmul.mubr.f32.gmra.mrb[0].mxu0 %v1963
      %v2547 = vpop.f32.mrb[0].mxu0
      %v2548 = vadd.f32 0.0, %v2547
      %v2549 = vpop.f32.mrb[0].mxu0
      %2550 = vmatprep.mubr.f32.mxu0 0.0
      %2551 = vmatmul.mubr.f32.gmra.mrb[0].mxu0 %v1966
      %v2552 = vpop.f32.mrb[0].mxu0
      %v2553 = vadd.f32 0.0, %v2552
      %v2554 = vpop.f32.mrb[0].mxu0
      %2555 = vmatprep.mubr.f32.mxu0 0.0
      %2556 = vmatmul.mubr.f32.gmra.mrb[0].mxu0 %v2109
      %v2557 = vpop.f32.mrb[0].mxu0
      %v2558 = vadd.f32 0.0, %v2557
      %v2559 = vpop.f32.mrb[0].mxu0
      %2560 = vmatprep.mubr.f32.mxu0 0.0
      %2561 = vmatmul.mubr.f32.gmra.mrb[0].mxu0 %v2112
      %v2562 = vpop.f32.mrb[0].mxu0
      %v2563 = vadd.f32 0.0, %v2562
      %v2564 = vpop.f32.mrb[0].mxu0
      %2565 = vmatprep.mubr.f32.mxu0 0.0
      %2566 = vmatmul.mubr.f32.gmra.mrb[0].mxu0 %v2115
      %v2567 = vpop.f32.mrb[0].mxu0
      %v2568 = vadd.f32 0.0, %v2567
      %v2569 = vpop.f32.mrb[0].mxu0
      %2570 = vmatprep.mubr.f32.mxu0 0.0
      %2571 = vmatmul.mubr.f32.gmra.mrb[0].mxu0 %v2118
      %v2572 = vpop.f32.mrb[0].mxu0
      %v2573 = vadd.f32 0.0, %v2572
      %v2574 = vpop.f32.mrb[0].mxu0
      %2575 = vdwg.mxu0
      %v2576 = vadd.f32 %v2339, %v2518
      %v2577 = vadd.f32 %v2340, %v2523
      %v2578 = vadd.f32 %v2341, %v2528
      %v2579 = vadd.f32 %v2342, %v2533
      %v2580 = vadd.f32 %v2343, %v2538
      %v2581 = vadd.f32 %v2344, %v2543
      %v2582 = vadd.f32 %v2345, %v2548
      %v2583 = vadd.f32 %v2346, %v2553
      %v2584 = vadd.f32 %v2347, %v2558
      %v2585 = vadd.f32 %v2348, %v2563
      %v2586 = vadd.f32 %v2349, %v2568
      %v2587 = vadd.f32 %v2350, %v2573
      %v2589 = vsel %vm354, %v1929, 0
      %v2592 = vsel %vm354, %v1927, 0
      %2594 = vmatprep.subr.mxu0 0.0
      %2595 = vmatpush1.msra.mxu0 %v2449
      %2596 = vmatprep.subr.mxu0 0.0
      %2597 = vmatpush1.msra.mxu0 0.0
      %2598 = vmatprep.subr.mxu0 0.0
      %2599 = vmatpush1.msra.mxu0 0.0
      %2600 = vmatprep.subr.mxu0 0.0
      %2601 = vmatpush1.msra.mxu0 0.0
      %2602 = vmatprep.subr.mxu0 0.0
      %2603 = vmatpush1.msra.mxu0 0.0
      %2604 = vmatprep.subr.mxu0 0.0
      %2605 = vmatpush1.msra.mxu0 0.0
      %2606 = vmatprep.subr.mxu0 0.0
      %2607 = vmatpush1.msra.mxu0 0.0
      %2608 = vmatprep.subr.mxu0 0.0
      %2609 = vmatpush1.msra.mxu0 0.0
      %2610 = vmatprep.subr.mxu0 0.0
      %2611 = vmatpush1.msra.mxu0 0.0
      %2612 = vmatprep.subr.mxu0 0.0
      %2613 = vmatpush1.msra.mxu0 0.0
      %2614 = vmatprep.subr.mxu0 0.0
      %2615 = vmatpush1.msra.mxu0 0.0
      %2616 = vmatprep.subr.mxu0 0.0
      %2617 = vmatpush1.msra.mxu0 0.0
      %2618 = vmatprep.subr.mxu0 0.0
      %2619 = vmatpush1.msra.mxu0 0.0
      %2620 = vmatprep.subr.mxu0 0.0
      %2621 = vmatpush1.msra.mxu0 0.0
      %2622 = vmatprep.subr.mxu0 0.0
      %2623 = vmatpush1.msra.mxu0 0.0
      %2624 = vmatprep.subr.mxu0 0.0
      %2625 = vmatpush1.msra.mxu0 0.0
      %2626 = vmatprep.subr.mxu0 0.0
      %2627 = vmatpush1.msra.mxu0 0.0
      %2628 = vmatprep.subr.mxu0 0.0
      %2629 = vmatpush1.msra.mxu0 0.0
      %2630 = vmatprep.subr.mxu0 0.0
      %2631 = vmatpush1.msra.mxu0 0.0
      %2632 = vmatprep.subr.mxu0 0.0
      %2633 = vmatpush1.msra.mxu0 0.0
      %2634 = vmatprep.subr.mxu0 0.0
      %2635 = vmatpush1.msra.mxu0 0.0
      %2636 = vmatprep.subr.mxu0 0.0
      %2637 = vmatpush1.msra.mxu0 0.0
      %2638 = vmatprep.subr.mxu0 0.0
      %2639 = vmatpush1.msra.mxu0 0.0
      %2640 = vmatprep.subr.mxu0 0.0
      %2641 = vmatpush1.msra.mxu0 0.0
      %2642 = vmatprep.subr.mxu0 0.0
      %2643 = vmatpush1.msra.mxu0 0.0
      %2644 = vmatprep.subr.mxu0 0.0
      %2645 = vmatpush1.msra.mxu0 0.0
      %2646 = vmatprep.subr.mxu0 0.0
      %2647 = vmatpush1.msra.mxu0 0.0
      %2648 = vmatprep.subr.mxu0 0.0
      %2649 = vmatpush1.msra.mxu0 0.0
      %2650 = vmatprep.subr.mxu0 0.0
      %2651 = vmatpush1.msra.mxu0 0.0
      %2652 = vmatprep.subr.mxu0 0.0
      %2653 = vmatpush1.msra.mxu0 0.0
      %2654 = vmatprep.subr.mxu0 0.0
      %2655 = vmatpush1.msra.mxu0 0.0
      %2656 = vmatprep.subr.mxu0 0.0
      %2657 = vmatpush1.msra.mxu0 0.0
      %2658 = vmatprep.mubr.f32.mxu0 0.0
      %2659 = vmatmul.mubr.f32.gmra.mrb[0].mxu0 %v2352
      %v2660 = vpop.f32.mrb[0].mxu0
      %v2661 = vadd.f32 0.0, %v2660
      %v2662 = vpop.f32.mrb[0].mxu0
      %2663 = vmatprep.mubr.f32.mxu0 0.0
      %2664 = vmatmul.mubr.f32.gmra.mrb[0].mxu0 %v2355
      %v2665 = vpop.f32.mrb[0].mxu0
      %v2666 = vadd.f32 0.0, %v2665
      %v2667 = vpop.f32.mrb[0].mxu0
      %2668 = vmatprep.mubr.f32.mxu0 0.0
      %2669 = vmatmul.mubr.f32.gmra.mrb[0].mxu0 %v2589
      %v2670 = vpop.f32.mrb[0].mxu0
      %v2671 = vadd.f32 0.0, %v2670
      %v2672 = vpop.f32.mrb[0].mxu0
      %2673 = vmatprep.mubr.f32.mxu0 0.0
      %2674 = vmatmul.mubr.f32.gmra.mrb[0].mxu0 %v2592
      %v2675 = vpop.f32.mrb[0].mxu0
      %v2676 = vadd.f32 0.0, %v2675
      %v2677 = vpop.f32.mrb[0].mxu0
      %2678 = vdwg.mxu0
      %v2679 = vadd.f32 %v2442, %v2661
      %v2680 = vadd.f32 %v2443, %v2666
      %v2681 = vadd.f32 %v2444, %v2671
      %v2682 = vadd.f32 %v2445, %v2676
      %v2683 = vlaneseq
      %v2684 = vshrl.u32 %v2683, 7
      %v2685 = vsub.s32 0, %v2684
      %v2686 = vrot.slane %v320, %v2685
      %v2687 = vmul.f32 %v2576, %v2686
      %v2688 = vmul.f32 %v2577, %v2686
      %v2689 = vmul.f32 %v2578, %v2686
      %v2690 = vmul.f32 %v2579, %v2686
      %v2691 = vmul.f32 %v2580, %v2686
      %v2692 = vmul.f32 %v2581, %v2686
      %v2693 = vmul.f32 %v2582, %v2686
      %v2694 = vmul.f32 %v2583, %v2686
      %v2695 = vmul.f32 %v2584, %v2686
      %v2696 = vmul.f32 %v2585, %v2686
      %v2697 = vmul.f32 %v2586, %v2686
      %v2698 = vmul.f32 %v2587, %v2686
      %v2699 = vlaneseq
      %v2700 = vshrl.u32 %v2699, 7
      %v2701 = vsub.s32 1, %v2700
      %v2702 = vrot.slane %v320, %v2701
      %v2703 = vadd.f32 %v2687, %v2702
      %v2704 = vadd.f32 %v2688, %v2702
      %v2705 = vadd.f32 %v2689, %v2702
      %v2706 = vadd.f32 %v2690, %v2702
      %v2707 = vadd.f32 %v2691, %v2702
      %v2708 = vadd.f32 %v2692, %v2702
      %v2709 = vadd.f32 %v2693, %v2702
      %v2710 = vadd.f32 %v2694, %v2702
      %v2711 = vadd.f32 %v2695, %v2702
      %v2712 = vadd.f32 %v2696, %v2702
      %v2713 = vadd.f32 %v2697, %v2702
      %v2714 = vadd.f32 %v2698, %v2702
      %v2715 = vmax.f32 %v2703, 0.0
      %v2716 = vmax.f32 %v2704, 0.0
      %v2717 = vmax.f32 %v2705, 0.0
      %v2718 = vmax.f32 %v2706, 0.0
      %v2719 = vmax.f32 %v2707, 0.0
      %v2720 = vmax.f32 %v2708, 0.0
      %v2721 = vmax.f32 %v2709, 0.0
      %v2722 = vmax.f32 %v2710, 0.0
      %v2723 = vmax.f32 %v2711, 0.0
      %v2724 = vmax.f32 %v2712, 0.0
      %v2725 = vmax.f32 %v2713, 0.0
      %v2726 = vmax.f32 %v2714, 0.0
      %v2727 = vmul.f32 %v2679, %v2686
      %v2728 = vmul.f32 %v2680, %v2686
      %v2729 = vmul.f32 %v2681, %v2686
      %v2730 = vmul.f32 %v2682, %v2686
      %v2731 = vadd.f32 %v2727, %v2702
      %v2732 = vadd.f32 %v2728, %v2702
      %v2733 = vadd.f32 %v2729, %v2702
      %v2734 = vadd.f32 %v2730, %v2702
      %v2735 = vmax.f32 %v2731, 0.0
      %v2736 = vmax.f32 %v2732, 0.0
      %v2737 = vmax.f32 %v2733, 0.0
      %v2738 = vmax.f32 %v2734, 0.0
      %vm2739 = vcmask 64512
      %2740 = vst.msk [vmem:[%s318] sm:$0xff] %vm2739, %v2715
      %2741 = vst.msk [vmem:[%s318 + $0x8] sm:$0xff] %vm2739, %v2716
      %2742 = vst.msk [vmem:[%s318 + $0x10] sm:$0xff] %vm2739, %v2717
      %2743 = vst.msk [vmem:[%s318 + $0x18] sm:$0xff] %vm2739, %v2718
      %2744 = vst.msk [vmem:[%s318 + $0x20] sm:$0xff] %vm2739, %v2719
      %2745 = vst.msk [vmem:[%s318 + $0x28] sm:$0xff] %vm2739, %v2720
      %2746 = vst.msk [vmem:[%s318 + $0x30] sm:$0xff] %vm2739, %v2721
      %2747 = vst.msk [vmem:[%s318 + $0x38] sm:$0xff] %vm2739, %v2722
      %2748 = vst.msk [vmem:[%s318 + $0x40] sm:$0xff] %vm2739, %v2723
      %2749 = vst.msk [vmem:[%s318 + $0x48] sm:$0xff] %vm2739, %v2724
      %2750 = vst.msk [vmem:[%s318 + $0x50] sm:$0xff] %vm2739, %v2725
      %2751 = vst.msk [vmem:[%s318 + $0x58] sm:$0xff] %vm2739, %v2726
      %s2752 = scalar_lea.vmem %s318, 96
      %2753 = vst.msk [vmem:[%s2752] sm:$0xff] %vm2739, %v2735
      %2754 = vst.msk [vmem:[%s2752 + $0x8] sm:$0xff] %vm2739, %v2736
      %2755 = vst.msk [vmem:[%s2752 + $0x10] sm:$0xff] %vm2739, %v2737
      %2756 = vst.msk [vmem:[%s2752 + $0x18] sm:$0xff] %vm2739, %v2738
      %s2757 = smul.u32 8, %s20
      %p2758 = scmp.lt.s32.totalorder %s19, 1
      %s2759 = scalar_select %p2758, %s19, 1
      %p2760 = scmp.lt.s32.totalorder %s2757, 15
      %s2761 = scalar_select %p2760, %s2757, 15
      %s2762 = smul.addr %s2761, 2
      %s2763 = smul.addr %s2759, 32
      %s2764 = sadd.s32 %s2762, %s2763
      %s2765 = smul.addr %s2764, 8
      %s2766 = scalar_lea.vmem %s4, %s2765
      // Predicated region
      $region37: #{tpu_custom_call.1} parent=35 // pred_check
        %p2767 = pneg %p149
      $region38: #{tpu_custom_call.1} parent=35 // pred_check_branch
        %2769 = sbr.rel (%p2767) target = $region40
      $region39: #{tpu_custom_call.1} parent=35 // pred_region
        %s2770 = smul.u32 8, %s20
      $region40: #{tpu_custom_call.1} parent=35 // pred_fallthru
        _
    $region36: #{tpu_custom_call.1} parent=5 // pred_fallthru
      _
    %p2771 = scmp.le.s32.totalorder 2, %s10
    // Predicated region
    $region41: #{tpu_custom_call.1} parent=5 // pred_check
      %p2772 = pneg %p2771
    $region42: #{tpu_custom_call.1} parent=5 // pred_check_branch
      %2774 = sbr.rel (%p2772) target = $region44
    $region43: #{tpu_custom_call.1} parent=5 // pred_region
      %s2775 = ssub.s32 %s10, 2
      // Predicated region
      $region45: #{tpu_custom_call.1} parent=43 // pred_check
        %p2776 = pneg %p155
      $region46: #{tpu_custom_call.1} parent=43 // pred_check_branch
        %2778 = sbr.rel (%p2776) target = $region48
      $region47: #{tpu_custom_call.1} parent=43 // pred_region
        %s2779 = smul.u32 8, %s22
        %p2780 = scmp.lt.s32.totalorder %s21, 1
        %s2781 = scalar_select %p2780, %s21, 1
        %p2782 = scmp.lt.s32.totalorder %s2779, 15
        %s2783 = scalar_select %p2782, %s2779, 15
        %s2784 = smul.addr %s2783, 2
        %s2785 = smul.addr %s2781, 32
        %s2786 = sadd.s32 %s2784, %s2785
        %s2787 = smul.addr %s2786, 8
        %s2788 = scalar_lea.vmem %s4, %s2787
      $region48: #{tpu_custom_call.1} parent=43 // pred_fallthru
        _
    $region44: #{tpu_custom_call.1} parent=5 // pred_fallthru
      _
  $region6: #{tpu_custom_call.1} parent=0 // loop_footer
    %s14 = sadd.s32 1, %s10
  $region7: #{tpu_custom_call.1} parent=0 // loop_footer_branch
    %9 = sbr.rel target = $region3
  $region8: #{tpu_custom_call.1} parent=0 // loop_exit
    _

</llo_original>
